<compile_context>
chip_gen: v7x
topology: tpu7x:2x2x1
jax: 0.10.0
libtpu: 0.0.40
codegen_flags: <defaults>
</compile_context>

<pallas_src>
import functools

import jax
import jax.numpy as jnp
from jax import lax
from jax.experimental import pallas as pl
from jax.experimental.pallas import tpu as pltpu


# ----------------------------- helpers ------------------------------------ #

def _round_up(x, m):
    return ((x + m - 1) // m) * m


def _pad_axis(a, axis, target):
    pad = target - a.shape[axis]
    if pad == 0:
        return a
    widths = [(0, 0)] * a.ndim
    widths[axis] = (0, pad)
    return jnp.pad(a, widths)


def _layernorm_f32(xf, g_ref, b_ref, true_d):
    """LayerNorm over the (possibly zero-padded) last axis; divisor = true_d."""
    lane = lax.broadcasted_iota(jnp.int32, xf.shape, xf.ndim - 1)
    valid = lane < true_d
    inv_d = 1.0 / float(true_d)
    xm = jnp.where(valid, xf, 0.0)
    mean = jnp.sum(xm, axis=-1, keepdims=True) * inv_d
    xc = jnp.where(valid, xf - mean, 0.0)
    var = jnp.sum(xc * xc, axis=-1, keepdims=True) * inv_d
    inv = lax.rsqrt(var + 1e-5)
    # gamma/beta are zero on padded lanes -> normed is exactly 0 there.
    return (xf - mean) * inv * g_ref[...].astype(jnp.float32) + b_ref[...].astype(
        jnp.float32
    )


# --------------------------- attention kernel ------------------------------ #

def _attn_kernel(x_ref, g_ref, b_ref, wq_ref, wk_ref, wv_ref, wo_ref, bo_ref,
                 o_ref, *, heads, dim_head, scale, true_d):
    x = x_ref[0]                              # (N, Dp)
    xf = x.astype(jnp.float32)
    normed = _layernorm_f32(xf, g_ref, b_ref, true_d)

    wdt = wq_ref.dtype
    nd = normed.astype(wdt)
    # qkv projection (to_qkv has no bias); f32 MXU accumulation.
    q = jnp.dot(nd, wq_ref[...], preferred_element_type=jnp.float32).astype(wdt)
    k = jnp.dot(nd, wk_ref[...], preferred_element_type=jnp.float32).astype(wdt)
    v = jnp.dot(nd, wv_ref[...], preferred_element_type=jnp.float32).astype(wdt)

    y = jnp.zeros_like(xf)                    # (N, Dp) f32 accumulator
    for h in range(heads):                    # static unroll over heads
        sl = slice(h * dim_head, (h + 1) * dim_head)
        qh, kh, vh = q[:, sl], k[:, sl], v[:, sl]
        dots = lax.dot_general(qh, kh, (((1,), (1,)), ((), ())),
                               preferred_element_type=jnp.float32) * scale  # (N, N)
        dots = dots - jnp.max(dots, axis=-1, keepdims=True)
        e = jnp.exp(dots)
        p = e / jnp.sum(e, axis=-1, keepdims=True)
        oh = jnp.dot(p.astype(wdt), vh, preferred_element_type=jnp.float32)  # (N, dh)
        # out @ Wo == sum_h out_h @ Wo[h*dh:(h+1)*dh, :]  (avoids a concat)
        y = y + jnp.dot(oh.astype(wo_ref.dtype), wo_ref[sl, :],
                        preferred_element_type=jnp.float32)
    y = y + bo_ref[...].astype(jnp.float32)
    o_ref[0] = (xf + y).astype(o_ref.dtype)   # residual add


def _attention_block(xa, lp, *, heads, dim_head, true_d):
    BP, N, Dp = xa.shape
    inner = heads * dim_head
    kernel = functools.partial(_attn_kernel, heads=heads, dim_head=dim_head,
                               scale=float(dim_head) ** -0.5, true_d=true_d)
    return pl.pallas_call(
        kernel,
        out_shape=jax.ShapeDtypeStruct((BP, N, Dp), xa.dtype),
        grid_spec=pltpu.PrefetchScalarGridSpec(
            num_scalar_prefetch=0,
            grid=(BP,),
            in_specs=[
                pl.BlockSpec((1, N, Dp), lambda i: (i, 0, 0)),
                pl.BlockSpec((1, Dp), lambda i: (0, 0)),
                pl.BlockSpec((1, Dp), lambda i: (0, 0)),
                pl.BlockSpec((Dp, inner), lambda i: (0, 0)),
                pl.BlockSpec((Dp, inner), lambda i: (0, 0)),
                pl.BlockSpec((Dp, inner), lambda i: (0, 0)),
                pl.BlockSpec((inner, Dp), lambda i: (0, 0)),
                pl.BlockSpec((1, Dp), lambda i: (0, 0)),
            ],
            out_specs=pl.BlockSpec((1, N, Dp), lambda i: (i, 0, 0)),
        ),
        compiler_params=pltpu.CompilerParams(dimension_semantics=("parallel",)),
    )(xa, lp["ln1_g"], lp["ln1_b"], lp["wq"], lp["wk"], lp["wv"],
      lp["wo"], lp["bo"])


# --------------------------- feed-forward kernel --------------------------- #

def _ff_kernel(x_ref, g_ref, b_ref, w1_ref, b1_ref, w2_ref, b2_ref, o_ref,
               *, true_d):
    xf = x_ref[...].astype(jnp.float32)       # (TM, Dp)
    normed = _layernorm_f32(xf, g_ref, b_ref, true_d)

    wdt = w1_ref.dtype
    h = jnp.dot(normed.astype(wdt), w1_ref[...], preferred_element_type=jnp.float32)
    h = h + b1_ref[...].astype(jnp.float32)
    h = h * (1.0 / (1.0 + jnp.exp(-h)))       # SiLU
    y = jnp.dot(h.astype(wdt), w2_ref[...], preferred_element_type=jnp.float32)
    y = y + b2_ref[...].astype(jnp.float32)
    o_ref[...] = (xf + y).astype(o_ref.dtype)  # residual add


def _ff_block(xr, lp, *, true_d):
    R, Dp = xr.shape
    mlp = lp["w1"].shape[1]
    TM = _round_up(min(512, R), 8)            # row tile, multiple of 8
    R_pad = _round_up(R, TM)
    xpad = _pad_axis(xr, 0, R_pad)
    out = pl.pallas_call(
        functools.partial(_ff_kernel, true_d=true_d),
        out_shape=jax.ShapeDtypeStruct((R_pad, Dp), xr.dtype),
        grid_spec=pltpu.PrefetchScalarGridSpec(
            num_scalar_prefetch=0,
            grid=(R_pad // TM,),
            in_specs=[
                pl.BlockSpec((TM, Dp), lambda i: (i, 0)),
                pl.BlockSpec((1, Dp), lambda i: (0, 0)),
                pl.BlockSpec((1, Dp), lambda i: (0, 0)),
                pl.BlockSpec((Dp, mlp), lambda i: (0, 0)),
                pl.BlockSpec((1, mlp), lambda i: (0, 0)),
                pl.BlockSpec((mlp, Dp), lambda i: (0, 0)),
                pl.BlockSpec((1, Dp), lambda i: (0, 0)),
            ],
            out_specs=pl.BlockSpec((TM, Dp), lambda i: (i, 0)),
        ),
        compiler_params=pltpu.CompilerParams(dimension_semantics=("parallel",)),
    )(xpad, lp["ln2_g"], lp["ln2_b"], lp["w1"], lp["b1"], lp["w2"], lp["b2"])
    return out[:R]


# --------------------------- top-level wrapper ----------------------------- #

def _pad_layer(layer, dim, Dp):
    wq, wk, wv = jnp.split(layer["w_qkv"], 3, axis=-1)
    return dict(
        ln1_g=_pad_axis(layer["ln1_g"].reshape(1, dim), 1, Dp),
        ln1_b=_pad_axis(layer["ln1_b"].reshape(1, dim), 1, Dp),
        wq=_pad_axis(wq, 0, Dp),
        wk=_pad_axis(wk, 0, Dp),
        wv=_pad_axis(wv, 0, Dp),
        wo=_pad_axis(layer["w_o"], 1, Dp),
        bo=_pad_axis(layer["b_o"].reshape(1, dim), 1, Dp),
        ln2_g=_pad_axis(layer["ln2_g"].reshape(1, dim), 1, Dp),
        ln2_b=_pad_axis(layer["ln2_b"].reshape(1, dim), 1, Dp),
        w1=_pad_axis(layer["w1"], 0, Dp),
        b1=layer["b1"].reshape(1, -1),
        w2=_pad_axis(layer["w2"], 1, Dp),
        b2=_pad_axis(layer["b2"].reshape(1, dim), 1, Dp),
    )


def transformer(x, layers, *, heads, dim_head):
    """x: (B, P, N, D). layers: list of per-layer weight dicts (weights in (in,out))."""
    B, P, N, D = x.shape
    Dp = _round_up(D, 128)                    # lane-dense residual stream
    padded = [_pad_layer(l, D, Dp) for l in layers]
    xa = _pad_axis(x, 3, Dp).reshape(B * P, N, Dp)
    for lp in padded:
        xa = _attention_block(xa, lp, heads=heads, dim_head=dim_head, true_d=D)
        xr = _ff_block(xa.reshape(B * P * N, Dp), lp, true_d=D)
        xa = xr.reshape(B * P, N, Dp)
    return xa.reshape(B, P, N, Dp)[..., :D]


# ------------------------- pure-JAX reference ------------------------------ #

def transformer_ref(x, layers, *, heads, dim_head):
    def layernorm(t, g, b):
        m = jnp.mean(t, -1, keepdims=True)
        v = jnp.mean((t - m) ** 2, -1, keepdims=True)
        return (t - m) / jnp.sqrt(v + 1e-5) * g + b

    scale = float(dim_head) ** -0.5
    for l in layers:
        # PreNorm(Attention) + residual
        n = layernorm(x, l["ln1_g"], l["ln1_b"])
        qkv = n @ l["w_qkv"]
        q, k, v = jnp.split(qkv, 3, axis=-1)

        def split_heads(t):
            b, p, s, _ = t.shape
            return t.reshape(b, p, s, heads, dim_head).transpose(0, 1, 3, 2, 4)

        q, k, v = map(split_heads, (q, k, v))
        dots = jnp.einsum("bphqd,bphkd->bphqk", q, k) * scale
        attn = jax.nn.softmax(dots, axis=-1)
        o = jnp.einsum("bphqk,bphkd->bphqd", attn, v)
        o = o.transpose(0, 1, 3, 2, 4).reshape(x.shape[:-1] + (heads * dim_head,))
        x = o @ l["w_o"] + l["b_o"] + x
        # PreNorm(FeedForward) + residual
        n = layernorm(x, l["ln2_g"], l["ln2_b"])
        h = n @ l["w1"] + l["b1"]
        h = h * jax.nn.sigmoid(h)
        x = h @ l["w2"] + l["b2"] + x
    return x


def init_params(key, dim, depth, heads, dim_head, mlp_dim):
    inner = heads * dim_head
    layers = []
    for _ in range(depth):
        key, *ks = jax.random.split(key, 12)
        layers.append(dict(
            ln1_g=1.0 + 0.1 * jax.random.normal(ks[0], (dim,), jnp.float32),
            ln1_b=0.1 * jax.random.normal(ks[1], (dim,), jnp.float32),
            w_qkv=jax.random.normal(ks[2], (dim, 3 * inner), jnp.float32) * dim ** -0.5,
            w_o=jax.random.normal(ks[3], (inner, dim), jnp.float32) * inner ** -0.5,
            b_o=0.02 * jax.random.normal(ks[4], (dim,), jnp.float32),
            ln2_g=1.0 + 0.1 * jax.random.normal(ks[5], (dim,), jnp.float32),
            ln2_b=0.1 * jax.random.normal(ks[6], (dim,), jnp.float32),
            w1=jax.random.normal(ks[7], (dim, mlp_dim), jnp.float32) * dim ** -0.5,
            b1=0.02 * jax.random.normal(ks[8], (mlp_dim,), jnp.float32),
            w2=jax.random.normal(ks[9], (mlp_dim, dim), jnp.float32) * mlp_dim ** -0.5,
            b2=0.02 * jax.random.normal(ks[10], (dim,), jnp.float32),
        ))
    return layers


if __name__ == "__main__":
    key = jax.random.PRNGKey(0)
    # Small MobileViT-like shapes: batch=2, patch-area P=4, tokens N=16, dim=32.
    B, P, N, D = 2, 4, 16, 32
    heads, dim_head, mlp_dim, depth = 2, 16, 64, 2

    kx, kp = jax.random.split(key)
    x = jax.random.normal(kx, (B, P, N, D), dtype=jnp.float32)
    params = init_params(kp, D, depth, heads, dim_head, mlp_dim)

    transformer_jit = jax.jit(transformer, static_argnames=("heads", "dim_head"))
    y = transformer_jit(x, params, heads=heads, dim_head=dim_head)
    jax.block_until_ready(y)

    y_ref = transformer_ref(x, params, heads=heads, dim_head=dim_head)
    assert y.shape == (B, P, N, D)
    assert jnp.allclose(y, y_ref, atol=1e-4, rtol=1e-4), (
        f"mismatch vs reference: max abs err {jnp.max(jnp.abs(y - y_ref))}"
    )
    print("KERNEL_OK")
</pallas_src>

<mosaic_0001>
module attributes {stable_mosaic.version = 11 : i64} {
  func.func @_attn_kernel(%arg0: i32, %arg1: memref<1x16x128xf32, #tpu.memory_space<vmem>>, %arg2: memref<1x128xf32, #tpu.memory_space<vmem>>, %arg3: memref<1x128xf32, #tpu.memory_space<vmem>>, %arg4: memref<128x32xf32, #tpu.memory_space<vmem>>, %arg5: memref<128x32xf32, #tpu.memory_space<vmem>>, %arg6: memref<128x32xf32, #tpu.memory_space<vmem>>, %arg7: memref<32x128xf32, #tpu.memory_space<vmem>>, %arg8: memref<1x128xf32, #tpu.memory_space<vmem>>, %arg9: memref<1x16x128xf32, #tpu.memory_space<vmem>>) attributes {dimension_semantics = [#tpu.dimension_semantics<parallel>], iteration_bounds = array<i64: 8>, scalar_prefetch = 0 : i64, scratch_operands = 0 : i64, tpu.core_type = #tpu.core_type<tc>, window_params = [{transform_indices = @transform_0, window_bounds = array<i64: 1, 16, 128>}, {pipeline_mode = #tpu.pipeline_mode<synchronous>, transform_indices = @transform_1, window_bounds = array<i64: 1, 128>}, {pipeline_mode = #tpu.pipeline_mode<synchronous>, transform_indices = @transform_2, window_bounds = array<i64: 1, 128>}, {pipeline_mode = #tpu.pipeline_mode<synchronous>, transform_indices = @transform_3, window_bounds = array<i64: 128, 32>}, {pipeline_mode = #tpu.pipeline_mode<synchronous>, transform_indices = @transform_4, window_bounds = array<i64: 128, 32>}, {pipeline_mode = #tpu.pipeline_mode<synchronous>, transform_indices = @transform_5, window_bounds = array<i64: 128, 32>}, {pipeline_mode = #tpu.pipeline_mode<synchronous>, transform_indices = @transform_6, window_bounds = array<i64: 32, 128>}, {pipeline_mode = #tpu.pipeline_mode<synchronous>, transform_indices = @transform_7, window_bounds = array<i64: 1, 128>}, {transform_indices = @transform_8, window_bounds = array<i64: 1, 16, 128>}]} {
    %c0 = arith.constant 0 : index
    %c0_0 = arith.constant 0 : index
    %c0_1 = arith.constant 0 : index
    %0 = vector.load %arg1[%c0, %c0_0, %c0_1] : memref<1x16x128xf32, #tpu.memory_space<vmem>>, vector<1x16x128xf32>
    %1 = vector.shape_cast %0 : vector<1x16x128xf32> to vector<16x128xf32>
    %2 = tpu.iota {dimensions = array<i32: 1>} : vector<16x128xi32>
    %c32_i32 = arith.constant 32 : i32
    %3 = vector.broadcast %c32_i32 : i32 to vector<16x128xi32>
    %4 = arith.cmpi slt, %2, %3 : vector<16x128xi32>
    %cst = arith.constant 0.000000e+00 : f32
    %5 = vector.broadcast %cst : f32 to vector<16x128xf32>
    %6 = arith.select %4, %1, %5 : vector<16x128xi1>, vector<16x128xf32>
    %cst_2 = arith.constant dense<0.000000e+00> : vector<16xf32>
    %7 = vector.multi_reduction <add>, %6, %cst_2 [1] : vector<16x128xf32> to vector<16xf32>
    %8 = vector.shape_cast %7 : vector<16xf32> to vector<16x1xf32>
    %cst_3 = arith.constant 3.125000e-02 : f32
    %9 = vector.broadcast %cst_3 : f32 to vector<16x1xf32>
    %10 = arith.mulf %8, %9 : vector<16x1xf32>
    %11 = vector.broadcast %10 : vector<16x1xf32> to vector<16x128xf32>
    %12 = arith.subf %1, %11 : vector<16x128xf32>
    %cst_4 = arith.constant 0.000000e+00 : f32
    %13 = vector.broadcast %cst_4 : f32 to vector<16x128xf32>
    %14 = arith.select %4, %12, %13 : vector<16x128xi1>, vector<16x128xf32>
    %15 = arith.mulf %14, %14 : vector<16x128xf32>
    %cst_5 = arith.constant dense<0.000000e+00> : vector<16xf32>
    %16 = vector.multi_reduction <add>, %15, %cst_5 [1] : vector<16x128xf32> to vector<16xf32>
    %17 = vector.shape_cast %16 : vector<16xf32> to vector<16x1xf32>
    %cst_6 = arith.constant 3.125000e-02 : f32
    %18 = vector.broadcast %cst_6 : f32 to vector<16x1xf32>
    %19 = arith.mulf %17, %18 : vector<16x1xf32>
    %cst_7 = arith.constant 9.99999974E-6 : f32
    %20 = vector.broadcast %cst_7 : f32 to vector<16x1xf32>
    %21 = arith.addf %19, %20 : vector<16x1xf32>
    %22 = math.rsqrt %21 : vector<16x1xf32>
    %23 = vector.broadcast %10 : vector<16x1xf32> to vector<16x128xf32>
    %24 = arith.subf %1, %23 : vector<16x128xf32>
    %25 = vector.broadcast %22 : vector<16x1xf32> to vector<16x128xf32>
    %26 = arith.mulf %24, %25 : vector<16x128xf32>
    %c0_8 = arith.constant 0 : index
    %c0_9 = arith.constant 0 : index
    %27 = vector.load %arg2[%c0_8, %c0_9] : memref<1x128xf32, #tpu.memory_space<vmem>>, vector<1x128xf32>
    %28 = vector.broadcast %27 : vector<1x128xf32> to vector<16x128xf32>
    %29 = arith.mulf %26, %28 : vector<16x128xf32>
    %c0_10 = arith.constant 0 : index
    %c0_11 = arith.constant 0 : index
    %30 = vector.load %arg3[%c0_10, %c0_11] : memref<1x128xf32, #tpu.memory_space<vmem>>, vector<1x128xf32>
    %31 = vector.broadcast %30 : vector<1x128xf32> to vector<16x128xf32>
    %32 = arith.addf %29, %31 : vector<16x128xf32>
    %c0_12 = arith.constant 0 : index
    %c0_13 = arith.constant 0 : index
    %33 = vector.load %arg4[%c0_12, %c0_13] : memref<128x32xf32, #tpu.memory_space<vmem>>, vector<128x32xf32>
    %cst_14 = arith.constant dense<0.000000e+00> : vector<16x32xf32>
    %34 = tpu.matmul %32, %33, %cst_14 {dimension_numbers = #tpu.dot_dimension_numbers<[1], [0], [0], [1], [0, 0, 1, 1], [], []>} : vector<16x128xf32>, vector<128x32xf32>, vector<16x32xf32> -> vector<16x32xf32>
    %c0_15 = arith.constant 0 : index
    %c0_16 = arith.constant 0 : index
    %35 = vector.load %arg5[%c0_15, %c0_16] : memref<128x32xf32, #tpu.memory_space<vmem>>, vector<128x32xf32>
    %cst_17 = arith.constant dense<0.000000e+00> : vector<16x32xf32>
    %36 = tpu.matmul %32, %35, %cst_17 {dimension_numbers = #tpu.dot_dimension_numbers<[1], [0], [0], [1], [0, 0, 1, 1], [], []>} : vector<16x128xf32>, vector<128x32xf32>, vector<16x32xf32> -> vector<16x32xf32>
    %c0_18 = arith.constant 0 : index
    %c0_19 = arith.constant 0 : index
    %37 = vector.load %arg6[%c0_18, %c0_19] : memref<128x32xf32, #tpu.memory_space<vmem>>, vector<128x32xf32>
    %cst_20 = arith.constant dense<0.000000e+00> : vector<16x32xf32>
    %38 = tpu.matmul %32, %37, %cst_20 {dimension_numbers = #tpu.dot_dimension_numbers<[1], [0], [0], [1], [0, 0, 1, 1], [], []>} : vector<16x128xf32>, vector<128x32xf32>, vector<16x32xf32> -> vector<16x32xf32>
    %cst_21 = arith.constant 0.000000e+00 : f32
    %39 = vector.broadcast %cst_21 : f32 to vector<16x128xf32>
    %40 = vector.extract_strided_slice %34 {offsets = [0, 0], sizes = [16, 16], strides = [1, 1]} : vector<16x32xf32> to vector<16x16xf32>
    %41 = vector.extract_strided_slice %36 {offsets = [0, 0], sizes = [16, 16], strides = [1, 1]} : vector<16x32xf32> to vector<16x16xf32>
    %42 = vector.extract_strided_slice %38 {offsets = [0, 0], sizes = [16, 16], strides = [1, 1]} : vector<16x32xf32> to vector<16x16xf32>
    %cst_22 = arith.constant dense<0.000000e+00> : vector<16x16xf32>
    %43 = tpu.matmul %40, %41, %cst_22 {dimension_numbers = #tpu.dot_dimension_numbers<[1], [1], [0], [0], [0, 0, 1, 0], [], []>} : vector<16x16xf32>, vector<16x16xf32>, vector<16x16xf32> -> vector<16x16xf32>
    %cst_23 = arith.constant 2.500000e-01 : f32
    %44 = vector.broadcast %cst_23 : f32 to vector<16x16xf32>
    %45 = arith.mulf %43, %44 : vector<16x16xf32>
    %cst_24 = arith.constant dense<0xFF800000> : vector<16xf32>
    %46 = vector.multi_reduction <maximumf>, %45, %cst_24 [1] : vector<16x16xf32> to vector<16xf32>
    %47 = vector.shape_cast %46 : vector<16xf32> to vector<16x1xf32>
    %48 = vector.broadcast %47 : vector<16x1xf32> to vector<16x16xf32>
    %49 = arith.subf %45, %48 : vector<16x16xf32>
    %50 = math.exp %49 : vector<16x16xf32>
    %cst_25 = arith.constant dense<0.000000e+00> : vector<16xf32>
    %51 = vector.multi_reduction <add>, %50, %cst_25 [1] : vector<16x16xf32> to vector<16xf32>
    %52 = vector.shape_cast %51 : vector<16xf32> to vector<16x1xf32>
    %53 = vector.broadcast %52 : vector<16x1xf32> to vector<16x16xf32>
    %54 = arith.divf %50, %53 : vector<16x16xf32>
    %cst_26 = arith.constant dense<0.000000e+00> : vector<16x16xf32>
    %55 = tpu.matmul %54, %42, %cst_26 {dimension_numbers = #tpu.dot_dimension_numbers<[1], [0], [0], [1], [0, 0, 1, 1], [], []>} : vector<16x16xf32>, vector<16x16xf32>, vector<16x16xf32> -> vector<16x16xf32>
    %c0_27 = arith.constant 0 : index
    %c0_28 = arith.constant 0 : index
    %56 = vector.load %arg7[%c0_27, %c0_28] : memref<32x128xf32, #tpu.memory_space<vmem>>, vector<16x128xf32>
    %cst_29 = arith.constant dense<0.000000e+00> : vector<16x128xf32>
    %57 = tpu.matmul %55, %56, %cst_29 {dimension_numbers = #tpu.dot_dimension_numbers<[1], [0], [0], [1], [0, 0, 1, 1], [], []>} : vector<16x16xf32>, vector<16x128xf32>, vector<16x128xf32> -> vector<16x128xf32>
    %58 = arith.addf %39, %57 : vector<16x128xf32>
    %59 = vector.extract_strided_slice %34 {offsets = [0, 16], sizes = [16, 16], strides = [1, 1]} : vector<16x32xf32> to vector<16x16xf32>
    %60 = vector.extract_strided_slice %36 {offsets = [0, 16], sizes = [16, 16], strides = [1, 1]} : vector<16x32xf32> to vector<16x16xf32>
    %61 = vector.extract_strided_slice %38 {offsets = [0, 16], sizes = [16, 16], strides = [1, 1]} : vector<16x32xf32> to vector<16x16xf32>
    %cst_30 = arith.constant dense<0.000000e+00> : vector<16x16xf32>
    %62 = tpu.matmul %59, %60, %cst_30 {dimension_numbers = #tpu.dot_dimension_numbers<[1], [1], [0], [0], [0, 0, 1, 0], [], []>} : vector<16x16xf32>, vector<16x16xf32>, vector<16x16xf32> -> vector<16x16xf32>
    %cst_31 = arith.constant 2.500000e-01 : f32
    %63 = vector.broadcast %cst_31 : f32 to vector<16x16xf32>
    %64 = arith.mulf %62, %63 : vector<16x16xf32>
    %cst_32 = arith.constant dense<0xFF800000> : vector<16xf32>
    %65 = vector.multi_reduction <maximumf>, %64, %cst_32 [1] : vector<16x16xf32> to vector<16xf32>
    %66 = vector.shape_cast %65 : vector<16xf32> to vector<16x1xf32>
    %67 = vector.broadcast %66 : vector<16x1xf32> to vector<16x16xf32>
    %68 = arith.subf %64, %67 : vector<16x16xf32>
    %69 = math.exp %68 : vector<16x16xf32>
    %cst_33 = arith.constant dense<0.000000e+00> : vector<16xf32>
    %70 = vector.multi_reduction <add>, %69, %cst_33 [1] : vector<16x16xf32> to vector<16xf32>
    %71 = vector.shape_cast %70 : vector<16xf32> to vector<16x1xf32>
    %72 = vector.broadcast %71 : vector<16x1xf32> to vector<16x16xf32>
    %73 = arith.divf %69, %72 : vector<16x16xf32>
    %cst_34 = arith.constant dense<0.000000e+00> : vector<16x16xf32>
    %74 = tpu.matmul %73, %61, %cst_34 {dimension_numbers = #tpu.dot_dimension_numbers<[1], [0], [0], [1], [0, 0, 1, 1], [], []>} : vector<16x16xf32>, vector<16x16xf32>, vector<16x16xf32> -> vector<16x16xf32>
    %c16 = arith.constant 16 : index
    %c0_35 = arith.constant 0 : index
    %75 = vector.load %arg7[%c16, %c0_35] : memref<32x128xf32, #tpu.memory_space<vmem>>, vector<16x128xf32>
    %cst_36 = arith.constant dense<0.000000e+00> : vector<16x128xf32>
    %76 = tpu.matmul %74, %75, %cst_36 {dimension_numbers = #tpu.dot_dimension_numbers<[1], [0], [0], [1], [0, 0, 1, 1], [], []>} : vector<16x16xf32>, vector<16x128xf32>, vector<16x128xf32> -> vector<16x128xf32>
    %77 = arith.addf %58, %76 : vector<16x128xf32>
    %c0_37 = arith.constant 0 : index
    %c0_38 = arith.constant 0 : index
    %78 = vector.load %arg8[%c0_37, %c0_38] : memref<1x128xf32, #tpu.memory_space<vmem>>, vector<1x128xf32>
    %79 = vector.broadcast %78 : vector<1x128xf32> to vector<16x128xf32>
    %80 = arith.addf %77, %79 : vector<16x128xf32>
    %81 = arith.addf %1, %80 : vector<16x128xf32>
    %c0_39 = arith.constant 0 : index
    %c0_40 = arith.constant 0 : index
    %c0_41 = arith.constant 0 : index
    %82 = vector.load %arg9[%c0_39, %c0_40, %c0_41] : memref<1x16x128xf32, #tpu.memory_space<vmem>>, vector<1x16x128xf32>
    %83 = vector.shape_cast %82 : vector<1x16x128xf32> to vector<16x128xf32>
    %84 = vector.shape_cast %81 : vector<16x128xf32> to vector<1x16x128xf32>
    tpu.vector_store %arg9[%c0_39, %c0_40, %c0_41], %84 {strides = array<i32>} : memref<1x16x128xf32, #tpu.memory_space<vmem>>, vector<1x16x128xf32>,
    return
  }
  func.func @transform_0(%arg0: i32) -> (i32, i32, i32) {
    %c0_i32 = arith.constant 0 : i32
    %c0_i32_0 = arith.constant 0 : i32
    %c0_i32_1 = arith.constant 0 : i32
    return %arg0, %c0_i32, %c0_i32_0 : i32, i32, i32
  }
  func.func @transform_1(%arg0: i32) -> (i32, i32) {
    %c0_i32 = arith.constant 0 : i32
    %c0_i32_0 = arith.constant 0 : i32
    %c0_i32_1 = arith.constant 0 : i32
    return %c0_i32, %c0_i32_0 : i32, i32
  }
  func.func @transform_2(%arg0: i32) -> (i32, i32) {
    %c0_i32 = arith.constant 0 : i32
    %c0_i32_0 = arith.constant 0 : i32
    %c0_i32_1 = arith.constant 0 : i32
    return %c0_i32, %c0_i32_0 : i32, i32
  }
  func.func @transform_3(%arg0: i32) -> (i32, i32) {
    %c0_i32 = arith.constant 0 : i32
    %c0_i32_0 = arith.constant 0 : i32
    %c0_i32_1 = arith.constant 0 : i32
    return %c0_i32, %c0_i32_0 : i32, i32
  }
  func.func @transform_4(%arg0: i32) -> (i32, i32) {
    %c0_i32 = arith.constant 0 : i32
    %c0_i32_0 = arith.constant 0 : i32
    %c0_i32_1 = arith.constant 0 : i32
    return %c0_i32, %c0_i32_0 : i32, i32
  }
  func.func @transform_5(%arg0: i32) -> (i32, i32) {
    %c0_i32 = arith.constant 0 : i32
    %c0_i32_0 = arith.constant 0 : i32
    %c0_i32_1 = arith.constant 0 : i32
    return %c0_i32, %c0_i32_0 : i32, i32
  }
  func.func @transform_6(%arg0: i32) -> (i32, i32) {
    %c0_i32 = arith.constant 0 : i32
    %c0_i32_0 = arith.constant 0 : i32
    %c0_i32_1 = arith.constant 0 : i32
    return %c0_i32, %c0_i32_0 : i32, i32
  }
  func.func @transform_7(%arg0: i32) -> (i32, i32) {
    %c0_i32 = arith.constant 0 : i32
    %c0_i32_0 = arith.constant 0 : i32
    %c0_i32_1 = arith.constant 0 : i32
    return %c0_i32, %c0_i32_0 : i32, i32
  }
  func.func @transform_8(%arg0: i32) -> (i32, i32, i32) {
    %c0_i32 = arith.constant 0 : i32
    %c0_i32_0 = arith.constant 0 : i32
    %c0_i32_1 = arith.constant 0 : i32
    return %arg0, %c0_i32, %c0_i32_0 : i32, i32, i32
  }
}

module attributes {stable_mosaic.version = 11 : i64} {
  func.func @_ff_kernel(%arg0: i32, %arg1: memref<128x128xf32, #tpu.memory_space<vmem>>, %arg2: memref<1x128xf32, #tpu.memory_space<vmem>>, %arg3: memref<1x128xf32, #tpu.memory_space<vmem>>, %arg4: memref<128x64xf32, #tpu.memory_space<vmem>>, %arg5: memref<1x64xf32, #tpu.memory_space<vmem>>, %arg6: memref<64x128xf32, #tpu.memory_space<vmem>>, %arg7: memref<1x128xf32, #tpu.memory_space<vmem>>, %arg8: memref<128x128xf32, #tpu.memory_space<vmem>>) attributes {dimension_semantics = [#tpu.dimension_semantics<parallel>], iteration_bounds = array<i64: 1>, scalar_prefetch = 0 : i64, scratch_operands = 0 : i64, tpu.core_type = #tpu.core_type<tc>, window_params = [{transform_indices = @transform_0, window_bounds = array<i64: 128, 128>}, {pipeline_mode = #tpu.pipeline_mode<synchronous>, transform_indices = @transform_1, window_bounds = array<i64: 1, 128>}, {pipeline_mode = #tpu.pipeline_mode<synchronous>, transform_indices = @transform_2, window_bounds = array<i64: 1, 128>}, {pipeline_mode = #tpu.pipeline_mode<synchronous>, transform_indices = @transform_3, window_bounds = array<i64: 128, 64>}, {pipeline_mode = #tpu.pipeline_mode<synchronous>, transform_indices = @transform_4, window_bounds = array<i64: 1, 64>}, {pipeline_mode = #tpu.pipeline_mode<synchronous>, transform_indices = @transform_5, window_bounds = array<i64: 64, 128>}, {pipeline_mode = #tpu.pipeline_mode<synchronous>, transform_indices = @transform_6, window_bounds = array<i64: 1, 128>}, {transform_indices = @transform_7, window_bounds = array<i64: 128, 128>}]} {
    %c0 = arith.constant 0 : index
    %c0_0 = arith.constant 0 : index
    %0 = vector.load %arg1[%c0, %c0_0] : memref<128x128xf32, #tpu.memory_space<vmem>>, vector<128x128xf32>
    %1 = tpu.iota {dimensions = array<i32: 1>} : vector<128x128xi32>
    %c32_i32 = arith.constant 32 : i32
    %2 = vector.broadcast %c32_i32 : i32 to vector<128x128xi32>
    %3 = arith.cmpi slt, %1, %2 : vector<128x128xi32>
    %cst = arith.constant 0.000000e+00 : f32
    %4 = vector.broadcast %cst : f32 to vector<128x128xf32>
    %5 = arith.select %3, %0, %4 : vector<128x128xi1>, vector<128x128xf32>
    %cst_1 = arith.constant dense<0.000000e+00> : vector<128xf32>
    %6 = vector.multi_reduction <add>, %5, %cst_1 [1] : vector<128x128xf32> to vector<128xf32>
    %7 = vector.shape_cast %6 : vector<128xf32> to vector<128x1xf32>
    %cst_2 = arith.constant 3.125000e-02 : f32
    %8 = vector.broadcast %cst_2 : f32 to vector<128x1xf32>
    %9 = arith.mulf %7, %8 : vector<128x1xf32>
    %10 = vector.broadcast %9 : vector<128x1xf32> to vector<128x128xf32>
    %11 = arith.subf %0, %10 : vector<128x128xf32>
    %cst_3 = arith.constant 0.000000e+00 : f32
    %12 = vector.broadcast %cst_3 : f32 to vector<128x128xf32>
    %13 = arith.select %3, %11, %12 : vector<128x128xi1>, vector<128x128xf32>
    %14 = arith.mulf %13, %13 : vector<128x128xf32>
    %cst_4 = arith.constant dense<0.000000e+00> : vector<128xf32>
    %15 = vector.multi_reduction <add>, %14, %cst_4 [1] : vector<128x128xf32> to vector<128xf32>
    %16 = vector.shape_cast %15 : vector<128xf32> to vector<128x1xf32>
    %cst_5 = arith.constant 3.125000e-02 : f32
    %17 = vector.broadcast %cst_5 : f32 to vector<128x1xf32>
    %18 = arith.mulf %16, %17 : vector<128x1xf32>
    %cst_6 = arith.constant 9.99999974E-6 : f32
    %19 = vector.broadcast %cst_6 : f32 to vector<128x1xf32>
    %20 = arith.addf %18, %19 : vector<128x1xf32>
    %21 = math.rsqrt %20 : vector<128x1xf32>
    %22 = vector.broadcast %9 : vector<128x1xf32> to vector<128x128xf32>
    %23 = arith.subf %0, %22 : vector<128x128xf32>
    %24 = vector.broadcast %21 : vector<128x1xf32> to vector<128x128xf32>
    %25 = arith.mulf %23, %24 : vector<128x128xf32>
    %c0_7 = arith.constant 0 : index
    %c0_8 = arith.constant 0 : index
    %26 = vector.load %arg2[%c0_7, %c0_8] : memref<1x128xf32, #tpu.memory_space<vmem>>, vector<1x128xf32>
    %27 = vector.broadcast %26 : vector<1x128xf32> to vector<128x128xf32>
    %28 = arith.mulf %25, %27 : vector<128x128xf32>
    %c0_9 = arith.constant 0 : index
    %c0_10 = arith.constant 0 : index
    %29 = vector.load %arg3[%c0_9, %c0_10] : memref<1x128xf32, #tpu.memory_space<vmem>>, vector<1x128xf32>
    %30 = vector.broadcast %29 : vector<1x128xf32> to vector<128x128xf32>
    %31 = arith.addf %28, %30 : vector<128x128xf32>
    %c0_11 = arith.constant 0 : index
    %c0_12 = arith.constant 0 : index
    %32 = vector.load %arg4[%c0_11, %c0_12] : memref<128x64xf32, #tpu.memory_space<vmem>>, vector<128x64xf32>
    %cst_13 = arith.constant dense<0.000000e+00> : vector<128x64xf32>
    %33 = tpu.matmul %31, %32, %cst_13 {dimension_numbers = #tpu.dot_dimension_numbers<[1], [0], [0], [1], [0, 0, 1, 1], [], []>} : vector<128x128xf32>, vector<128x64xf32>, vector<128x64xf32> -> vector<128x64xf32>
    %c0_14 = arith.constant 0 : index
    %c0_15 = arith.constant 0 : index
    %34 = vector.load %arg5[%c0_14, %c0_15] : memref<1x64xf32, #tpu.memory_space<vmem>>, vector<1x64xf32>
    %35 = vector.broadcast %34 : vector<1x64xf32> to vector<128x64xf32>
    %36 = arith.addf %33, %35 : vector<128x64xf32>
    %cst_16 = arith.constant 0.000000e+00 : f32
    %37 = vector.broadcast %cst_16 : f32 to vector<128x64xf32>
    %38 = arith.subf %37, %36 : vector<128x64xf32>
    %39 = math.exp %38 : vector<128x64xf32>
    %cst_17 = arith.constant 1.000000e+00 : f32
    %40 = vector.broadcast %cst_17 : f32 to vector<128x64xf32>
    %41 = arith.addf %40, %39 : vector<128x64xf32>
    %cst_18 = arith.constant 1.000000e+00 : f32
    %42 = vector.broadcast %cst_18 : f32 to vector<128x64xf32>
    %43 = arith.divf %42, %41 : vector<128x64xf32>
    %44 = arith.mulf %36, %43 : vector<128x64xf32>
    %c0_19 = arith.constant 0 : index
    %c0_20 = arith.constant 0 : index
    %45 = vector.load %arg6[%c0_19, %c0_20] : memref<64x128xf32, #tpu.memory_space<vmem>>, vector<64x128xf32>
    %cst_21 = arith.constant dense<0.000000e+00> : vector<128x128xf32>
    %46 = tpu.matmul %44, %45, %cst_21 {dimension_numbers = #tpu.dot_dimension_numbers<[1], [0], [0], [1], [0, 0, 1, 1], [], []>} : vector<128x64xf32>, vector<64x128xf32>, vector<128x128xf32> -> vector<128x128xf32>
    %c0_22 = arith.constant 0 : index
    %c0_23 = arith.constant 0 : index
    %47 = vector.load %arg7[%c0_22, %c0_23] : memref<1x128xf32, #tpu.memory_space<vmem>>, vector<1x128xf32>
    %48 = vector.broadcast %47 : vector<1x128xf32> to vector<128x128xf32>
    %49 = arith.addf %46, %48 : vector<128x128xf32>
    %50 = arith.addf %0, %49 : vector<128x128xf32>
    %c0_24 = arith.constant 0 : index
    %c0_25 = arith.constant 0 : index
    %51 = vector.load %arg8[%c0_24, %c0_25] : memref<128x128xf32, #tpu.memory_space<vmem>>, vector<128x128xf32>
    tpu.vector_store %arg8[%c0_24, %c0_25], %50 {strides = array<i32>} : memref<128x128xf32, #tpu.memory_space<vmem>>, vector<128x128xf32>,
    return
  }
  func.func @transform_0(%arg0: i32) -> (i32, i32) {
    %c0_i32 = arith.constant 0 : i32
    %c0_i32_0 = arith.constant 0 : i32
    return %arg0, %c0_i32 : i32, i32
  }
  func.func @transform_1(%arg0: i32) -> (i32, i32) {
    %c0_i32 = arith.constant 0 : i32
    %c0_i32_0 = arith.constant 0 : i32
    %c0_i32_1 = arith.constant 0 : i32
    return %c0_i32, %c0_i32_0 : i32, i32
  }
  func.func @transform_2(%arg0: i32) -> (i32, i32) {
    %c0_i32 = arith.constant 0 : i32
    %c0_i32_0 = arith.constant 0 : i32
    %c0_i32_1 = arith.constant 0 : i32
    return %c0_i32, %c0_i32_0 : i32, i32
  }
  func.func @transform_3(%arg0: i32) -> (i32, i32) {
    %c0_i32 = arith.constant 0 : i32
    %c0_i32_0 = arith.constant 0 : i32
    %c0_i32_1 = arith.constant 0 : i32
    return %c0_i32, %c0_i32_0 : i32, i32
  }
  func.func @transform_4(%arg0: i32) -> (i32, i32) {
    %c0_i32 = arith.constant 0 : i32
    %c0_i32_0 = arith.constant 0 : i32
    %c0_i32_1 = arith.constant 0 : i32
    return %c0_i32, %c0_i32_0 : i32, i32
  }
  func.func @transform_5(%arg0: i32) -> (i32, i32) {
    %c0_i32 = arith.constant 0 : i32
    %c0_i32_0 = arith.constant 0 : i32
    %c0_i32_1 = arith.constant 0 : i32
    return %c0_i32, %c0_i32_0 : i32, i32
  }
  func.func @transform_6(%arg0: i32) -> (i32, i32) {
    %c0_i32 = arith.constant 0 : i32
    %c0_i32_0 = arith.constant 0 : i32
    %c0_i32_1 = arith.constant 0 : i32
    return %c0_i32, %c0_i32_0 : i32, i32
  }
  func.func @transform_7(%arg0: i32) -> (i32, i32) {
    %c0_i32 = arith.constant 0 : i32
    %c0_i32_0 = arith.constant 0 : i32
    return %arg0, %c0_i32 : i32, i32
  }
}

module attributes {stable_mosaic.version = 11 : i64} {
  func.func @_ff_kernel(%arg0: i32, %arg1: memref<128x128xf32, #tpu.memory_space<vmem>>, %arg2: memref<1x128xf32, #tpu.memory_space<vmem>>, %arg3: memref<1x128xf32, #tpu.memory_space<vmem>>, %arg4: memref<128x64xf32, #tpu.memory_space<vmem>>, %arg5: memref<1x64xf32, #tpu.memory_space<vmem>>, %arg6: memref<64x128xf32, #tpu.memory_space<vmem>>, %arg7: memref<1x128xf32, #tpu.memory_space<vmem>>, %arg8: memref<128x128xf32, #tpu.memory_space<vmem>>) attributes {dimension_semantics = [#tpu.dimension_semantics<parallel>], iteration_bounds = array<i64: 1>, scalar_prefetch = 0 : i64, scratch_operands = 0 : i64, tpu.core_type = #tpu.core_type<tc>, window_params = [{transform_indices = @transform_0, window_bounds = array<i64: 128, 128>}, {pipeline_mode = #tpu.pipeline_mode<synchronous>, transform_indices = @transform_1, window_bounds = array<i64: 1, 128>}, {pipeline_mode = #tpu.pipeline_mode<synchronous>, transform_indices = @transform_2, window_bounds = array<i64: 1, 128>}, {pipeline_mode = #tpu.pipeline_mode<synchronous>, transform_indices = @transform_3, window_bounds = array<i64: 128, 64>}, {pipeline_mode = #tpu.pipeline_mode<synchronous>, transform_indices = @transform_4, window_bounds = array<i64: 1, 64>}, {pipeline_mode = #tpu.pipeline_mode<synchronous>, transform_indices = @transform_5, window_bounds = array<i64: 64, 128>}, {pipeline_mode = #tpu.pipeline_mode<synchronous>, transform_indices = @transform_6, window_bounds = array<i64: 1, 128>}, {transform_indices = @transform_7, window_bounds = array<i64: 128, 128>}]} {
    %c0 = arith.constant 0 : index
    %c0_0 = arith.constant 0 : index
    %0 = vector.load %arg1[%c0, %c0_0] : memref<128x128xf32, #tpu.memory_space<vmem>>, vector<128x128xf32>
    %1 = tpu.iota {dimensions = array<i32: 1>} : vector<128x128xi32>
    %c32_i32 = arith.constant 32 : i32
    %2 = vector.broadcast %c32_i32 : i32 to vector<128x128xi32>
    %3 = arith.cmpi slt, %1, %2 : vector<128x128xi32>
    %cst = arith.constant 0.000000e+00 : f32
    %4 = vector.broadcast %cst : f32 to vector<128x128xf32>
    %5 = arith.select %3, %0, %4 : vector<128x128xi1>, vector<128x128xf32>
    %cst_1 = arith.constant dense<0.000000e+00> : vector<128xf32>
    %6 = vector.multi_reduction <add>, %5, %cst_1 [1] : vector<128x128xf32> to vector<128xf32>
    %7 = vector.shape_cast %6 : vector<128xf32> to vector<128x1xf32>
    %cst_2 = arith.constant 3.125000e-02 : f32
    %8 = vector.broadcast %cst_2 : f32 to vector<128x1xf32>
    %9 = arith.mulf %7, %8 : vector<128x1xf32>
    %10 = vector.broadcast %9 : vector<128x1xf32> to vector<128x128xf32>
    %11 = arith.subf %0, %10 : vector<128x128xf32>
    %cst_3 = arith.constant 0.000000e+00 : f32
    %12 = vector.broadcast %cst_3 : f32 to vector<128x128xf32>
    %13 = arith.select %3, %11, %12 : vector<128x128xi1>, vector<128x128xf32>
    %14 = arith.mulf %13, %13 : vector<128x128xf32>
    %cst_4 = arith.constant dense<0.000000e+00> : vector<128xf32>
    %15 = vector.multi_reduction <add>, %14, %cst_4 [1] : vector<128x128xf32> to vector<128xf32>
    %16 = vector.shape_cast %15 : vector<128xf32> to vector<128x1xf32>
    %cst_5 = arith.constant 3.125000e-02 : f32
    %17 = vector.broadcast %cst_5 : f32 to vector<128x1xf32>
    %18 = arith.mulf %16, %17 : vector<128x1xf32>
    %cst_6 = arith.constant 9.99999974E-6 : f32
    %19 = vector.broadcast %cst_6 : f32 to vector<128x1xf32>
    %20 = arith.addf %18, %19 : vector<128x1xf32>
    %21 = math.rsqrt %20 : vector<128x1xf32>
    %22 = vector.broadcast %9 : vector<128x1xf32> to vector<128x128xf32>
    %23 = arith.subf %0, %22 : vector<128x128xf32>
    %24 = vector.broadcast %21 : vector<128x1xf32> to vector<128x128xf32>
    %25 = arith.mulf %23, %24 : vector<128x128xf32>
    %c0_7 = arith.constant 0 : index
    %c0_8 = arith.constant 0 : index
    %26 = vector.load %arg2[%c0_7, %c0_8] : memref<1x128xf32, #tpu.memory_space<vmem>>, vector<1x128xf32>
    %27 = vector.broadcast %26 : vector<1x128xf32> to vector<128x128xf32>
    %28 = arith.mulf %25, %27 : vector<128x128xf32>
    %c0_9 = arith.constant 0 : index
    %c0_10 = arith.constant 0 : index
    %29 = vector.load %arg3[%c0_9, %c0_10] : memref<1x128xf32, #tpu.memory_space<vmem>>, vector<1x128xf32>
    %30 = vector.broadcast %29 : vector<1x128xf32> to vector<128x128xf32>
    %31 = arith.addf %28, %30 : vector<128x128xf32>
    %c0_11 = arith.constant 0 : index
    %c0_12 = arith.constant 0 : index
    %32 = vector.load %arg4[%c0_11, %c0_12] : memref<128x64xf32, #tpu.memory_space<vmem>>, vector<128x64xf32>
    %cst_13 = arith.constant dense<0.000000e+00> : vector<128x64xf32>
    %33 = tpu.matmul %31, %32, %cst_13 {dimension_numbers = #tpu.dot_dimension_numbers<[1], [0], [0], [1], [0, 0, 1, 1], [], []>} : vector<128x128xf32>, vector<128x64xf32>, vector<128x64xf32> -> vector<128x64xf32>
    %c0_14 = arith.constant 0 : index
    %c0_15 = arith.constant 0 : index
    %34 = vector.load %arg5[%c0_14, %c0_15] : memref<1x64xf32, #tpu.memory_space<vmem>>, vector<1x64xf32>
    %35 = vector.broadcast %34 : vector<1x64xf32> to vector<128x64xf32>
    %36 = arith.addf %33, %35 : vector<128x64xf32>
    %cst_16 = arith.constant 0.000000e+00 : f32
    %37 = vector.broadcast %cst_16 : f32 to vector<128x64xf32>
    %38 = arith.subf %37, %36 : vector<128x64xf32>
    %39 = math.exp %38 : vector<128x64xf32>
    %cst_17 = arith.constant 1.000000e+00 : f32
    %40 = vector.broadcast %cst_17 : f32 to vector<128x64xf32>
    %41 = arith.addf %40, %39 : vector<128x64xf32>
    %cst_18 = arith.constant 1.000000e+00 : f32
    %42 = vector.broadcast %cst_18 : f32 to vector<128x64xf32>
    %43 = arith.divf %42, %41 : vector<128x64xf32>
    %44 = arith.mulf %36, %43 : vector<128x64xf32>
    %c0_19 = arith.constant 0 : index
    %c0_20 = arith.constant 0 : index
    %45 = vector.load %arg6[%c0_19, %c0_20] : memref<64x128xf32, #tpu.memory_space<vmem>>, vector<64x128xf32>
    %cst_21 = arith.constant dense<0.000000e+00> : vector<128x128xf32>
    %46 = tpu.matmul %44, %45, %cst_21 {dimension_numbers = #tpu.dot_dimension_numbers<[1], [0], [0], [1], [0, 0, 1, 1], [], []>} : vector<128x64xf32>, vector<64x128xf32>, vector<128x128xf32> -> vector<128x128xf32>
    %c0_22 = arith.constant 0 : index
    %c0_23 = arith.constant 0 : index
    %47 = vector.load %arg7[%c0_22, %c0_23] : memref<1x128xf32, #tpu.memory_space<vmem>>, vector<1x128xf32>
    %48 = vector.broadcast %47 : vector<1x128xf32> to vector<128x128xf32>
    %49 = arith.addf %46, %48 : vector<128x128xf32>
    %50 = arith.addf %0, %49 : vector<128x128xf32>
    %c0_24 = arith.constant 0 : index
    %c0_25 = arith.constant 0 : index
    %51 = vector.load %arg8[%c0_24, %c0_25] : memref<128x128xf32, #tpu.memory_space<vmem>>, vector<128x128xf32>
    tpu.vector_store %arg8[%c0_24, %c0_25], %50 {strides = array<i32>} : memref<128x128xf32, #tpu.memory_space<vmem>>, vector<128x128xf32>,
    return
  }
  func.func @transform_0(%arg0: i32) -> (i32, i32) {
    %c0_i32 = arith.constant 0 : i32
    %c0_i32_0 = arith.constant 0 : i32
    return %arg0, %c0_i32 : i32, i32
  }
  func.func @transform_1(%arg0: i32) -> (i32, i32) {
    %c0_i32 = arith.constant 0 : i32
    %c0_i32_0 = arith.constant 0 : i32
    %c0_i32_1 = arith.constant 0 : i32
    return %c0_i32, %c0_i32_0 : i32, i32
  }
  func.func @transform_2(%arg0: i32) -> (i32, i32) {
    %c0_i32 = arith.constant 0 : i32
    %c0_i32_0 = arith.constant 0 : i32
    %c0_i32_1 = arith.constant 0 : i32
    return %c0_i32, %c0_i32_0 : i32, i32
  }
  func.func @transform_3(%arg0: i32) -> (i32, i32) {
    %c0_i32 = arith.constant 0 : i32
    %c0_i32_0 = arith.constant 0 : i32
    %c0_i32_1 = arith.constant 0 : i32
    return %c0_i32, %c0_i32_0 : i32, i32
  }
  func.func @transform_4(%arg0: i32) -> (i32, i32) {
    %c0_i32 = arith.constant 0 : i32
    %c0_i32_0 = arith.constant 0 : i32
    %c0_i32_1 = arith.constant 0 : i32
    return %c0_i32, %c0_i32_0 : i32, i32
  }
  func.func @transform_5(%arg0: i32) -> (i32, i32) {
    %c0_i32 = arith.constant 0 : i32
    %c0_i32_0 = arith.constant 0 : i32
    %c0_i32_1 = arith.constant 0 : i32
    return %c0_i32, %c0_i32_0 : i32, i32
  }
  func.func @transform_6(%arg0: i32) -> (i32, i32) {
    %c0_i32 = arith.constant 0 : i32
    %c0_i32_0 = arith.constant 0 : i32
    %c0_i32_1 = arith.constant 0 : i32
    return %c0_i32, %c0_i32_0 : i32, i32
  }
  func.func @transform_7(%arg0: i32) -> (i32, i32) {
    %c0_i32 = arith.constant 0 : i32
    %c0_i32_0 = arith.constant 0 : i32
    return %arg0, %c0_i32 : i32, i32
  }
}

</mosaic_0001>

<llo_original>
// kernel: transformer.7
$region0: #{transformer.7}
  #allocation0 [shape = 'u32[]', space=smem, size = 0x4, offset = 0x4, fixed_abs, tag = 'smem constant byte address 0x4 - core index']
  #allocation1 [shape = 'u32[144,128]{1,0:T(1,128)}', space=vmem, size = 0x12000, scoped, tag = 'internal scratch']
  %s0 = inlined_call_operand.vmem [shape: f32[128,128], index: 0, kind: input, shape index: {}]
  %s1 = inlined_call_operand.vmem [shape: f32[1,128], index: 1, kind: input, shape index: {}]
  %s2 = inlined_call_operand.vmem [shape: f32[1,128], index: 2, kind: input, shape index: {}]
  %s3 = inlined_call_operand.vmem [shape: f32[128,64], index: 3, kind: input, shape index: {}]
  %s4 = inlined_call_operand.vmem [shape: f32[1,64], index: 4, kind: input, shape index: {}]
  %s5 = inlined_call_operand.vmem [shape: f32[64,128], index: 5, kind: input, shape index: {}]
  %s6 = inlined_call_operand.vmem [shape: f32[1,128], index: 6, kind: input, shape index: {}]
  %s7 = inlined_call_operand.hbm [shape: f32[128,128], index: 7, kind: output, shape index: {}]
  %s8 = sld [smem:[#allocation0]]
  $region38: #{transformer.7} parent=0
    _
  %s10 = ssub.s32 1, %s8
  %s11 = scalar_select 0, %s10, %s8
  $region1: #{transformer.7} parent=0
    #allocation2 [shape = 'u8[65536]{0}', space=vmem, size = 0x10000, scoped, tag = 'output window, operand 0, single buffered']
    #allocation3 [shape = 's32[1]{0}', space=sflag, size = 0x4, scoped, tag = 'scoped memory for transformer.7']
    %12 = vsyncpa [#allocation3], 0
    // Predicated region
    $region2: #{transformer.7} parent=1 // pred_check
      _
    $region3: #{transformer.7} parent=1 // pred_check_branch
      %14 = sbr.rel (0) target = $region5
    $region4: #{transformer.7} parent=1 // pred_region
      _
    $region5: #{transformer.7} parent=1 // pred_fallthru
      _
    // Predicated region
    $region6: #{transformer.7} parent=1 // pred_check
      _
    $region7: #{transformer.7} parent=1 // pred_check_branch
      %16 = sbr.rel (0) target = $region9
    $region8: #{transformer.7} parent=1 // pred_region
      _
    $region9: #{transformer.7} parent=1 // pred_fallthru
      _
    // Predicated region
    $region10: #{transformer.7} parent=1 // pred_check
      _
    $region11: #{transformer.7} parent=1 // pred_check_branch
      %18 = sbr.rel (0) target = $region13
    $region12: #{transformer.7} parent=1 // pred_region
      _
    $region13: #{transformer.7} parent=1 // pred_fallthru
      _
    // Predicated region
    $region14: #{transformer.7} parent=1 // pred_check
      _
    $region15: #{transformer.7} parent=1 // pred_check_branch
      %20 = sbr.rel (0) target = $region17
    $region16: #{transformer.7} parent=1 // pred_region
      _
    $region17: #{transformer.7} parent=1 // pred_fallthru
      _
    // Predicated region
    $region18: #{transformer.7} parent=1 // pred_check
      _
    $region19: #{transformer.7} parent=1 // pred_check_branch
      %22 = sbr.rel (0) target = $region21
    $region20: #{transformer.7} parent=1 // pred_region
      _
    $region21: #{transformer.7} parent=1 // pred_fallthru
      _
    // Predicated region
    $region22: #{transformer.7} parent=1 // pred_check
      _
    $region23: #{transformer.7} parent=1 // pred_check_branch
      %24 = sbr.rel (0) target = $region25
    $region24: #{transformer.7} parent=1 // pred_region
      _
    $region25: #{transformer.7} parent=1 // pred_fallthru
      _
    // Predicated region
    $region26: #{transformer.7} parent=1 // pred_check
      _
    $region27: #{transformer.7} parent=1 // pred_check_branch
      %26 = sbr.rel (0) target = $region29
    $region28: #{transformer.7} parent=1 // pred_region
      _
    $region29: #{transformer.7} parent=1 // pred_fallthru
      _
    %v27 = vld [vmem:[%s0] sm:$0xff]
    %v28 = vld [vmem:[%s0 + $0x8] sm:$0xff]
    %v29 = vld [vmem:[%s0 + $0x10] sm:$0xff]
    %v30 = vld [vmem:[%s0 + $0x18] sm:$0xff]
    %v31 = vld [vmem:[%s0 + $0x20] sm:$0xff]
    %v32 = vld [vmem:[%s0 + $0x28] sm:$0xff]
    %v33 = vld [vmem:[%s0 + $0x30] sm:$0xff]
    %v34 = vld [vmem:[%s0 + $0x38] sm:$0xff]
    %v35 = vld [vmem:[%s0 + $0x40] sm:$0xff]
    %v36 = vld [vmem:[%s0 + $0x48] sm:$0xff]
    %v37 = vld [vmem:[%s0 + $0x50] sm:$0xff]
    %v38 = vld [vmem:[%s0 + $0x58] sm:$0xff]
    %v39 = vld [vmem:[%s0 + $0x60] sm:$0xff]
    %v40 = vld [vmem:[%s0 + $0x68] sm:$0xff]
    %v41 = vld [vmem:[%s0 + $0x70] sm:$0xff]
    %v42 = vld [vmem:[%s0 + $0x78] sm:$0xff]
    %v43 = vlaneseq
    %v44 = vand.u32 %v43, 127
    %vm45 = vcmp.lt.s32.totalorder %v44, 32
    %v46 = vsel %vm45, %v27, 0.0
    %v47 = vsel %vm45, %v28, 0.0
    %v48 = vsel %vm45, %v29, 0.0
    %v49 = vsel %vm45, %v30, 0.0
    %v50 = vsel %vm45, %v31, 0.0
    %v51 = vsel %vm45, %v32, 0.0
    %v52 = vsel %vm45, %v33, 0.0
    %v53 = vsel %vm45, %v34, 0.0
    %v54 = vsel %vm45, %v35, 0.0
    %v55 = vsel %vm45, %v36, 0.0
    %v56 = vsel %vm45, %v37, 0.0
    %v57 = vsel %vm45, %v38, 0.0
    %v58 = vsel %vm45, %v39, 0.0
    %v59 = vsel %vm45, %v40, 0.0
    %v60 = vsel %vm45, %v41, 0.0
    %v61 = vsel %vm45, %v42, 0.0
    %62 = vadd.xlane.f32.xlu0 %v46
    %v63 = vpop.xlane.xlu0 %62
    %64 = vadd.xlane.f32.xlu0 %v47
    %v65 = vpop.xlane.xlu0 %64
    %66 = vadd.xlane.f32.xlu0 %v48
    %v67 = vpop.xlane.xlu0 %66
    %68 = vadd.xlane.f32.xlu0 %v49
    %v69 = vpop.xlane.xlu0 %68
    %70 = vadd.xlane.f32.xlu0 %v50
    %v71 = vpop.xlane.xlu0 %70
    %72 = vadd.xlane.f32.xlu0 %v51
    %v73 = vpop.xlane.xlu0 %72
    %74 = vadd.xlane.f32.xlu0 %v52
    %v75 = vpop.xlane.xlu0 %74
    %76 = vadd.xlane.f32.xlu0 %v53
    %v77 = vpop.xlane.xlu0 %76
    %78 = vadd.xlane.f32.xlu0 %v54
    %v79 = vpop.xlane.xlu0 %78
    %80 = vadd.xlane.f32.xlu0 %v55
    %v81 = vpop.xlane.xlu0 %80
    %82 = vadd.xlane.f32.xlu0 %v56
    %v83 = vpop.xlane.xlu0 %82
    %84 = vadd.xlane.f32.xlu0 %v57
    %v85 = vpop.xlane.xlu0 %84
    %86 = vadd.xlane.f32.xlu0 %v58
    %v87 = vpop.xlane.xlu0 %86
    %88 = vadd.xlane.f32.xlu0 %v59
    %v89 = vpop.xlane.xlu0 %88
    %90 = vadd.xlane.f32.xlu0 %v60
    %v91 = vpop.xlane.xlu0 %90
    %92 = vadd.xlane.f32.xlu0 %v61
    %v93 = vpop.xlane.xlu0 %92
    %v94 = vmul.f32 %v63, 0.03125
    %v95 = vmul.f32 %v65, 0.03125
    %v96 = vmul.f32 %v67, 0.03125
    %v97 = vmul.f32 %v69, 0.03125
    %v98 = vmul.f32 %v71, 0.03125
    %v99 = vmul.f32 %v73, 0.03125
    %v100 = vmul.f32 %v75, 0.03125
    %v101 = vmul.f32 %v77, 0.03125
    %v102 = vmul.f32 %v79, 0.03125
    %v103 = vmul.f32 %v81, 0.03125
    %v104 = vmul.f32 %v83, 0.03125
    %v105 = vmul.f32 %v85, 0.03125
    %v106 = vmul.f32 %v87, 0.03125
    %v107 = vmul.f32 %v89, 0.03125
    %v108 = vmul.f32 %v91, 0.03125
    %v109 = vmul.f32 %v93, 0.03125
    %v110 = vsub.f32 %v27, %v94
    %v111 = vsub.f32 %v28, %v95
    %v112 = vsub.f32 %v29, %v96
    %v113 = vsub.f32 %v30, %v97
    %v114 = vsub.f32 %v31, %v98
    %v115 = vsub.f32 %v32, %v99
    %v116 = vsub.f32 %v33, %v100
    %v117 = vsub.f32 %v34, %v101
    %v118 = vsub.f32 %v35, %v102
    %v119 = vsub.f32 %v36, %v103
    %v120 = vsub.f32 %v37, %v104
    %v121 = vsub.f32 %v38, %v105
    %v122 = vsub.f32 %v39, %v106
    %v123 = vsub.f32 %v40, %v107
    %v124 = vsub.f32 %v41, %v108
    %v125 = vsub.f32 %v42, %v109
    %v126 = vsel %vm45, %v110, 0.0
    %v127 = vsel %vm45, %v111, 0.0
    %v128 = vsel %vm45, %v112, 0.0
    %v129 = vsel %vm45, %v113, 0.0
    %v130 = vsel %vm45, %v114, 0.0
    %v131 = vsel %vm45, %v115, 0.0
    %v132 = vsel %vm45, %v116, 0.0
    %v133 = vsel %vm45, %v117, 0.0
    %v134 = vsel %vm45, %v118, 0.0
    %v135 = vsel %vm45, %v119, 0.0
    %v136 = vsel %vm45, %v120, 0.0
    %v137 = vsel %vm45, %v121, 0.0
    %v138 = vsel %vm45, %v122, 0.0
    %v139 = vsel %vm45, %v123, 0.0
    %v140 = vsel %vm45, %v124, 0.0
    %v141 = vsel %vm45, %v125, 0.0
    %v142 = vmul.f32 %v126, %v126
    %v143 = vmul.f32 %v127, %v127
    %v144 = vmul.f32 %v128, %v128
    %v145 = vmul.f32 %v129, %v129
    %v146 = vmul.f32 %v130, %v130
    %v147 = vmul.f32 %v131, %v131
    %v148 = vmul.f32 %v132, %v132
    %v149 = vmul.f32 %v133, %v133
    %v150 = vmul.f32 %v134, %v134
    %v151 = vmul.f32 %v135, %v135
    %v152 = vmul.f32 %v136, %v136
    %v153 = vmul.f32 %v137, %v137
    %v154 = vmul.f32 %v138, %v138
    %v155 = vmul.f32 %v139, %v139
    %v156 = vmul.f32 %v140, %v140
    %v157 = vmul.f32 %v141, %v141
    %158 = vadd.xlane.f32.xlu0 %v142
    %v159 = vpop.xlane.xlu0 %158
    %160 = vadd.xlane.f32.xlu0 %v143
    %v161 = vpop.xlane.xlu0 %160
    %162 = vadd.xlane.f32.xlu0 %v144
    %v163 = vpop.xlane.xlu0 %162
    %164 = vadd.xlane.f32.xlu0 %v145
    %v165 = vpop.xlane.xlu0 %164
    %166 = vadd.xlane.f32.xlu0 %v146
    %v167 = vpop.xlane.xlu0 %166
    %168 = vadd.xlane.f32.xlu0 %v147
    %v169 = vpop.xlane.xlu0 %168
    %170 = vadd.xlane.f32.xlu0 %v148
    %v171 = vpop.xlane.xlu0 %170
    %172 = vadd.xlane.f32.xlu0 %v149
    %v173 = vpop.xlane.xlu0 %172
    %174 = vadd.xlane.f32.xlu0 %v150
    %v175 = vpop.xlane.xlu0 %174
    %176 = vadd.xlane.f32.xlu0 %v151
    %v177 = vpop.xlane.xlu0 %176
    %178 = vadd.xlane.f32.xlu0 %v152
    %v179 = vpop.xlane.xlu0 %178
    %180 = vadd.xlane.f32.xlu0 %v153
    %v181 = vpop.xlane.xlu0 %180
    %182 = vadd.xlane.f32.xlu0 %v154
    %v183 = vpop.xlane.xlu0 %182
    %184 = vadd.xlane.f32.xlu0 %v155
    %v185 = vpop.xlane.xlu0 %184
    %186 = vadd.xlane.f32.xlu0 %v156
    %v187 = vpop.xlane.xlu0 %186
    %188 = vadd.xlane.f32.xlu0 %v157
    %v189 = vpop.xlane.xlu0 %188
    %v190 = vmul.f32 %v159, 0.03125
    %v191 = vmul.f32 %v161, 0.03125
    %v192 = vmul.f32 %v163, 0.03125
    %v193 = vmul.f32 %v165, 0.03125
    %v194 = vmul.f32 %v167, 0.03125
    %v195 = vmul.f32 %v169, 0.03125
    %v196 = vmul.f32 %v171, 0.03125
    %v197 = vmul.f32 %v173, 0.03125
    %v198 = vmul.f32 %v175, 0.03125
    %v199 = vmul.f32 %v177, 0.03125
    %v200 = vmul.f32 %v179, 0.03125
    %v201 = vmul.f32 %v181, 0.03125
    %v202 = vmul.f32 %v183, 0.03125
    %v203 = vmul.f32 %v185, 0.03125
    %v204 = vmul.f32 %v187, 0.03125
    %v205 = vmul.f32 %v189, 0.03125
    %v206 = vadd.f32 %v190, 1e-05
    %v207 = vadd.f32 %v191, 1e-05
    %v208 = vadd.f32 %v192, 1e-05
    %v209 = vadd.f32 %v193, 1e-05
    %v210 = vadd.f32 %v194, 1e-05
    %v211 = vadd.f32 %v195, 1e-05
    %v212 = vadd.f32 %v196, 1e-05
    %v213 = vadd.f32 %v197, 1e-05
    %v214 = vadd.f32 %v198, 1e-05
    %v215 = vadd.f32 %v199, 1e-05
    %v216 = vadd.f32 %v200, 1e-05
    %v217 = vadd.f32 %v201, 1e-05
    %v218 = vadd.f32 %v202, 1e-05
    %v219 = vadd.f32 %v203, 1e-05
    %v220 = vadd.f32 %v204, 1e-05
    %v221 = vadd.f32 %v205, 1e-05
    %v222 = vrsqrt.pop %v206
    %v223 = vrsqrt.pop %v207
    %v224 = vrsqrt.pop %v208
    %v225 = vrsqrt.pop %v209
    %v226 = vrsqrt.pop %v210
    %v227 = vrsqrt.pop %v211
    %v228 = vrsqrt.pop %v212
    %v229 = vrsqrt.pop %v213
    %v230 = vrsqrt.pop %v214
    %v231 = vrsqrt.pop %v215
    %v232 = vrsqrt.pop %v216
    %v233 = vrsqrt.pop %v217
    %v234 = vrsqrt.pop %v218
    %v235 = vrsqrt.pop %v219
    %v236 = vrsqrt.pop %v220
    %v237 = vrsqrt.pop %v221
    %v238 = vmul.f32 %v110, %v222
    %v239 = vmul.f32 %v111, %v223
    %v240 = vmul.f32 %v112, %v224
    %v241 = vmul.f32 %v113, %v225
    %v242 = vmul.f32 %v114, %v226
    %v243 = vmul.f32 %v115, %v227
    %v244 = vmul.f32 %v116, %v228
    %v245 = vmul.f32 %v117, %v229
    %v246 = vmul.f32 %v118, %v230
    %v247 = vmul.f32 %v119, %v231
    %v248 = vmul.f32 %v120, %v232
    %v249 = vmul.f32 %v121, %v233
    %v250 = vmul.f32 %v122, %v234
    %v251 = vmul.f32 %v123, %v235
    %v252 = vmul.f32 %v124, %v236
    %v253 = vmul.f32 %v125, %v237
    %v254 = vld [vmem:[%s1] sm:$0x1]
    %v256 = vlaneseq
    %v257 = vshrl.u32 %v256, 7
    %v258 = vsub.s32 0, %v257
    %v259 = vrot.slane %v254, %v258
    %v261 = vmul.f32 %v238, %v259
    %v262 = vmul.f32 %v239, %v259
    %v263 = vmul.f32 %v240, %v259
    %v264 = vmul.f32 %v241, %v259
    %v265 = vmul.f32 %v242, %v259
    %v266 = vmul.f32 %v243, %v259
    %v267 = vmul.f32 %v244, %v259
    %v268 = vmul.f32 %v245, %v259
    %v269 = vmul.f32 %v246, %v259
    %v270 = vmul.f32 %v247, %v259
    %v271 = vmul.f32 %v248, %v259
    %v272 = vmul.f32 %v249, %v259
    %v273 = vmul.f32 %v250, %v259
    %v274 = vmul.f32 %v251, %v259
    %v275 = vmul.f32 %v252, %v259
    %v276 = vmul.f32 %v253, %v259
    %v277 = vld [vmem:[%s2] sm:$0x1]
    %v279 = vlaneseq
    %v280 = vshrl.u32 %v279, 7
    %v281 = vsub.s32 0, %v280
    %v282 = vrot.slane %v277, %v281
    %v284 = vadd.f32 %v261, %v282
    %v285 = vadd.f32 %v262, %v282
    %v286 = vadd.f32 %v263, %v282
    %v287 = vadd.f32 %v264, %v282
    %v288 = vadd.f32 %v265, %v282
    %v289 = vadd.f32 %v266, %v282
    %v290 = vadd.f32 %v267, %v282
    %v291 = vadd.f32 %v268, %v282
    %v292 = vadd.f32 %v269, %v282
    %v293 = vadd.f32 %v270, %v282
    %v294 = vadd.f32 %v271, %v282
    %v295 = vadd.f32 %v272, %v282
    %v296 = vadd.f32 %v273, %v282
    %v297 = vadd.f32 %v274, %v282
    %v298 = vadd.f32 %v275, %v282
    %v299 = vadd.f32 %v276, %v282
    %v300 = vld [vmem:[%s3] sm:$0xff]
    %v301 = vld [vmem:[%s3 + $0x8] sm:$0xff]
    %v302 = vld [vmem:[%s3 + $0x10] sm:$0xff]
    %v303 = vld [vmem:[%s3 + $0x18] sm:$0xff]
    %v304 = vld [vmem:[%s3 + $0x20] sm:$0xff]
    %v305 = vld [vmem:[%s3 + $0x28] sm:$0xff]
    %v306 = vld [vmem:[%s3 + $0x30] sm:$0xff]
    %v307 = vld [vmem:[%s3 + $0x38] sm:$0xff]
    %v308 = vld [vmem:[%s3 + $0x40] sm:$0xff]
    %v309 = vld [vmem:[%s3 + $0x48] sm:$0xff]
    %v310 = vld [vmem:[%s3 + $0x50] sm:$0xff]
    %v311 = vld [vmem:[%s3 + $0x58] sm:$0xff]
    %v312 = vld [vmem:[%s3 + $0x60] sm:$0xff]
    %v313 = vld [vmem:[%s3 + $0x68] sm:$0xff]
    %v314 = vld [vmem:[%s3 + $0x70] sm:$0xff]
    %v315 = vld [vmem:[%s3 + $0x78] sm:$0xff]
    %v316 = vld [vmem:[%s4] sm:$0x1]
    %v318 = vlaneseq
    %v319 = vshrl.u32 %v318, 7
    %v320 = vsub.s32 0, %v319
    %v321 = vrot.slane %v316, %v320
    %323 = vmatprep.subr.mxu0 0.0
    %324 = vmatpush1.msra.mxu0 %v300
    %325 = vmatprep.subr.mxu0 0.0
    %326 = vmatpush1.msra.mxu0 %v301
    %327 = vmatprep.subr.mxu0 0.0
    %328 = vmatpush1.msra.mxu0 %v302
    %329 = vmatprep.subr.mxu0 0.0
    %330 = vmatpush1.msra.mxu0 %v303
    %331 = vmatprep.subr.mxu0 0.0
    %332 = vmatpush1.msra.mxu0 %v304
    %333 = vmatprep.subr.mxu0 0.0
    %334 = vmatpush1.msra.mxu0 %v305
    %335 = vmatprep.subr.mxu0 0.0
    %336 = vmatpush1.msra.mxu0 %v306
    %337 = vmatprep.subr.mxu0 0.0
    %338 = vmatpush1.msra.mxu0 %v307
    %339 = vmatprep.subr.mxu0 0.0
    %340 = vmatpush1.msra.mxu0 %v308
    %341 = vmatprep.subr.mxu0 0.0
    %342 = vmatpush1.msra.mxu0 %v309
    %343 = vmatprep.subr.mxu0 0.0
    %344 = vmatpush1.msra.mxu0 %v310
    %345 = vmatprep.subr.mxu0 0.0
    %346 = vmatpush1.msra.mxu0 %v311
    %347 = vmatprep.subr.mxu0 0.0
    %348 = vmatpush1.msra.mxu0 %v312
    %349 = vmatprep.subr.mxu0 0.0
    %350 = vmatpush1.msra.mxu0 %v313
    %351 = vmatprep.subr.mxu0 0.0
    %352 = vmatpush1.msra.mxu0 %v314
    %353 = vmatprep.subr.mxu0 0.0
    %354 = vmatpush1.msra.mxu0 %v315
    %355 = vmatprep.subr.mxu0 0.0
    %356 = vmatpush1.msra.mxu0 0.0
    %357 = vmatprep.subr.mxu0 0.0
    %358 = vmatpush1.msra.mxu0 0.0
    %359 = vmatprep.subr.mxu0 0.0
    %360 = vmatpush1.msra.mxu0 0.0
    %361 = vmatprep.subr.mxu0 0.0
    %362 = vmatpush1.msra.mxu0 0.0
    %363 = vmatprep.subr.mxu0 0.0
    %364 = vmatpush1.msra.mxu0 0.0
    %365 = vmatprep.subr.mxu0 0.0
    %366 = vmatpush1.msra.mxu0 0.0
    %367 = vmatprep.subr.mxu0 0.0
    %368 = vmatpush1.msra.mxu0 0.0
    %369 = vmatprep.subr.mxu0 0.0
    %370 = vmatpush1.msra.mxu0 0.0
    %371 = vmatprep.subr.mxu0 0.0
    %372 = vmatpush1.msra.mxu0 0.0
    %373 = vmatprep.subr.mxu0 0.0
    %374 = vmatpush1.msra.mxu0 0.0
    %375 = vmatprep.subr.mxu0 0.0
    %376 = vmatpush1.msra.mxu0 0.0
    %377 = vmatprep.subr.mxu0 0.0
    %378 = vmatpush1.msra.mxu0 0.0
    %379 = vmatprep.subr.mxu0 0.0
    %380 = vmatpush1.msra.mxu0 0.0
    %381 = vmatprep.subr.mxu0 0.0
    %382 = vmatpush1.msra.mxu0 0.0
    %383 = vmatprep.subr.mxu0 0.0
    %384 = vmatpush1.msra.mxu0 0.0
    %385 = vmatprep.subr.mxu0 0.0
    %386 = vmatpush1.msra.mxu0 0.0
    %387 = vmatprep.mubr.f32.mxu0 0.0
    %388 = vmatmul.mubr.f32.gmra.mrb[0].mxu0 %v284
    %v389 = vpop.f32.mrb[0].mxu0
    %v390 = vadd.f32 %v321, %v389
    %v391 = vpop.f32.mrb[0].mxu0
    %392 = vmatprep.mubr.f32.mxu0 0.0
    %393 = vmatmul.mubr.f32.gmra.mrb[0].mxu0 %v285
    %v394 = vpop.f32.mrb[0].mxu0
    %v395 = vadd.f32 %v321, %v394
    %v396 = vpop.f32.mrb[0].mxu0
    %397 = vmatprep.mubr.f32.mxu0 0.0
    %398 = vmatmul.mubr.f32.gmra.mrb[0].mxu0 %v286
    %v399 = vpop.f32.mrb[0].mxu0
    %v400 = vadd.f32 %v321, %v399
    %v401 = vpop.f32.mrb[0].mxu0
    %402 = vmatprep.mubr.f32.mxu0 0.0
    %403 = vmatmul.mubr.f32.gmra.mrb[0].mxu0 %v287
    %v404 = vpop.f32.mrb[0].mxu0
    %v405 = vadd.f32 %v321, %v404
    %v406 = vpop.f32.mrb[0].mxu0
    %407 = vmatprep.mubr.f32.mxu0 0.0
    %408 = vmatmul.mubr.f32.gmra.mrb[0].mxu0 %v288
    %v409 = vpop.f32.mrb[0].mxu0
    %v410 = vadd.f32 %v321, %v409
    %v411 = vpop.f32.mrb[0].mxu0
    %412 = vmatprep.mubr.f32.mxu0 0.0
    %413 = vmatmul.mubr.f32.gmra.mrb[0].mxu0 %v289
    %v414 = vpop.f32.mrb[0].mxu0
    %v415 = vadd.f32 %v321, %v414
    %v416 = vpop.f32.mrb[0].mxu0
    %417 = vmatprep.mubr.f32.mxu0 0.0
    %418 = vmatmul.mubr.f32.gmra.mrb[0].mxu0 %v290
    %v419 = vpop.f32.mrb[0].mxu0
    %v420 = vadd.f32 %v321, %v419
    %v421 = vpop.f32.mrb[0].mxu0
    %422 = vmatprep.mubr.f32.mxu0 0.0
    %423 = vmatmul.mubr.f32.gmra.mrb[0].mxu0 %v291
    %v424 = vpop.f32.mrb[0].mxu0
    %v425 = vadd.f32 %v321, %v424
    %v426 = vpop.f32.mrb[0].mxu0
    %427 = vmatprep.mubr.f32.mxu0 0.0
    %428 = vmatmul.mubr.f32.gmra.mrb[0].mxu0 %v292
    %v429 = vpop.f32.mrb[0].mxu0
    %v430 = vadd.f32 %v321, %v429
    %v431 = vpop.f32.mrb[0].mxu0
    %432 = vmatprep.mubr.f32.mxu0 0.0
    %433 = vmatmul.mubr.f32.gmra.mrb[0].mxu0 %v293
    %v434 = vpop.f32.mrb[0].mxu0
    %v435 = vadd.f32 %v321, %v434
    %v436 = vpop.f32.mrb[0].mxu0
    %437 = vmatprep.mubr.f32.mxu0 0.0
    %438 = vmatmul.mubr.f32.gmra.mrb[0].mxu0 %v294
    %v439 = vpop.f32.mrb[0].mxu0
    %v440 = vadd.f32 %v321, %v439
    %v441 = vpop.f32.mrb[0].mxu0
    %442 = vmatprep.mubr.f32.mxu0 0.0
    %443 = vmatmul.mubr.f32.gmra.mrb[0].mxu0 %v295
    %v444 = vpop.f32.mrb[0].mxu0
    %v445 = vadd.f32 %v321, %v444
    %v446 = vpop.f32.mrb[0].mxu0
    %447 = vmatprep.mubr.f32.mxu0 0.0
    %448 = vmatmul.mubr.f32.gmra.mrb[0].mxu0 %v296
    %v449 = vpop.f32.mrb[0].mxu0
    %v450 = vadd.f32 %v321, %v449
    %v451 = vpop.f32.mrb[0].mxu0
    %452 = vmatprep.mubr.f32.mxu0 0.0
    %453 = vmatmul.mubr.f32.gmra.mrb[0].mxu0 %v297
    %v454 = vpop.f32.mrb[0].mxu0
    %v455 = vadd.f32 %v321, %v454
    %v456 = vpop.f32.mrb[0].mxu0
    %457 = vmatprep.mubr.f32.mxu0 0.0
    %458 = vmatmul.mubr.f32.gmra.mrb[0].mxu0 %v298
    %v459 = vpop.f32.mrb[0].mxu0
    %v460 = vadd.f32 %v321, %v459
    %v461 = vpop.f32.mrb[0].mxu0
    %462 = vmatprep.mubr.f32.mxu0 0.0
    %463 = vmatmul.mubr.f32.gmra.mrb[0].mxu0 %v299
    %v464 = vpop.f32.mrb[0].mxu0
    %v465 = vadd.f32 %v321, %v464
    %v466 = vpop.f32.mrb[0].mxu0
    %467 = vdwg.mxu0
    %v468 = vsub.f32 0.0, %v390
    %v469 = vsub.f32 0.0, %v395
    %v470 = vsub.f32 0.0, %v400
    %v471 = vsub.f32 0.0, %v405
    %v472 = vsub.f32 0.0, %v410
    %v473 = vsub.f32 0.0, %v415
    %v474 = vsub.f32 0.0, %v420
    %v475 = vsub.f32 0.0, %v425
    %v476 = vsub.f32 0.0, %v430
    %v477 = vsub.f32 0.0, %v435
    %v478 = vsub.f32 0.0, %v440
    %v479 = vsub.f32 0.0, %v445
    %v480 = vsub.f32 0.0, %v450
    %v481 = vsub.f32 0.0, %v455
    %v482 = vsub.f32 0.0, %v460
    %v483 = vsub.f32 0.0, %v465
    %v484 = vmul.f32 %v468, 1.442695
    %v485 = vpow.pop %v484
    %v486 = vmul.f32 %v469, 1.442695
    %v487 = vpow.pop %v486
    %v488 = vmul.f32 %v470, 1.442695
    %v489 = vpow.pop %v488
    %v490 = vmul.f32 %v471, 1.442695
    %v491 = vpow.pop %v490
    %v492 = vmul.f32 %v472, 1.442695
    %v493 = vpow.pop %v492
    %v494 = vmul.f32 %v473, 1.442695
    %v495 = vpow.pop %v494
    %v496 = vmul.f32 %v474, 1.442695
    %v497 = vpow.pop %v496
    %v498 = vmul.f32 %v475, 1.442695
    %v499 = vpow.pop %v498
    %v500 = vmul.f32 %v476, 1.442695
    %v501 = vpow.pop %v500
    %v502 = vmul.f32 %v477, 1.442695
    %v503 = vpow.pop %v502
    %v504 = vmul.f32 %v478, 1.442695
    %v505 = vpow.pop %v504
    %v506 = vmul.f32 %v479, 1.442695
    %v507 = vpow.pop %v506
    %v508 = vmul.f32 %v480, 1.442695
    %v509 = vpow.pop %v508
    %v510 = vmul.f32 %v481, 1.442695
    %v511 = vpow.pop %v510
    %v512 = vmul.f32 %v482, 1.442695
    %v513 = vpow.pop %v512
    %v514 = vmul.f32 %v483, 1.442695
    %v515 = vpow.pop %v514
    %v516 = vadd.f32 %v485, 1.0
    %v517 = vadd.f32 %v487, 1.0
    %v518 = vadd.f32 %v489, 1.0
    %v519 = vadd.f32 %v491, 1.0
    %v520 = vadd.f32 %v493, 1.0
    %v521 = vadd.f32 %v495, 1.0
    %v522 = vadd.f32 %v497, 1.0
    %v523 = vadd.f32 %v499, 1.0
    %v524 = vadd.f32 %v501, 1.0
    %v525 = vadd.f32 %v503, 1.0
    %v526 = vadd.f32 %v505, 1.0
    %v527 = vadd.f32 %v507, 1.0
    %v528 = vadd.f32 %v509, 1.0
    %v529 = vadd.f32 %v511, 1.0
    %v530 = vadd.f32 %v513, 1.0
    %v531 = vadd.f32 %v515, 1.0
    %v532 = vrcp.pop %v516
    %v533 = vmul.f32 1.0, %v532
    %v534 = vrcp.pop %v517
    %v535 = vmul.f32 1.0, %v534
    %v536 = vrcp.pop %v518
    %v537 = vmul.f32 1.0, %v536
    %v538 = vrcp.pop %v519
    %v539 = vmul.f32 1.0, %v538
    %v540 = vrcp.pop %v520
    %v541 = vmul.f32 1.0, %v540
    %v542 = vrcp.pop %v521
    %v543 = vmul.f32 1.0, %v542
    %v544 = vrcp.pop %v522
    %v545 = vmul.f32 1.0, %v544
    %v546 = vrcp.pop %v523
    %v547 = vmul.f32 1.0, %v546
    %v548 = vrcp.pop %v524
    %v549 = vmul.f32 1.0, %v548
    %v550 = vrcp.pop %v525
    %v551 = vmul.f32 1.0, %v550
    %v552 = vrcp.pop %v526
    %v553 = vmul.f32 1.0, %v552
    %v554 = vrcp.pop %v527
    %v555 = vmul.f32 1.0, %v554
    %v556 = vrcp.pop %v528
    %v557 = vmul.f32 1.0, %v556
    %v558 = vrcp.pop %v529
    %v559 = vmul.f32 1.0, %v558
    %v560 = vrcp.pop %v530
    %v561 = vmul.f32 1.0, %v560
    %v562 = vrcp.pop %v531
    %v563 = vmul.f32 1.0, %v562
    %v564 = vmul.f32 %v390, %v533
    %v565 = vmul.f32 %v395, %v535
    %v566 = vmul.f32 %v400, %v537
    %v567 = vmul.f32 %v405, %v539
    %v568 = vmul.f32 %v410, %v541
    %v569 = vmul.f32 %v415, %v543
    %v570 = vmul.f32 %v420, %v545
    %v571 = vmul.f32 %v425, %v547
    %v572 = vmul.f32 %v430, %v549
    %v573 = vmul.f32 %v435, %v551
    %v574 = vmul.f32 %v440, %v553
    %v575 = vmul.f32 %v445, %v555
    %v576 = vmul.f32 %v450, %v557
    %v577 = vmul.f32 %v455, %v559
    %v578 = vmul.f32 %v460, %v561
    %v579 = vmul.f32 %v465, %v563
    %v580 = vld [vmem:[%s5] sm:$0xff]
    %v581 = vld [vmem:[%s5 + $0x8] sm:$0xff]
    %v582 = vld [vmem:[%s5 + $0x10] sm:$0xff]
    %v583 = vld [vmem:[%s5 + $0x18] sm:$0xff]
    %v584 = vld [vmem:[%s5 + $0x20] sm:$0xff]
    %v585 = vld [vmem:[%s5 + $0x28] sm:$0xff]
    %v586 = vld [vmem:[%s5 + $0x30] sm:$0xff]
    %v587 = vld [vmem:[%s5 + $0x38] sm:$0xff]
    %v588 = vld [vmem:[%s6] sm:$0x1]
    %v590 = vlaneseq
    %v591 = vshrl.u32 %v590, 7
    %v592 = vsub.s32 0, %v591
    %v593 = vrot.slane %v588, %v592
    %vm595 = vcmask 523264
    %v597 = vsel %vm595, %v564, 0
    %v600 = vsel %vm595, %v565, 0
    %v603 = vsel %vm595, %v566, 0
    %v606 = vsel %vm595, %v567, 0
    %v609 = vsel %vm595, %v568, 0
    %v612 = vsel %vm595, %v569, 0
    %v615 = vsel %vm595, %v570, 0
    %v618 = vsel %vm595, %v571, 0
    %v621 = vsel %vm595, %v572, 0
    %v624 = vsel %vm595, %v573, 0
    %v627 = vsel %vm595, %v574, 0
    %v630 = vsel %vm595, %v575, 0
    %v633 = vsel %vm595, %v576, 0
    %v636 = vsel %vm595, %v577, 0
    %v639 = vsel %vm595, %v578, 0
    %v642 = vsel %vm595, %v579, 0
    %644 = vmatprep.subr.mxu0 0.0
    %645 = vmatpush1.msra.mxu0 %v580
    %646 = vmatprep.subr.mxu0 0.0
    %647 = vmatpush1.msra.mxu0 %v581
    %648 = vmatprep.subr.mxu0 0.0
    %649 = vmatpush1.msra.mxu0 %v582
    %650 = vmatprep.subr.mxu0 0.0
    %651 = vmatpush1.msra.mxu0 %v583
    %652 = vmatprep.subr.mxu0 0.0
    %653 = vmatpush1.msra.mxu0 %v584
    %654 = vmatprep.subr.mxu0 0.0
    %655 = vmatpush1.msra.mxu0 %v585
    %656 = vmatprep.subr.mxu0 0.0
    %657 = vmatpush1.msra.mxu0 %v586
    %658 = vmatprep.subr.mxu0 0.0
    %659 = vmatpush1.msra.mxu0 %v587
    %660 = vmatprep.subr.mxu0 0.0
    %661 = vmatpush1.msra.mxu0 0.0
    %662 = vmatprep.subr.mxu0 0.0
    %663 = vmatpush1.msra.mxu0 0.0
    %664 = vmatprep.subr.mxu0 0.0
    %665 = vmatpush1.msra.mxu0 0.0
    %666 = vmatprep.subr.mxu0 0.0
    %667 = vmatpush1.msra.mxu0 0.0
    %668 = vmatprep.subr.mxu0 0.0
    %669 = vmatpush1.msra.mxu0 0.0
    %670 = vmatprep.subr.mxu0 0.0
    %671 = vmatpush1.msra.mxu0 0.0
    %672 = vmatprep.subr.mxu0 0.0
    %673 = vmatpush1.msra.mxu0 0.0
    %674 = vmatprep.subr.mxu0 0.0
    %675 = vmatpush1.msra.mxu0 0.0
    %676 = vmatprep.subr.mxu0 0.0
    %677 = vmatpush1.msra.mxu0 0.0
    %678 = vmatprep.subr.mxu0 0.0
    %679 = vmatpush1.msra.mxu0 0.0
    %680 = vmatprep.subr.mxu0 0.0
    %681 = vmatpush1.msra.mxu0 0.0
    %682 = vmatprep.subr.mxu0 0.0
    %683 = vmatpush1.msra.mxu0 0.0
    %684 = vmatprep.subr.mxu0 0.0
    %685 = vmatpush1.msra.mxu0 0.0
    %686 = vmatprep.subr.mxu0 0.0
    %687 = vmatpush1.msra.mxu0 0.0
    %688 = vmatprep.subr.mxu0 0.0
    %689 = vmatpush1.msra.mxu0 0.0
    %690 = vmatprep.subr.mxu0 0.0
    %691 = vmatpush1.msra.mxu0 0.0
    %692 = vmatprep.subr.mxu0 0.0
    %693 = vmatpush1.msra.mxu0 0.0
    %694 = vmatprep.subr.mxu0 0.0
    %695 = vmatpush1.msra.mxu0 0.0
    %696 = vmatprep.subr.mxu0 0.0
    %697 = vmatpush1.msra.mxu0 0.0
    %698 = vmatprep.subr.mxu0 0.0
    %699 = vmatpush1.msra.mxu0 0.0
    %700 = vmatprep.subr.mxu0 0.0
    %701 = vmatpush1.msra.mxu0 0.0
    %702 = vmatprep.subr.mxu0 0.0
    %703 = vmatpush1.msra.mxu0 0.0
    %704 = vmatprep.subr.mxu0 0.0
    %705 = vmatpush1.msra.mxu0 0.0
    %706 = vmatprep.subr.mxu0 0.0
    %707 = vmatpush1.msra.mxu0 0.0
    %708 = vmatprep.mubr.f32.mxu0 0.0
    %709 = vmatmul.mubr.f32.gmra.mrb[0].mxu0 %v597
    %v710 = vpop.f32.mrb[0].mxu0
    %v711 = vadd.f32 %v593, %v710
    %v712 = vpop.f32.mrb[0].mxu0
    %713 = vmatprep.mubr.f32.mxu0 0.0
    %714 = vmatmul.mubr.f32.gmra.mrb[0].mxu0 %v600
    %v715 = vpop.f32.mrb[0].mxu0
    %v716 = vadd.f32 %v593, %v715
    %v717 = vpop.f32.mrb[0].mxu0
    %718 = vmatprep.mubr.f32.mxu0 0.0
    %719 = vmatmul.mubr.f32.gmra.mrb[0].mxu0 %v603
    %v720 = vpop.f32.mrb[0].mxu0
    %v721 = vadd.f32 %v593, %v720
    %v722 = vpop.f32.mrb[0].mxu0
    %723 = vmatprep.mubr.f32.mxu0 0.0
    %724 = vmatmul.mubr.f32.gmra.mrb[0].mxu0 %v606
    %v725 = vpop.f32.mrb[0].mxu0
    %v726 = vadd.f32 %v593, %v725
    %v727 = vpop.f32.mrb[0].mxu0
    %728 = vmatprep.mubr.f32.mxu0 0.0
    %729 = vmatmul.mubr.f32.gmra.mrb[0].mxu0 %v609
    %v730 = vpop.f32.mrb[0].mxu0
    %v731 = vadd.f32 %v593, %v730
    %v732 = vpop.f32.mrb[0].mxu0
    %733 = vmatprep.mubr.f32.mxu0 0.0
    %734 = vmatmul.mubr.f32.gmra.mrb[0].mxu0 %v612
    %v735 = vpop.f32.mrb[0].mxu0
    %v736 = vadd.f32 %v593, %v735
    %v737 = vpop.f32.mrb[0].mxu0
    %738 = vmatprep.mubr.f32.mxu0 0.0
    %739 = vmatmul.mubr.f32.gmra.mrb[0].mxu0 %v615
    %v740 = vpop.f32.mrb[0].mxu0
    %v741 = vadd.f32 %v593, %v740
    %v742 = vpop.f32.mrb[0].mxu0
    %743 = vmatprep.mubr.f32.mxu0 0.0
    %744 = vmatmul.mubr.f32.gmra.mrb[0].mxu0 %v618
    %v745 = vpop.f32.mrb[0].mxu0
    %v746 = vadd.f32 %v593, %v745
    %v747 = vpop.f32.mrb[0].mxu0
    %748 = vmatprep.mubr.f32.mxu0 0.0
    %749 = vmatmul.mubr.f32.gmra.mrb[0].mxu0 %v621
    %v750 = vpop.f32.mrb[0].mxu0
    %v751 = vadd.f32 %v593, %v750
    %v752 = vpop.f32.mrb[0].mxu0
    %753 = vmatprep.mubr.f32.mxu0 0.0
    %754 = vmatmul.mubr.f32.gmra.mrb[0].mxu0 %v624
    %v755 = vpop.f32.mrb[0].mxu0
    %v756 = vadd.f32 %v593, %v755
    %v757 = vpop.f32.mrb[0].mxu0
    %758 = vmatprep.mubr.f32.mxu0 0.0
    %759 = vmatmul.mubr.f32.gmra.mrb[0].mxu0 %v627
    %v760 = vpop.f32.mrb[0].mxu0
    %v761 = vadd.f32 %v593, %v760
    %v762 = vpop.f32.mrb[0].mxu0
    %763 = vmatprep.mubr.f32.mxu0 0.0
    %764 = vmatmul.mubr.f32.gmra.mrb[0].mxu0 %v630
    %v765 = vpop.f32.mrb[0].mxu0
    %v766 = vadd.f32 %v593, %v765
    %v767 = vpop.f32.mrb[0].mxu0
    %768 = vmatprep.mubr.f32.mxu0 0.0
    %769 = vmatmul.mubr.f32.gmra.mrb[0].mxu0 %v633
    %v770 = vpop.f32.mrb[0].mxu0
    %v771 = vadd.f32 %v593, %v770
    %v772 = vpop.f32.mrb[0].mxu0
    %773 = vmatprep.mubr.f32.mxu0 0.0
    %774 = vmatmul.mubr.f32.gmra.mrb[0].mxu0 %v636
    %v775 = vpop.f32.mrb[0].mxu0
    %v776 = vadd.f32 %v593, %v775
    %v777 = vpop.f32.mrb[0].mxu0
    %778 = vmatprep.mubr.f32.mxu0 0.0
    %779 = vmatmul.mubr.f32.gmra.mrb[0].mxu0 %v639
    %v780 = vpop.f32.mrb[0].mxu0
    %v781 = vadd.f32 %v593, %v780
    %v782 = vpop.f32.mrb[0].mxu0
    %783 = vmatprep.mubr.f32.mxu0 0.0
    %784 = vmatmul.mubr.f32.gmra.mrb[0].mxu0 %v642
    %v785 = vpop.f32.mrb[0].mxu0
    %v786 = vadd.f32 %v593, %v785
    %v787 = vpop.f32.mrb[0].mxu0
    %788 = vdwg.mxu0
    %v789 = vadd.f32 %v27, %v711
    %v790 = vadd.f32 %v28, %v716
    %v791 = vadd.f32 %v29, %v721
    %v792 = vadd.f32 %v30, %v726
    %v793 = vadd.f32 %v31, %v731
    %v794 = vadd.f32 %v32, %v736
    %v795 = vadd.f32 %v33, %v741
    %v796 = vadd.f32 %v34, %v746
    %v797 = vadd.f32 %v35, %v751
    %v798 = vadd.f32 %v36, %v756
    %v799 = vadd.f32 %v37, %v761
    %v800 = vadd.f32 %v38, %v766
    %v801 = vadd.f32 %v39, %v771
    %v802 = vadd.f32 %v40, %v776
    %v803 = vadd.f32 %v41, %v781
    %v804 = vadd.f32 %v42, %v786
    %805 = vst [vmem:[#allocation2] sm:$0xff] %v789
    %806 = vst [vmem:[#allocation2 + $0x8] sm:$0xff] %v790
    %807 = vst [vmem:[#allocation2 + $0x10] sm:$0xff] %v791
    %808 = vst [vmem:[#allocation2 + $0x18] sm:$0xff] %v792
    %809 = vst [vmem:[#allocation2 + $0x20] sm:$0xff] %v793
    %810 = vst [vmem:[#allocation2 + $0x28] sm:$0xff] %v794
    %811 = vst [vmem:[#allocation2 + $0x30] sm:$0xff] %v795
    %812 = vst [vmem:[#allocation2 + $0x38] sm:$0xff] %v796
    %813 = vst [vmem:[#allocation2 + $0x40] sm:$0xff] %v797
    %814 = vst [vmem:[#allocation2 + $0x48] sm:$0xff] %v798
    %815 = vst [vmem:[#allocation2 + $0x50] sm:$0xff] %v799
    %816 = vst [vmem:[#allocation2 + $0x58] sm:$0xff] %v800
    %817 = vst [vmem:[#allocation2 + $0x60] sm:$0xff] %v801
    %818 = vst [vmem:[#allocation2 + $0x68] sm:$0xff] %v802
    %819 = vst [vmem:[#allocation2 + $0x70] sm:$0xff] %v803
    %820 = vst [vmem:[#allocation2 + $0x78] sm:$0xff] %v804
    // Predicated region
    $region30: #{transformer.7} parent=1 // pred_check
      _
    $region31: #{transformer.7} parent=1 // pred_check_branch
      %822 = sbr.rel (0) target = $region33
    $region32: #{transformer.7} parent=1 // pred_region
      %s824 = ssub.s32 2048, 2048
      %825 = vsyncadd [#allocation3], %s824
      %s826 = sshll.u32 [#allocation2], 4
      %s827 = int_to_ptr.vmem [resolvable:$true] %s826
      %832 = dma.vmem_to_hbm [thread:$0]  %s827, 2048, %s7, [#allocation3], 128, 128, 8
    $region33: #{transformer.7} parent=1 // pred_fallthru
      _
    // Predicated region
    $region34: #{transformer.7} parent=1 // pred_check
      _
    $region35: #{transformer.7} parent=1 // pred_check_branch
      %834 = sbr.rel (0) target = $region37
    $region36: #{transformer.7} parent=1 // pred_region
      %835 = dma.done [#allocation3], 2048
    $region37: #{transformer.7} parent=1 // pred_fallthru
      _
    %836 = vsyncpa [#allocation3], 1

// kernel: transformer.4
$region0: #{transformer.4}
  #allocation0 [shape = 'u32[]', space=smem, size = 0x4, offset = 0x4, fixed_abs, tag = 'smem constant byte address 0x4 - core index']
  #allocation1 [shape = 'u32[144,128]{1,0:T(1,128)}', space=vmem, size = 0x12000, scoped, tag = 'internal scratch']
  %s0 = inlined_call_operand.vmem [shape: f32[8,16,128], index: 0, kind: input, shape index: {}]
  %s1 = inlined_call_operand.vmem [shape: f32[1,128], index: 1, kind: input, shape index: {}]
  %s2 = inlined_call_operand.vmem [shape: f32[1,128], index: 2, kind: input, shape index: {}]
  %s3 = inlined_call_operand.vmem [shape: f32[128,32], index: 3, kind: input, shape index: {}]
  %s4 = inlined_call_operand.vmem [shape: f32[128,32], index: 4, kind: input, shape index: {}]
  %s5 = inlined_call_operand.vmem [shape: f32[128,32], index: 5, kind: input, shape index: {}]
  %s6 = inlined_call_operand.vmem [shape: f32[32,128], index: 6, kind: input, shape index: {}]
  %s7 = inlined_call_operand.vmem [shape: f32[1,128], index: 7, kind: input, shape index: {}]
  %s8 = inlined_call_operand.vmem [shape: f32[8,16,128], index: 8, kind: output, shape index: {}]
  %s9 = sld [smem:[#allocation0]]
  $region65: #{transformer.4} parent=0
    _
  %s11 = ssub.s32 1, %s9
  %s12 = scalar_select 0, %s11, %s9
  loop: start=0, step=1, limit=10
  $region2: #{transformer.4} parent=0 // loop_pre_header
    _
  $region3: #{transformer.4} parent=0 // loop_header
    %s14 = sphi 0, %s18
    %p15 = scmp.ge.s32.totalorder %s14, 10
    %s24 = sphi 0, %s26
    %s27 = sphi 0, %s24
    %s28 = sphi 0, %s27
    %s44 = sphi 0, %s28
    %s48 = sphi 0, %s48
    %s50 = sphi 0, %s48
    %s51 = sphi 0, %s50
    %s65 = sphi 0, %s51
    %s69 = sphi 0, %s69
    %s71 = sphi 0, %s69
    %s72 = sphi 0, %s71
    %s86 = sphi 0, %s72
    %s90 = sphi 0, %s90
    %s92 = sphi 0, %s90
    %s93 = sphi 0, %s92
    %s107 = sphi 0, %s93
    %s111 = sphi 0, %s111
    %s113 = sphi 0, %s111
    %s114 = sphi 0, %s113
    %s128 = sphi 0, %s114
    %s132 = sphi 0, %s132
    %s134 = sphi 0, %s132
    %s135 = sphi 0, %s134
    %s149 = sphi 0, %s135
    %s153 = sphi 0, %s153
    %s155 = sphi 0, %s153
    %s156 = sphi 0, %s155
    %s170 = sphi 0, %s156
    %s174 = sphi 0, %s174
    %s176 = sphi 0, %s174
    %s177 = sphi 0, %s176
    %s191 = sphi 0, %s177
    %s197 = sphi 0, %s199
    %s200 = sphi 0, %s197
    %s201 = sphi 0, %s200
    %s217 = sphi 0, %s201
  $region4: #{transformer.4} parent=0 // loop_header_branch
    %17 = sbr.rel (%p15) target = $region8
  $region5: #{transformer.4} parent=0 // loop_body
    %s19 = ssub.s32 %s14, 1
    %s20 = ssub.s32 %s14, 2
    %s21 = sadd.s32 %s14, 1
    %s22 = ssub.s32 %s14, %s21
    %p23 = scmp.eq.s32.totalorder %s22, 0
    %s25 = sadd.s32 %s24, 1
    %s26 = scalar_select %p23, %s24, %s25
    %p29 = pneg %p23
    %p30 = scmp.eq.s32.totalorder %s14, 7
    %p31 = por %p29, %p30
    %p32 = scmp.ne.s32.totalorder %s24, %s27
    %p33 = scmp.eq.s32.totalorder %s14, 0
    %p34 = por %p32, %p33
    %p35 = scmp.ne.s32.totalorder %s24, %s27
    %p36 = scmp.eq.s32.totalorder %s19, 7
    %p37 = por %p35, %p36
    %p38 = scmp.ne.s32.totalorder %s27, %s28
    %p39 = scmp.eq.s32.totalorder %s19, 0
    %p40 = por %p38, %p39
    %p41 = scmp.ne.s32.totalorder %s27, %s28
    %p42 = scmp.eq.s32.totalorder %s20, 7
    %p43 = por %p41, %p42
    %p45 = scmp.ne.s32.totalorder %s28, %s44
    %p46 = scmp.eq.s32.totalorder %s20, 0
    %p47 = por %p45, %p46
    %s49 = sadd.s32 %s48, 1
    %p52 = scmp.eq.s32.totalorder %s14, 7
    %p53 = scmp.ne.s32.totalorder %s48, %s50
    %p54 = scmp.eq.s32.totalorder %s14, 0
    %p55 = por %p53, %p54
    %p56 = scmp.ne.s32.totalorder %s48, %s50
    %p57 = scmp.eq.s32.totalorder %s19, 7
    %p58 = por %p56, %p57
    %p59 = scmp.ne.s32.totalorder %s50, %s51
    %p60 = scmp.eq.s32.totalorder %s19, 0
    %p61 = por %p59, %p60
    %p62 = scmp.ne.s32.totalorder %s50, %s51
    %p63 = scmp.eq.s32.totalorder %s20, 7
    %p64 = por %p62, %p63
    %p66 = scmp.ne.s32.totalorder %s51, %s65
    %p67 = scmp.eq.s32.totalorder %s20, 0
    %p68 = por %p66, %p67
    %s70 = sadd.s32 %s69, 1
    %p73 = scmp.eq.s32.totalorder %s14, 7
    %p74 = scmp.ne.s32.totalorder %s69, %s71
    %p75 = scmp.eq.s32.totalorder %s14, 0
    %p76 = por %p74, %p75
    %p77 = scmp.ne.s32.totalorder %s69, %s71
    %p78 = scmp.eq.s32.totalorder %s19, 7
    %p79 = por %p77, %p78
    %p80 = scmp.ne.s32.totalorder %s71, %s72
    %p81 = scmp.eq.s32.totalorder %s19, 0
    %p82 = por %p80, %p81
    %p83 = scmp.ne.s32.totalorder %s71, %s72
    %p84 = scmp.eq.s32.totalorder %s20, 7
    %p85 = por %p83, %p84
    %p87 = scmp.ne.s32.totalorder %s72, %s86
    %p88 = scmp.eq.s32.totalorder %s20, 0
    %p89 = por %p87, %p88
    %s91 = sadd.s32 %s90, 1
    %p94 = scmp.eq.s32.totalorder %s14, 7
    %p95 = scmp.ne.s32.totalorder %s90, %s92
    %p96 = scmp.eq.s32.totalorder %s14, 0
    %p97 = por %p95, %p96
    %p98 = scmp.ne.s32.totalorder %s90, %s92
    %p99 = scmp.eq.s32.totalorder %s19, 7
    %p100 = por %p98, %p99
    %p101 = scmp.ne.s32.totalorder %s92, %s93
    %p102 = scmp.eq.s32.totalorder %s19, 0
    %p103 = por %p101, %p102
    %p104 = scmp.ne.s32.totalorder %s92, %s93
    %p105 = scmp.eq.s32.totalorder %s20, 7
    %p106 = por %p104, %p105
    %p108 = scmp.ne.s32.totalorder %s93, %s107
    %p109 = scmp.eq.s32.totalorder %s20, 0
    %p110 = por %p108, %p109
    %s112 = sadd.s32 %s111, 1
    %p115 = scmp.eq.s32.totalorder %s14, 7
    %p116 = scmp.ne.s32.totalorder %s111, %s113
    %p117 = scmp.eq.s32.totalorder %s14, 0
    %p118 = por %p116, %p117
    %p119 = scmp.ne.s32.totalorder %s111, %s113
    %p120 = scmp.eq.s32.totalorder %s19, 7
    %p121 = por %p119, %p120
    %p122 = scmp.ne.s32.totalorder %s113, %s114
    %p123 = scmp.eq.s32.totalorder %s19, 0
    %p124 = por %p122, %p123
    %p125 = scmp.ne.s32.totalorder %s113, %s114
    %p126 = scmp.eq.s32.totalorder %s20, 7
    %p127 = por %p125, %p126
    %p129 = scmp.ne.s32.totalorder %s114, %s128
    %p130 = scmp.eq.s32.totalorder %s20, 0
    %p131 = por %p129, %p130
    %s133 = sadd.s32 %s132, 1
    %p136 = scmp.eq.s32.totalorder %s14, 7
    %p137 = scmp.ne.s32.totalorder %s132, %s134
    %p138 = scmp.eq.s32.totalorder %s14, 0
    %p139 = por %p137, %p138
    %p140 = scmp.ne.s32.totalorder %s132, %s134
    %p141 = scmp.eq.s32.totalorder %s19, 7
    %p142 = por %p140, %p141
    %p143 = scmp.ne.s32.totalorder %s134, %s135
    %p144 = scmp.eq.s32.totalorder %s19, 0
    %p145 = por %p143, %p144
    %p146 = scmp.ne.s32.totalorder %s134, %s135
    %p147 = scmp.eq.s32.totalorder %s20, 7
    %p148 = por %p146, %p147
    %p150 = scmp.ne.s32.totalorder %s135, %s149
    %p151 = scmp.eq.s32.totalorder %s20, 0
    %p152 = por %p150, %p151
    %s154 = sadd.s32 %s153, 1
    %p157 = scmp.eq.s32.totalorder %s14, 7
    %p158 = scmp.ne.s32.totalorder %s153, %s155
    %p159 = scmp.eq.s32.totalorder %s14, 0
    %p160 = por %p158, %p159
    %p161 = scmp.ne.s32.totalorder %s153, %s155
    %p162 = scmp.eq.s32.totalorder %s19, 7
    %p163 = por %p161, %p162
    %p164 = scmp.ne.s32.totalorder %s155, %s156
    %p165 = scmp.eq.s32.totalorder %s19, 0
    %p166 = por %p164, %p165
    %p167 = scmp.ne.s32.totalorder %s155, %s156
    %p168 = scmp.eq.s32.totalorder %s20, 7
    %p169 = por %p167, %p168
    %p171 = scmp.ne.s32.totalorder %s156, %s170
    %p172 = scmp.eq.s32.totalorder %s20, 0
    %p173 = por %p171, %p172
    %s175 = sadd.s32 %s174, 1
    %p178 = scmp.eq.s32.totalorder %s14, 7
    %p179 = scmp.ne.s32.totalorder %s174, %s176
    %p180 = scmp.eq.s32.totalorder %s14, 0
    %p181 = por %p179, %p180
    %p182 = scmp.ne.s32.totalorder %s174, %s176
    %p183 = scmp.eq.s32.totalorder %s19, 7
    %p184 = por %p182, %p183
    %p185 = scmp.ne.s32.totalorder %s176, %s177
    %p186 = scmp.eq.s32.totalorder %s19, 0
    %p187 = por %p185, %p186
    %p188 = scmp.ne.s32.totalorder %s176, %s177
    %p189 = scmp.eq.s32.totalorder %s20, 7
    %p190 = por %p188, %p189
    %p192 = scmp.ne.s32.totalorder %s177, %s191
    %p193 = scmp.eq.s32.totalorder %s20, 0
    %p194 = por %p192, %p193
    %s195 = ssub.s32 %s14, %s21
    %p196 = scmp.eq.s32.totalorder %s195, 0
    %s198 = sadd.s32 %s197, 1
    %s199 = scalar_select %p196, %s197, %s198
    %p202 = pneg %p196
    %p203 = scmp.eq.s32.totalorder %s14, 7
    %p204 = por %p202, %p203
    %p205 = scmp.ne.s32.totalorder %s197, %s200
    %p206 = scmp.eq.s32.totalorder %s14, 0
    %p207 = por %p205, %p206
    %p208 = scmp.ne.s32.totalorder %s197, %s200
    %p209 = scmp.eq.s32.totalorder %s19, 7
    %p210 = por %p208, %p209
    %p211 = scmp.ne.s32.totalorder %s200, %s201
    %p212 = scmp.eq.s32.totalorder %s19, 0
    %p213 = por %p211, %p212
    %p214 = scmp.ne.s32.totalorder %s200, %s201
    %p215 = scmp.eq.s32.totalorder %s20, 7
    %p216 = por %p214, %p215
    %p218 = scmp.ne.s32.totalorder %s201, %s217
    %p219 = scmp.eq.s32.totalorder %s20, 0
    %p220 = por %p218, %p219
    %p221 = scmp.le.s32.totalorder 1, %s14
    %p222 = scmp.lt.s32.totalorder %s14, 9
    %p223 = pnand %p221, %p222
    %p224 = pneg %p223
    // Predicated region
    $region9: #{transformer.4} parent=5 // pred_check
      _
    $region10: #{transformer.4} parent=5 // pred_check_branch
      %226 = sbr.rel (%p223) target = $region12
    $region11: #{transformer.4} parent=5 // pred_region
      %s227 = ssub.s32 %s14, 1
      // Predicated region
      $region13: #{transformer.4} parent=11 // pred_check
        %p228 = pneg %p61
      $region14: #{transformer.4} parent=11 // pred_check_branch
        %230 = sbr.rel (%p228) target = $region16
      $region15: #{transformer.4} parent=11 // pred_region
        _
      $region16: #{transformer.4} parent=11 // pred_fallthru
        _
      // Predicated region
      $region17: #{transformer.4} parent=11 // pred_check
        %p231 = pneg %p82
      $region18: #{transformer.4} parent=11 // pred_check_branch
        %233 = sbr.rel (%p231) target = $region20
      $region19: #{transformer.4} parent=11 // pred_region
        _
      $region20: #{transformer.4} parent=11 // pred_fallthru
        _
      // Predicated region
      $region21: #{transformer.4} parent=11 // pred_check
        %p234 = pneg %p103
      $region22: #{transformer.4} parent=11 // pred_check_branch
        %236 = sbr.rel (%p234) target = $region24
      $region23: #{transformer.4} parent=11 // pred_region
        _
      $region24: #{transformer.4} parent=11 // pred_fallthru
        _
      // Predicated region
      $region25: #{transformer.4} parent=11 // pred_check
        %p237 = pneg %p124
      $region26: #{transformer.4} parent=11 // pred_check_branch
        %239 = sbr.rel (%p237) target = $region28
      $region27: #{transformer.4} parent=11 // pred_region
        _
      $region28: #{transformer.4} parent=11 // pred_fallthru
        _
      // Predicated region
      $region29: #{transformer.4} parent=11 // pred_check
        %p240 = pneg %p145
      $region30: #{transformer.4} parent=11 // pred_check_branch
        %242 = sbr.rel (%p240) target = $region32
      $region31: #{transformer.4} parent=11 // pred_region
        _
      $region32: #{transformer.4} parent=11 // pred_fallthru
        _
      // Predicated region
      $region33: #{transformer.4} parent=11 // pred_check
        %p243 = pneg %p166
      $region34: #{transformer.4} parent=11 // pred_check_branch
        %245 = sbr.rel (%p243) target = $region36
      $region35: #{transformer.4} parent=11 // pred_region
        _
      $region36: #{transformer.4} parent=11 // pred_fallthru
        _
      // Predicated region
      $region37: #{transformer.4} parent=11 // pred_check
        %p246 = pneg %p187
      $region38: #{transformer.4} parent=11 // pred_check_branch
        %248 = sbr.rel (%p246) target = $region40
      $region39: #{transformer.4} parent=11 // pred_region
        _
      $region40: #{transformer.4} parent=11 // pred_fallthru
        _
    $region12: #{transformer.4} parent=5 // pred_fallthru
      _
    %p249 = scmp.lt.s32.totalorder %s14, 8
    // Predicated region
    $region41: #{transformer.4} parent=5 // pred_check
      %p250 = pneg %p249
    $region42: #{transformer.4} parent=5 // pred_check_branch
      %252 = sbr.rel (%p250) target = $region44
    $region43: #{transformer.4} parent=5 // pred_region
      // Predicated region
      $region45: #{transformer.4} parent=43 // pred_check
        %p253 = pneg %p34
      $region46: #{transformer.4} parent=43 // pred_check_branch
        %255 = sbr.rel (%p253) target = $region48
      $region47: #{transformer.4} parent=43 // pred_region
        %p256 = scmp.lt.s32.totalorder %s14, 7
        %s257 = scalar_select %p256, %s14, 7
        %s258 = smul.addr %s257, 2
        %s259 = smul.addr %s258, 8
        %s260 = scalar_lea.vmem %s0, %s259
      $region48: #{transformer.4} parent=43 // pred_fallthru
        _
    $region44: #{transformer.4} parent=5 // pred_fallthru
      _
    %p261 = scmp.le.s32.totalorder 1, %s14
    %p262 = scmp.lt.s32.totalorder %s14, 9
    %p263 = pnand %p261, %p262
    %p264 = pneg %p263
    // Predicated region
    $region49: #{transformer.4} parent=5 // pred_check
      _
    $region50: #{transformer.4} parent=5 // pred_check_branch
      %266 = sbr.rel (%p263) target = $region52
    $region51: #{transformer.4} parent=5 // pred_region
      %s267 = ssub.s32 %s14, 1
      %p268 = scmp.lt.s32.totalorder %s19, 7
      %s269 = scalar_select %p268, %s19, 7
      %s270 = smul.addr %s269, 2
      %s271 = smul.addr %s270, 8
      %s272 = scalar_lea.vmem %s0, %s271
      %p273 = pneg %p40
      %p274 = pneg %p37
      %p275 = pneg %p61
      %p276 = pneg %p58
      %p277 = pneg %p82
      %p278 = pneg %p79
      %p279 = pneg %p103
      %p280 = pneg %p100
      %p281 = pneg %p124
      %p282 = pneg %p121
      %p283 = pneg %p145
      %p284 = pneg %p142
      %p285 = pneg %p166
      %p286 = pneg %p163
      %p287 = pneg %p187
      %p288 = pneg %p184
      %p289 = pneg %p213
      %p290 = pneg %p210
      %p291 = scmp.lt.s32.totalorder %s19, 7
      %s292 = scalar_select %p291, %s19, 7
      %s293 = smul.addr %s292, 2
      %s294 = smul.addr %s293, 8
      %s295 = scalar_lea.vmem %s8, %s294
      %p296 = scmp.lt.s32.totalorder %s19, 7
      %s297 = scalar_select %p296, %s19, 7
      %s298 = smul.addr %s297, 2
      %s299 = smul.addr %s298, 8
      %s300 = scalar_lea.vmem %s0, %s299
      %p301 = scmp.lt.s32.totalorder %s19, 7
      %s302 = scalar_select %p301, %s19, 7
      %s303 = smul.addr %s302, 2
      %s304 = smul.addr %s303, 8
      %s305 = scalar_lea.vmem %s8, %s304
      %v306 = vld [vmem:[%s300] sm:$0xff]
      %v307 = vld [vmem:[%s300 + $0x8] sm:$0xff]
      %v308 = vlaneseq
      %v309 = vand.u32 %v308, 127
      %vm310 = vcmp.lt.s32.totalorder %v309, 32
      %v311 = vsel %vm310, %v306, 0.0
      %v312 = vsel %vm310, %v307, 0.0
      %313 = vadd.xlane.f32.xlu0 %v311
      %v314 = vpop.xlane.xlu0 %313
      %315 = vadd.xlane.f32.xlu0 %v312
      %v316 = vpop.xlane.xlu0 %315
      %v317 = vmul.f32 %v314, 0.03125
      %v318 = vmul.f32 %v316, 0.03125
      %v319 = vsub.f32 %v306, %v317
      %v320 = vsub.f32 %v307, %v318
      %v321 = vsel %vm310, %v319, 0.0
      %v322 = vsel %vm310, %v320, 0.0
      %v323 = vmul.f32 %v321, %v321
      %v324 = vmul.f32 %v322, %v322
      %325 = vadd.xlane.f32.xlu0 %v323
      %v326 = vpop.xlane.xlu0 %325
      %327 = vadd.xlane.f32.xlu0 %v324
      %v328 = vpop.xlane.xlu0 %327
      %v329 = vmul.f32 %v326, 0.03125
      %v330 = vmul.f32 %v328, 0.03125
      %v331 = vadd.f32 %v329, 1e-05
      %v332 = vadd.f32 %v330, 1e-05
      %v333 = vrsqrt.pop %v331
      %v334 = vrsqrt.pop %v332
      %v335 = vmul.f32 %v319, %v333
      %v336 = vmul.f32 %v320, %v334
      %v337 = vld [vmem:[%s1] sm:$0x1]
      %v339 = vlaneseq
      %v340 = vshrl.u32 %v339, 7
      %v341 = vsub.s32 0, %v340
      %v342 = vrot.slane %v337, %v341
      %v344 = vmul.f32 %v335, %v342
      %v345 = vmul.f32 %v336, %v342
      %v346 = vld [vmem:[%s2] sm:$0x1]
      %v348 = vlaneseq
      %v349 = vshrl.u32 %v348, 7
      %v350 = vsub.s32 0, %v349
      %v351 = vrot.slane %v346, %v350
      %v353 = vadd.f32 %v344, %v351
      %v354 = vadd.f32 %v345, %v351
      %v355 = vld [vmem:[%s3] sm:$0xff]
      %v356 = vld [vmem:[%s3 + $0x8] sm:$0xff]
      %v357 = vld [vmem:[%s3 + $0x10] sm:$0xff]
      %v358 = vld [vmem:[%s3 + $0x18] sm:$0xff]
      %v359 = vld [vmem:[%s3 + $0x20] sm:$0xff]
      %v360 = vld [vmem:[%s3 + $0x28] sm:$0xff]
      %v361 = vld [vmem:[%s3 + $0x30] sm:$0xff]
      %v362 = vld [vmem:[%s3 + $0x38] sm:$0xff]
      %v363 = vld [vmem:[%s3 + $0x40] sm:$0xff]
      %v364 = vld [vmem:[%s3 + $0x48] sm:$0xff]
      %v365 = vld [vmem:[%s3 + $0x50] sm:$0xff]
      %v366 = vld [vmem:[%s3 + $0x58] sm:$0xff]
      %v367 = vld [vmem:[%s3 + $0x60] sm:$0xff]
      %v368 = vld [vmem:[%s3 + $0x68] sm:$0xff]
      %v369 = vld [vmem:[%s3 + $0x70] sm:$0xff]
      %v370 = vld [vmem:[%s3 + $0x78] sm:$0xff]
      %371 = vmatprep.subr.mxu0 0.0
      %372 = vmatpush1.msra.mxu0 %v355
      %373 = vmatprep.subr.mxu0 0.0
      %374 = vmatpush1.msra.mxu0 %v356
      %375 = vmatprep.subr.mxu0 0.0
      %376 = vmatpush1.msra.mxu0 %v357
      %377 = vmatprep.subr.mxu0 0.0
      %378 = vmatpush1.msra.mxu0 %v358
      %379 = vmatprep.subr.mxu0 0.0
      %380 = vmatpush1.msra.mxu0 %v359
      %381 = vmatprep.subr.mxu0 0.0
      %382 = vmatpush1.msra.mxu0 %v360
      %383 = vmatprep.subr.mxu0 0.0
      %384 = vmatpush1.msra.mxu0 %v361
      %385 = vmatprep.subr.mxu0 0.0
      %386 = vmatpush1.msra.mxu0 %v362
      %387 = vmatprep.subr.mxu0 0.0
      %388 = vmatpush1.msra.mxu0 %v363
      %389 = vmatprep.subr.mxu0 0.0
      %390 = vmatpush1.msra.mxu0 %v364
      %391 = vmatprep.subr.mxu0 0.0
      %392 = vmatpush1.msra.mxu0 %v365
      %393 = vmatprep.subr.mxu0 0.0
      %394 = vmatpush1.msra.mxu0 %v366
      %395 = vmatprep.subr.mxu0 0.0
      %396 = vmatpush1.msra.mxu0 %v367
      %397 = vmatprep.subr.mxu0 0.0
      %398 = vmatpush1.msra.mxu0 %v368
      %399 = vmatprep.subr.mxu0 0.0
      %400 = vmatpush1.msra.mxu0 %v369
      %401 = vmatprep.subr.mxu0 0.0
      %402 = vmatpush1.msra.mxu0 %v370
      %403 = vmatprep.subr.mxu0 0.0
      %404 = vmatpush1.msra.mxu0 0.0
      %405 = vmatprep.subr.mxu0 0.0
      %406 = vmatpush1.msra.mxu0 0.0
      %407 = vmatprep.subr.mxu0 0.0
      %408 = vmatpush1.msra.mxu0 0.0
      %409 = vmatprep.subr.mxu0 0.0
      %410 = vmatpush1.msra.mxu0 0.0
      %411 = vmatprep.subr.mxu0 0.0
      %412 = vmatpush1.msra.mxu0 0.0
      %413 = vmatprep.subr.mxu0 0.0
      %414 = vmatpush1.msra.mxu0 0.0
      %415 = vmatprep.subr.mxu0 0.0
      %416 = vmatpush1.msra.mxu0 0.0
      %417 = vmatprep.subr.mxu0 0.0
      %418 = vmatpush1.msra.mxu0 0.0
      %419 = vmatprep.subr.mxu0 0.0
      %420 = vmatpush1.msra.mxu0 0.0
      %421 = vmatprep.subr.mxu0 0.0
      %422 = vmatpush1.msra.mxu0 0.0
      %423 = vmatprep.subr.mxu0 0.0
      %424 = vmatpush1.msra.mxu0 0.0
      %425 = vmatprep.subr.mxu0 0.0
      %426 = vmatpush1.msra.mxu0 0.0
      %427 = vmatprep.subr.mxu0 0.0
      %428 = vmatpush1.msra.mxu0 0.0
      %429 = vmatprep.subr.mxu0 0.0
      %430 = vmatpush1.msra.mxu0 0.0
      %431 = vmatprep.subr.mxu0 0.0
      %432 = vmatpush1.msra.mxu0 0.0
      %433 = vmatprep.subr.mxu0 0.0
      %434 = vmatpush1.msra.mxu0 0.0
      %435 = vmatprep.mubr.f32.mxu0 0.0
      %436 = vmatmul.mubr.f32.gmra.mrb[0].mxu0 %v353
      %v437 = vpop.f32.mrb[0].mxu0
      %v438 = vadd.f32 0.0, %v437
      %v439 = vpop.f32.mrb[0].mxu0
      %440 = vmatprep.mubr.f32.mxu0 0.0
      %441 = vmatmul.mubr.f32.gmra.mrb[0].mxu0 %v354
      %v442 = vpop.f32.mrb[0].mxu0
      %v443 = vadd.f32 0.0, %v442
      %v444 = vpop.f32.mrb[0].mxu0
      %445 = vdwg.mxu0
      %v446 = vld [vmem:[%s4] sm:$0xff]
      %v447 = vld [vmem:[%s4 + $0x8] sm:$0xff]
      %v448 = vld [vmem:[%s4 + $0x10] sm:$0xff]
      %v449 = vld [vmem:[%s4 + $0x18] sm:$0xff]
      %v450 = vld [vmem:[%s4 + $0x20] sm:$0xff]
      %v451 = vld [vmem:[%s4 + $0x28] sm:$0xff]
      %v452 = vld [vmem:[%s4 + $0x30] sm:$0xff]
      %v453 = vld [vmem:[%s4 + $0x38] sm:$0xff]
      %v454 = vld [vmem:[%s4 + $0x40] sm:$0xff]
      %v455 = vld [vmem:[%s4 + $0x48] sm:$0xff]
      %v456 = vld [vmem:[%s4 + $0x50] sm:$0xff]
      %v457 = vld [vmem:[%s4 + $0x58] sm:$0xff]
      %v458 = vld [vmem:[%s4 + $0x60] sm:$0xff]
      %v459 = vld [vmem:[%s4 + $0x68] sm:$0xff]
      %v460 = vld [vmem:[%s4 + $0x70] sm:$0xff]
      %v461 = vld [vmem:[%s4 + $0x78] sm:$0xff]
      %462 = vmatprep.subr.mxu0 0.0
      %463 = vmatpush1.msra.mxu0 %v446
      %464 = vmatprep.subr.mxu0 0.0
      %465 = vmatpush1.msra.mxu0 %v447
      %466 = vmatprep.subr.mxu0 0.0
      %467 = vmatpush1.msra.mxu0 %v448
      %468 = vmatprep.subr.mxu0 0.0
      %469 = vmatpush1.msra.mxu0 %v449
      %470 = vmatprep.subr.mxu0 0.0
      %471 = vmatpush1.msra.mxu0 %v450
      %472 = vmatprep.subr.mxu0 0.0
      %473 = vmatpush1.msra.mxu0 %v451
      %474 = vmatprep.subr.mxu0 0.0
      %475 = vmatpush1.msra.mxu0 %v452
      %476 = vmatprep.subr.mxu0 0.0
      %477 = vmatpush1.msra.mxu0 %v453
      %478 = vmatprep.subr.mxu0 0.0
      %479 = vmatpush1.msra.mxu0 %v454
      %480 = vmatprep.subr.mxu0 0.0
      %481 = vmatpush1.msra.mxu0 %v455
      %482 = vmatprep.subr.mxu0 0.0
      %483 = vmatpush1.msra.mxu0 %v456
      %484 = vmatprep.subr.mxu0 0.0
      %485 = vmatpush1.msra.mxu0 %v457
      %486 = vmatprep.subr.mxu0 0.0
      %487 = vmatpush1.msra.mxu0 %v458
      %488 = vmatprep.subr.mxu0 0.0
      %489 = vmatpush1.msra.mxu0 %v459
      %490 = vmatprep.subr.mxu0 0.0
      %491 = vmatpush1.msra.mxu0 %v460
      %492 = vmatprep.subr.mxu0 0.0
      %493 = vmatpush1.msra.mxu0 %v461
      %494 = vmatprep.subr.mxu0 0.0
      %495 = vmatpush1.msra.mxu0 0.0
      %496 = vmatprep.subr.mxu0 0.0
      %497 = vmatpush1.msra.mxu0 0.0
      %498 = vmatprep.subr.mxu0 0.0
      %499 = vmatpush1.msra.mxu0 0.0
      %500 = vmatprep.subr.mxu0 0.0
      %501 = vmatpush1.msra.mxu0 0.0
      %502 = vmatprep.subr.mxu0 0.0
      %503 = vmatpush1.msra.mxu0 0.0
      %504 = vmatprep.subr.mxu0 0.0
      %505 = vmatpush1.msra.mxu0 0.0
      %506 = vmatprep.subr.mxu0 0.0
      %507 = vmatpush1.msra.mxu0 0.0
      %508 = vmatprep.subr.mxu0 0.0
      %509 = vmatpush1.msra.mxu0 0.0
      %510 = vmatprep.subr.mxu0 0.0
      %511 = vmatpush1.msra.mxu0 0.0
      %512 = vmatprep.subr.mxu0 0.0
      %513 = vmatpush1.msra.mxu0 0.0
      %514 = vmatprep.subr.mxu0 0.0
      %515 = vmatpush1.msra.mxu0 0.0
      %516 = vmatprep.subr.mxu0 0.0
      %517 = vmatpush1.msra.mxu0 0.0
      %518 = vmatprep.subr.mxu0 0.0
      %519 = vmatpush1.msra.mxu0 0.0
      %520 = vmatprep.subr.mxu0 0.0
      %521 = vmatpush1.msra.mxu0 0.0
      %522 = vmatprep.subr.mxu0 0.0
      %523 = vmatpush1.msra.mxu0 0.0
      %524 = vmatprep.subr.mxu0 0.0
      %525 = vmatpush1.msra.mxu0 0.0
      %526 = vmatprep.mubr.f32.mxu0 0.0
      %527 = vmatmul.mubr.f32.gmra.mrb[0].mxu0 %v353
      %v528 = vpop.f32.mrb[0].mxu0
      %v529 = vadd.f32 0.0, %v528
      %v530 = vpop.f32.mrb[0].mxu0
      %531 = vmatprep.mubr.f32.mxu0 0.0
      %532 = vmatmul.mubr.f32.gmra.mrb[0].mxu0 %v354
      %v533 = vpop.f32.mrb[0].mxu0
      %v534 = vadd.f32 0.0, %v533
      %v535 = vpop.f32.mrb[0].mxu0
      %536 = vdwg.mxu0
      %v537 = vld [vmem:[%s5] sm:$0xff]
      %v538 = vld [vmem:[%s5 + $0x8] sm:$0xff]
      %v539 = vld [vmem:[%s5 + $0x10] sm:$0xff]
      %v540 = vld [vmem:[%s5 + $0x18] sm:$0xff]
      %v541 = vld [vmem:[%s5 + $0x20] sm:$0xff]
      %v542 = vld [vmem:[%s5 + $0x28] sm:$0xff]
      %v543 = vld [vmem:[%s5 + $0x30] sm:$0xff]
      %v544 = vld [vmem:[%s5 + $0x38] sm:$0xff]
      %v545 = vld [vmem:[%s5 + $0x40] sm:$0xff]
      %v546 = vld [vmem:[%s5 + $0x48] sm:$0xff]
      %v547 = vld [vmem:[%s5 + $0x50] sm:$0xff]
      %v548 = vld [vmem:[%s5 + $0x58] sm:$0xff]
      %v549 = vld [vmem:[%s5 + $0x60] sm:$0xff]
      %v550 = vld [vmem:[%s5 + $0x68] sm:$0xff]
      %v551 = vld [vmem:[%s5 + $0x70] sm:$0xff]
      %v552 = vld [vmem:[%s5 + $0x78] sm:$0xff]
      %553 = vmatprep.subr.mxu0 0.0
      %554 = vmatpush1.msra.mxu0 %v537
      %555 = vmatprep.subr.mxu0 0.0
      %556 = vmatpush1.msra.mxu0 %v538
      %557 = vmatprep.subr.mxu0 0.0
      %558 = vmatpush1.msra.mxu0 %v539
      %559 = vmatprep.subr.mxu0 0.0
      %560 = vmatpush1.msra.mxu0 %v540
      %561 = vmatprep.subr.mxu0 0.0
      %562 = vmatpush1.msra.mxu0 %v541
      %563 = vmatprep.subr.mxu0 0.0
      %564 = vmatpush1.msra.mxu0 %v542
      %565 = vmatprep.subr.mxu0 0.0
      %566 = vmatpush1.msra.mxu0 %v543
      %567 = vmatprep.subr.mxu0 0.0
      %568 = vmatpush1.msra.mxu0 %v544
      %569 = vmatprep.subr.mxu0 0.0
      %570 = vmatpush1.msra.mxu0 %v545
      %571 = vmatprep.subr.mxu0 0.0
      %572 = vmatpush1.msra.mxu0 %v546
      %573 = vmatprep.subr.mxu0 0.0
      %574 = vmatpush1.msra.mxu0 %v547
      %575 = vmatprep.subr.mxu0 0.0
      %576 = vmatpush1.msra.mxu0 %v548
      %577 = vmatprep.subr.mxu0 0.0
      %578 = vmatpush1.msra.mxu0 %v549
      %579 = vmatprep.subr.mxu0 0.0
      %580 = vmatpush1.msra.mxu0 %v550
      %581 = vmatprep.subr.mxu0 0.0
      %582 = vmatpush1.msra.mxu0 %v551
      %583 = vmatprep.subr.mxu0 0.0
      %584 = vmatpush1.msra.mxu0 %v552
      %585 = vmatprep.subr.mxu0 0.0
      %586 = vmatpush1.msra.mxu0 0.0
      %587 = vmatprep.subr.mxu0 0.0
      %588 = vmatpush1.msra.mxu0 0.0
      %589 = vmatprep.subr.mxu0 0.0
      %590 = vmatpush1.msra.mxu0 0.0
      %591 = vmatprep.subr.mxu0 0.0
      %592 = vmatpush1.msra.mxu0 0.0
      %593 = vmatprep.subr.mxu0 0.0
      %594 = vmatpush1.msra.mxu0 0.0
      %595 = vmatprep.subr.mxu0 0.0
      %596 = vmatpush1.msra.mxu0 0.0
      %597 = vmatprep.subr.mxu0 0.0
      %598 = vmatpush1.msra.mxu0 0.0
      %599 = vmatprep.subr.mxu0 0.0
      %600 = vmatpush1.msra.mxu0 0.0
      %601 = vmatprep.subr.mxu0 0.0
      %602 = vmatpush1.msra.mxu0 0.0
      %603 = vmatprep.subr.mxu0 0.0
      %604 = vmatpush1.msra.mxu0 0.0
      %605 = vmatprep.subr.mxu0 0.0
      %606 = vmatpush1.msra.mxu0 0.0
      %607 = vmatprep.subr.mxu0 0.0
      %608 = vmatpush1.msra.mxu0 0.0
      %609 = vmatprep.subr.mxu0 0.0
      %610 = vmatpush1.msra.mxu0 0.0
      %611 = vmatprep.subr.mxu0 0.0
      %612 = vmatpush1.msra.mxu0 0.0
      %613 = vmatprep.subr.mxu0 0.0
      %614 = vmatpush1.msra.mxu0 0.0
      %615 = vmatprep.subr.mxu0 0.0
      %616 = vmatpush1.msra.mxu0 0.0
      %617 = vmatprep.mubr.f32.mxu0 0.0
      %618 = vmatmul.mubr.f32.gmra.mrb[0].mxu0 %v353
      %v619 = vpop.f32.mrb[0].mxu0
      %v620 = vadd.f32 0.0, %v619
      %v621 = vpop.f32.mrb[0].mxu0
      %622 = vmatprep.mubr.f32.mxu0 0.0
      %623 = vmatmul.mubr.f32.gmra.mrb[0].mxu0 %v354
      %v624 = vpop.f32.mrb[0].mxu0
      %v625 = vadd.f32 0.0, %v624
      %v626 = vpop.f32.mrb[0].mxu0
      %627 = vdwg.mxu0
      %vm628 = vcmask 130048
      %v630 = vsel %vm628, %v438, 0
      %v633 = vsel %vm628, %v443, 0
      %v636 = vsel %vm628, %v529, 0
      %v639 = vsel %vm628, %v534, 0
      %641 = vmatprep.subr.mxu0 0.0
      %642 = vmatpush1.xpose.msra.mxu0 %v636
      %643 = vmatprep.subr.mxu0 0.0
      %644 = vmatpush1.xpose.msra.mxu0 %v639
      %645 = vmatprep.subr.mxu0 0.0
      %646 = vmatpush1.xpose.msra.mxu0 0.0
      %647 = vmatprep.subr.mxu0 0.0
      %648 = vmatpush1.xpose.msra.mxu0 0.0
      %649 = vmatprep.subr.mxu0 0.0
      %650 = vmatpush1.xpose.msra.mxu0 0.0
      %651 = vmatprep.subr.mxu0 0.0
      %652 = vmatpush1.xpose.msra.mxu0 0.0
      %653 = vmatprep.subr.mxu0 0.0
      %654 = vmatpush1.xpose.msra.mxu0 0.0
      %655 = vmatprep.subr.mxu0 0.0
      %656 = vmatpush1.xpose.msra.mxu0 0.0
      %657 = vmatprep.subr.mxu0 0.0
      %658 = vmatpush1.xpose.msra.mxu0 0.0
      %659 = vmatprep.subr.mxu0 0.0
      %660 = vmatpush1.xpose.msra.mxu0 0.0
      %661 = vmatprep.subr.mxu0 0.0
      %662 = vmatpush1.xpose.msra.mxu0 0.0
      %663 = vmatprep.subr.mxu0 0.0
      %664 = vmatpush1.xpose.msra.mxu0 0.0
      %665 = vmatprep.subr.mxu0 0.0
      %666 = vmatpush1.xpose.msra.mxu0 0.0
      %667 = vmatprep.subr.mxu0 0.0
      %668 = vmatpush1.xpose.msra.mxu0 0.0
      %669 = vmatprep.subr.mxu0 0.0
      %670 = vmatpush1.xpose.msra.mxu0 0.0
      %671 = vmatprep.subr.mxu0 0.0
      %672 = vmatpush1.xpose.msra.mxu0 0.0
      %673 = vmatprep.subr.mxu0 0.0
      %674 = vmatpush1.xpose.msra.mxu0 0.0
      %675 = vmatprep.subr.mxu0 0.0
      %676 = vmatpush1.xpose.msra.mxu0 0.0
      %677 = vmatprep.subr.mxu0 0.0
      %678 = vmatpush1.xpose.msra.mxu0 0.0
      %679 = vmatprep.subr.mxu0 0.0
      %680 = vmatpush1.xpose.msra.mxu0 0.0
      %681 = vmatprep.subr.mxu0 0.0
      %682 = vmatpush1.xpose.msra.mxu0 0.0
      %683 = vmatprep.subr.mxu0 0.0
      %684 = vmatpush1.xpose.msra.mxu0 0.0
      %685 = vmatprep.subr.mxu0 0.0
      %686 = vmatpush1.xpose.msra.mxu0 0.0
      %687 = vmatprep.subr.mxu0 0.0
      %688 = vmatpush1.xpose.msra.mxu0 0.0
      %689 = vmatprep.subr.mxu0 0.0
      %690 = vmatpush1.xpose.msra.mxu0 0.0
      %691 = vmatprep.subr.mxu0 0.0
      %692 = vmatpush1.xpose.msra.mxu0 0.0
      %693 = vmatprep.subr.mxu0 0.0
      %694 = vmatpush1.xpose.msra.mxu0 0.0
      %695 = vmatprep.subr.mxu0 0.0
      %696 = vmatpush1.xpose.msra.mxu0 0.0
      %697 = vmatprep.subr.mxu0 0.0
      %698 = vmatpush1.xpose.msra.mxu0 0.0
      %699 = vmatprep.subr.mxu0 0.0
      %700 = vmatpush1.xpose.msra.mxu0 0.0
      %701 = vmatprep.subr.mxu0 0.0
      %702 = vmatpush1.xpose.msra.mxu0 0.0
      %703 = vmatprep.subr.mxu0 0.0
      %704 = vmatpush1.xpose.msra.mxu0 0.0
      %705 = vmatprep.mubr.f32.mxu0 0.0
      %706 = vmatmul.mubr.f32.gmra.mrb[0].mxu0 %v630
      %v707 = vpop.f32.mrb[0].mxu0
      %v708 = vadd.f32 0.0, %v707
      %v709 = vpop.f32.mrb[0].mxu0
      %710 = vmatprep.mubr.f32.mxu0 0.0
      %711 = vmatmul.mubr.f32.gmra.mrb[0].mxu0 %v633
      %v712 = vpop.f32.mrb[0].mxu0
      %v713 = vadd.f32 0.0, %v712
      %v714 = vpop.f32.mrb[0].mxu0
      %715 = vdwg.mxu0
      %v716 = vmul.f32 %v708, 0.25
      %v717 = vmul.f32 %v713, 0.25
      %v718 = vsel %vm628, %v716, -inf
      %719 = vmax.xlane.f32.xlu0 %v718
      %v720 = vpop.xlane.xlu0 %719
      %v721 = vsel %vm628, %v717, -inf
      %722 = vmax.xlane.f32.xlu0 %v721
      %v723 = vpop.xlane.xlu0 %722
      %v724 = vsub.f32 %v716, %v720
      %v725 = vsub.f32 %v717, %v723
      %v726 = vmul.f32 %v724, 1.442695
      %v727 = vpow.pop %v726
      %v728 = vmul.f32 %v725, 1.442695
      %v729 = vpow.pop %v728
      %v730 = vsel %vm628, %v727, 0.0
      %731 = vadd.xlane.f32.xlu0 %v730
      %v732 = vpop.xlane.xlu0 %731
      %v733 = vsel %vm628, %v729, 0.0
      %734 = vadd.xlane.f32.xlu0 %v733
      %v735 = vpop.xlane.xlu0 %734
      %v736 = vrcp.pop %v732
      %v737 = vmul.f32 %v727, %v736
      %v738 = vrcp.pop %v735
      %v739 = vmul.f32 %v729, %v738
      %v741 = vsel %vm628, %v737, 0
      %v744 = vsel %vm628, %v739, 0
      %746 = vmatprep.subr.mxu0 0.0
      %747 = vmatpush1.msra.mxu0 %v620
      %748 = vmatprep.subr.mxu0 0.0
      %749 = vmatpush1.msra.mxu0 %v625
      %750 = vmatprep.subr.mxu0 0.0
      %751 = vmatpush1.msra.mxu0 0.0
      %752 = vmatprep.subr.mxu0 0.0
      %753 = vmatpush1.msra.mxu0 0.0
      %754 = vmatprep.subr.mxu0 0.0
      %755 = vmatpush1.msra.mxu0 0.0
      %756 = vmatprep.subr.mxu0 0.0
      %757 = vmatpush1.msra.mxu0 0.0
      %758 = vmatprep.subr.mxu0 0.0
      %759 = vmatpush1.msra.mxu0 0.0
      %760 = vmatprep.subr.mxu0 0.0
      %761 = vmatpush1.msra.mxu0 0.0
      %762 = vmatprep.subr.mxu0 0.0
      %763 = vmatpush1.msra.mxu0 0.0
      %764 = vmatprep.subr.mxu0 0.0
      %765 = vmatpush1.msra.mxu0 0.0
      %766 = vmatprep.subr.mxu0 0.0
      %767 = vmatpush1.msra.mxu0 0.0
      %768 = vmatprep.subr.mxu0 0.0
      %769 = vmatpush1.msra.mxu0 0.0
      %770 = vmatprep.subr.mxu0 0.0
      %771 = vmatpush1.msra.mxu0 0.0
      %772 = vmatprep.subr.mxu0 0.0
      %773 = vmatpush1.msra.mxu0 0.0
      %774 = vmatprep.subr.mxu0 0.0
      %775 = vmatpush1.msra.mxu0 0.0
      %776 = vmatprep.subr.mxu0 0.0
      %777 = vmatpush1.msra.mxu0 0.0
      %778 = vmatprep.subr.mxu0 0.0
      %779 = vmatpush1.msra.mxu0 0.0
      %780 = vmatprep.subr.mxu0 0.0
      %781 = vmatpush1.msra.mxu0 0.0
      %782 = vmatprep.subr.mxu0 0.0
      %783 = vmatpush1.msra.mxu0 0.0
      %784 = vmatprep.subr.mxu0 0.0
      %785 = vmatpush1.msra.mxu0 0.0
      %786 = vmatprep.subr.mxu0 0.0
      %787 = vmatpush1.msra.mxu0 0.0
      %788 = vmatprep.subr.mxu0 0.0
      %789 = vmatpush1.msra.mxu0 0.0
      %790 = vmatprep.subr.mxu0 0.0
      %791 = vmatpush1.msra.mxu0 0.0
      %792 = vmatprep.subr.mxu0 0.0
      %793 = vmatpush1.msra.mxu0 0.0
      %794 = vmatprep.subr.mxu0 0.0
      %795 = vmatpush1.msra.mxu0 0.0
      %796 = vmatprep.subr.mxu0 0.0
      %797 = vmatpush1.msra.mxu0 0.0
      %798 = vmatprep.subr.mxu0 0.0
      %799 = vmatpush1.msra.mxu0 0.0
      %800 = vmatprep.subr.mxu0 0.0
      %801 = vmatpush1.msra.mxu0 0.0
      %802 = vmatprep.subr.mxu0 0.0
      %803 = vmatpush1.msra.mxu0 0.0
      %804 = vmatprep.subr.mxu0 0.0
      %805 = vmatpush1.msra.mxu0 0.0
      %806 = vmatprep.subr.mxu0 0.0
      %807 = vmatpush1.msra.mxu0 0.0
      %808 = vmatprep.subr.mxu0 0.0
      %809 = vmatpush1.msra.mxu0 0.0
      %810 = vmatprep.mubr.f32.mxu0 0.0
      %811 = vmatmul.mubr.f32.gmra.mrb[0].mxu0 %v741
      %v812 = vpop.f32.mrb[0].mxu0
      %v813 = vadd.f32 0.0, %v812
      %v814 = vpop.f32.mrb[0].mxu0
      %815 = vmatprep.mubr.f32.mxu0 0.0
      %816 = vmatmul.mubr.f32.gmra.mrb[0].mxu0 %v744
      %v817 = vpop.f32.mrb[0].mxu0
      %v818 = vadd.f32 0.0, %v817
      %v819 = vpop.f32.mrb[0].mxu0
      %820 = vdwg.mxu0
      %v821 = vld [vmem:[%s6] sm:$0xff]
      %v822 = vld [vmem:[%s6 + $0x8] sm:$0xff]
      %823 = vrot.lane.b32.xlu0 %v438, 112
      %v824 = vpop.permute.xlu0 %823
      %825 = vrot.lane.b32.xlu0 %v443, 112
      %v826 = vpop.permute.xlu0 %825
      %827 = vrot.lane.b32.xlu0 %v529, 112
      %v828 = vpop.permute.xlu0 %827
      %829 = vrot.lane.b32.xlu0 %v534, 112
      %v830 = vpop.permute.xlu0 %829
      %v831 = vsel %vm628, %v824, 0
      %v833 = vsel %vm628, %v826, 0
      %v835 = vsel %vm628, %v828, 0
      %v837 = vsel %vm628, %v830, 0
      %839 = vmatprep.subr.mxu0 0.0
      %840 = vmatpush1.xpose.msra.mxu0 %v835
      %841 = vmatprep.subr.mxu0 0.0
      %842 = vmatpush1.xpose.msra.mxu0 %v837
      %843 = vmatprep.subr.mxu0 0.0
      %844 = vmatpush1.xpose.msra.mxu0 0.0
      %845 = vmatprep.subr.mxu0 0.0
      %846 = vmatpush1.xpose.msra.mxu0 0.0
      %847 = vmatprep.subr.mxu0 0.0
      %848 = vmatpush1.xpose.msra.mxu0 0.0
      %849 = vmatprep.subr.mxu0 0.0
      %850 = vmatpush1.xpose.msra.mxu0 0.0
      %851 = vmatprep.subr.mxu0 0.0
      %852 = vmatpush1.xpose.msra.mxu0 0.0
      %853 = vmatprep.subr.mxu0 0.0
      %854 = vmatpush1.xpose.msra.mxu0 0.0
      %855 = vmatprep.subr.mxu0 0.0
      %856 = vmatpush1.xpose.msra.mxu0 0.0
      %857 = vmatprep.subr.mxu0 0.0
      %858 = vmatpush1.xpose.msra.mxu0 0.0
      %859 = vmatprep.subr.mxu0 0.0
      %860 = vmatpush1.xpose.msra.mxu0 0.0
      %861 = vmatprep.subr.mxu0 0.0
      %862 = vmatpush1.xpose.msra.mxu0 0.0
      %863 = vmatprep.subr.mxu0 0.0
      %864 = vmatpush1.xpose.msra.mxu0 0.0
      %865 = vmatprep.subr.mxu0 0.0
      %866 = vmatpush1.xpose.msra.mxu0 0.0
      %867 = vmatprep.subr.mxu0 0.0
      %868 = vmatpush1.xpose.msra.mxu0 0.0
      %869 = vmatprep.subr.mxu0 0.0
      %870 = vmatpush1.xpose.msra.mxu0 0.0
      %871 = vmatprep.subr.mxu0 0.0
      %872 = vmatpush1.xpose.msra.mxu0 0.0
      %873 = vmatprep.subr.mxu0 0.0
      %874 = vmatpush1.xpose.msra.mxu0 0.0
      %875 = vmatprep.subr.mxu0 0.0
      %876 = vmatpush1.xpose.msra.mxu0 0.0
      %877 = vmatprep.subr.mxu0 0.0
      %878 = vmatpush1.xpose.msra.mxu0 0.0
      %879 = vmatprep.subr.mxu0 0.0
      %880 = vmatpush1.xpose.msra.mxu0 0.0
      %881 = vmatprep.subr.mxu0 0.0
      %882 = vmatpush1.xpose.msra.mxu0 0.0
      %883 = vmatprep.subr.mxu0 0.0
      %884 = vmatpush1.xpose.msra.mxu0 0.0
      %885 = vmatprep.subr.mxu0 0.0
      %886 = vmatpush1.xpose.msra.mxu0 0.0
      %887 = vmatprep.subr.mxu0 0.0
      %888 = vmatpush1.xpose.msra.mxu0 0.0
      %889 = vmatprep.subr.mxu0 0.0
      %890 = vmatpush1.xpose.msra.mxu0 0.0
      %891 = vmatprep.subr.mxu0 0.0
      %892 = vmatpush1.xpose.msra.mxu0 0.0
      %893 = vmatprep.subr.mxu0 0.0
      %894 = vmatpush1.xpose.msra.mxu0 0.0
      %895 = vmatprep.subr.mxu0 0.0
      %896 = vmatpush1.xpose.msra.mxu0 0.0
      %897 = vmatprep.subr.mxu0 0.0
      %898 = vmatpush1.xpose.msra.mxu0 0.0
      %899 = vmatprep.subr.mxu0 0.0
      %900 = vmatpush1.xpose.msra.mxu0 0.0
      %901 = vmatprep.subr.mxu0 0.0
      %902 = vmatpush1.xpose.msra.mxu0 0.0
      %903 = vmatprep.mubr.f32.mxu0 0.0
      %904 = vmatmul.mubr.f32.gmra.mrb[0].mxu0 %v831
      %v905 = vpop.f32.mrb[0].mxu0
      %v906 = vadd.f32 0.0, %v905
      %v907 = vpop.f32.mrb[0].mxu0
      %908 = vmatprep.mubr.f32.mxu0 0.0
      %909 = vmatmul.mubr.f32.gmra.mrb[0].mxu0 %v833
      %v910 = vpop.f32.mrb[0].mxu0
      %v911 = vadd.f32 0.0, %v910
      %v912 = vpop.f32.mrb[0].mxu0
      %913 = vdwg.mxu0
      %v914 = vmul.f32 %v906, 0.25
      %v915 = vmul.f32 %v911, 0.25
      %v916 = vsel %vm628, %v914, -inf
      %917 = vmax.xlane.f32.xlu0 %v916
      %v918 = vpop.xlane.xlu0 %917
      %v919 = vsel %vm628, %v915, -inf
      %920 = vmax.xlane.f32.xlu0 %v919
      %v921 = vpop.xlane.xlu0 %920
      %v922 = vsub.f32 %v914, %v918
      %v923 = vsub.f32 %v915, %v921
      %v924 = vmul.f32 %v922, 1.442695
      %v925 = vpow.pop %v924
      %v926 = vmul.f32 %v923, 1.442695
      %v927 = vpow.pop %v926
      %v928 = vsel %vm628, %v925, 0.0
      %929 = vadd.xlane.f32.xlu0 %v928
      %v930 = vpop.xlane.xlu0 %929
      %v931 = vsel %vm628, %v927, 0.0
      %932 = vadd.xlane.f32.xlu0 %v931
      %v933 = vpop.xlane.xlu0 %932
      %v934 = vrcp.pop %v930
      %v935 = vmul.f32 %v925, %v934
      %v936 = vrcp.pop %v933
      %v937 = vmul.f32 %v927, %v936
      %940 = vrot.lane.b32.xlu0 %v620, 112
      %v941 = vpop.permute.xlu0 %940
      %942 = vrot.lane.b32.xlu0 %v625, 112
      %v943 = vpop.permute.xlu0 %942
      %v947 = vsel %vm628, %v935, 0
      %v950 = vsel %vm628, %v937, 0
      %952 = vmatprep.subr.mxu0 0.0
      %953 = vmatpush1.msra.mxu0 %v941
      %954 = vmatprep.subr.mxu0 0.0
      %955 = vmatpush1.msra.mxu0 %v943
      %956 = vmatprep.subr.mxu0 0.0
      %957 = vmatpush1.msra.mxu0 0.0
      %958 = vmatprep.subr.mxu0 0.0
      %959 = vmatpush1.msra.mxu0 0.0
      %960 = vmatprep.subr.mxu0 0.0
      %961 = vmatpush1.msra.mxu0 0.0
      %962 = vmatprep.subr.mxu0 0.0
      %963 = vmatpush1.msra.mxu0 0.0
      %964 = vmatprep.subr.mxu0 0.0
      %965 = vmatpush1.msra.mxu0 0.0
      %966 = vmatprep.subr.mxu0 0.0
      %967 = vmatpush1.msra.mxu0 0.0
      %968 = vmatprep.subr.mxu0 0.0
      %969 = vmatpush1.msra.mxu0 0.0
      %970 = vmatprep.subr.mxu0 0.0
      %971 = vmatpush1.msra.mxu0 0.0
      %972 = vmatprep.subr.mxu0 0.0
      %973 = vmatpush1.msra.mxu0 0.0
      %974 = vmatprep.subr.mxu0 0.0
      %975 = vmatpush1.msra.mxu0 0.0
      %976 = vmatprep.subr.mxu0 0.0
      %977 = vmatpush1.msra.mxu0 0.0
      %978 = vmatprep.subr.mxu0 0.0
      %979 = vmatpush1.msra.mxu0 0.0
      %980 = vmatprep.subr.mxu0 0.0
      %981 = vmatpush1.msra.mxu0 0.0
      %982 = vmatprep.subr.mxu0 0.0
      %983 = vmatpush1.msra.mxu0 0.0
      %984 = vmatprep.subr.mxu0 0.0
      %985 = vmatpush1.msra.mxu0 0.0
      %986 = vmatprep.subr.mxu0 0.0
      %987 = vmatpush1.msra.mxu0 0.0
      %988 = vmatprep.subr.mxu0 0.0
      %989 = vmatpush1.msra.mxu0 0.0
      %990 = vmatprep.subr.mxu0 0.0
      %991 = vmatpush1.msra.mxu0 0.0
      %992 = vmatprep.subr.mxu0 0.0
      %993 = vmatpush1.msra.mxu0 0.0
      %994 = vmatprep.subr.mxu0 0.0
      %995 = vmatpush1.msra.mxu0 0.0
      %996 = vmatprep.subr.mxu0 0.0
      %997 = vmatpush1.msra.mxu0 0.0
      %998 = vmatprep.subr.mxu0 0.0
      %999 = vmatpush1.msra.mxu0 0.0
      %1000 = vmatprep.subr.mxu0 0.0
      %1001 = vmatpush1.msra.mxu0 0.0
      %1002 = vmatprep.subr.mxu0 0.0
      %1003 = vmatpush1.msra.mxu0 0.0
      %1004 = vmatprep.subr.mxu0 0.0
      %1005 = vmatpush1.msra.mxu0 0.0
      %1006 = vmatprep.subr.mxu0 0.0
      %1007 = vmatpush1.msra.mxu0 0.0
      %1008 = vmatprep.subr.mxu0 0.0
      %1009 = vmatpush1.msra.mxu0 0.0
      %1010 = vmatprep.subr.mxu0 0.0
      %1011 = vmatpush1.msra.mxu0 0.0
      %1012 = vmatprep.subr.mxu0 0.0
      %1013 = vmatpush1.msra.mxu0 0.0
      %1014 = vmatprep.subr.mxu0 0.0
      %1015 = vmatpush1.msra.mxu0 0.0
      %1016 = vmatprep.mubr.f32.mxu0 0.0
      %1017 = vmatmul.mubr.f32.gmra.mrb[0].mxu0 %v947
      %v1018 = vpop.f32.mrb[0].mxu0
      %v1019 = vadd.f32 0.0, %v1018
      %v1020 = vpop.f32.mrb[0].mxu0
      %1021 = vmatprep.mubr.f32.mxu0 0.0
      %1022 = vmatmul.mubr.f32.gmra.mrb[0].mxu0 %v950
      %v1023 = vpop.f32.mrb[0].mxu0
      %v1024 = vadd.f32 0.0, %v1023
      %v1025 = vpop.f32.mrb[0].mxu0
      %1026 = vdwg.mxu0
      %v1027 = vld [vmem:[%s6 + $0x10] sm:$0xff]
      %v1028 = vld [vmem:[%s6 + $0x18] sm:$0xff]
      %v1030 = vsel %vm628, %v1019, 0
      %v1033 = vsel %vm628, %v1024, 0
      %1035 = vmatprep.subr.mxu0 0.0
      %1036 = vmatpush1.msra.mxu0 %v1027
      %1037 = vmatprep.subr.mxu0 0.0
      %1038 = vmatpush1.msra.mxu0 %v1028
      %1039 = vmatprep.subr.mxu0 0.0
      %1040 = vmatpush1.msra.mxu0 0.0
      %1041 = vmatprep.subr.mxu0 0.0
      %1042 = vmatpush1.msra.mxu0 0.0
      %1043 = vmatprep.subr.mxu0 0.0
      %1044 = vmatpush1.msra.mxu0 0.0
      %1045 = vmatprep.subr.mxu0 0.0
      %1046 = vmatpush1.msra.mxu0 0.0
      %1047 = vmatprep.subr.mxu0 0.0
      %1048 = vmatpush1.msra.mxu0 0.0
      %1049 = vmatprep.subr.mxu0 0.0
      %1050 = vmatpush1.msra.mxu0 0.0
      %1051 = vmatprep.subr.mxu0 0.0
      %1052 = vmatpush1.msra.mxu0 0.0
      %1053 = vmatprep.subr.mxu0 0.0
      %1054 = vmatpush1.msra.mxu0 0.0
      %1055 = vmatprep.subr.mxu0 0.0
      %1056 = vmatpush1.msra.mxu0 0.0
      %1057 = vmatprep.subr.mxu0 0.0
      %1058 = vmatpush1.msra.mxu0 0.0
      %1059 = vmatprep.subr.mxu0 0.0
      %1060 = vmatpush1.msra.mxu0 0.0
      %1061 = vmatprep.subr.mxu0 0.0
      %1062 = vmatpush1.msra.mxu0 0.0
      %1063 = vmatprep.subr.mxu0 0.0
      %1064 = vmatpush1.msra.mxu0 0.0
      %1065 = vmatprep.subr.mxu0 0.0
      %1066 = vmatpush1.msra.mxu0 0.0
      %1067 = vmatprep.subr.mxu0 0.0
      %1068 = vmatpush1.msra.mxu0 0.0
      %1069 = vmatprep.subr.mxu0 0.0
      %1070 = vmatpush1.msra.mxu0 0.0
      %1071 = vmatprep.subr.mxu0 0.0
      %1072 = vmatpush1.msra.mxu0 0.0
      %1073 = vmatprep.subr.mxu0 0.0
      %1074 = vmatpush1.msra.mxu0 0.0
      %1075 = vmatprep.subr.mxu0 0.0
      %1076 = vmatpush1.msra.mxu0 0.0
      %1077 = vmatprep.subr.mxu0 0.0
      %1078 = vmatpush1.msra.mxu0 0.0
      %1079 = vmatprep.subr.mxu0 0.0
      %1080 = vmatpush1.msra.mxu0 0.0
      %1081 = vmatprep.subr.mxu0 0.0
      %1082 = vmatpush1.msra.mxu0 0.0
      %1083 = vmatprep.subr.mxu0 0.0
      %1084 = vmatpush1.msra.mxu0 0.0
      %1085 = vmatprep.subr.mxu0 0.0
      %1086 = vmatpush1.msra.mxu0 0.0
      %1087 = vmatprep.subr.mxu0 0.0
      %1088 = vmatpush1.msra.mxu0 0.0
      %1089 = vmatprep.subr.mxu0 0.0
      %1090 = vmatpush1.msra.mxu0 0.0
      %1091 = vmatprep.subr.mxu0 0.0
      %1092 = vmatpush1.msra.mxu0 0.0
      %1093 = vmatprep.subr.mxu0 0.0
      %1094 = vmatpush1.msra.mxu0 0.0
      %1095 = vmatprep.subr.mxu0 0.0
      %1096 = vmatpush1.msra.mxu0 0.0
      %1097 = vmatprep.subr.mxu0 0.0
      %1098 = vmatpush1.msra.mxu0 0.0
      %1099 = vmatprep.mubr.f32.mxu0 0.0
      %1100 = vmatmul.mubr.f32.gmra.mrb[0].mxu0 %v1030
      %v1101 = vpop.f32.mrb[0].mxu0
      %v1102 = vadd.f32 0.0, %v1101
      %v1103 = vpop.f32.mrb[0].mxu0
      %1104 = vmatprep.mubr.f32.mxu0 0.0
      %1105 = vmatmul.mubr.f32.gmra.mrb[0].mxu0 %v1033
      %v1106 = vpop.f32.mrb[0].mxu0
      %v1107 = vadd.f32 0.0, %v1106
      %v1108 = vpop.f32.mrb[0].mxu0
      %1109 = vdwg.mxu0
      %v1111 = vsel %vm628, %v813, 0
      %v1114 = vsel %vm628, %v818, 0
      %1116 = vmatprep.subr.mxu0 0.0
      %1117 = vmatpush1.msra.mxu0 %v821
      %1118 = vmatprep.subr.mxu0 0.0
      %1119 = vmatpush1.msra.mxu0 %v822
      %1120 = vmatprep.subr.mxu0 0.0
      %1121 = vmatpush1.msra.mxu0 0.0
      %1122 = vmatprep.subr.mxu0 0.0
      %1123 = vmatpush1.msra.mxu0 0.0
      %1124 = vmatprep.subr.mxu0 0.0
      %1125 = vmatpush1.msra.mxu0 0.0
      %1126 = vmatprep.subr.mxu0 0.0
      %1127 = vmatpush1.msra.mxu0 0.0
      %1128 = vmatprep.subr.mxu0 0.0
      %1129 = vmatpush1.msra.mxu0 0.0
      %1130 = vmatprep.subr.mxu0 0.0
      %1131 = vmatpush1.msra.mxu0 0.0
      %1132 = vmatprep.subr.mxu0 0.0
      %1133 = vmatpush1.msra.mxu0 0.0
      %1134 = vmatprep.subr.mxu0 0.0
      %1135 = vmatpush1.msra.mxu0 0.0
      %1136 = vmatprep.subr.mxu0 0.0
      %1137 = vmatpush1.msra.mxu0 0.0
      %1138 = vmatprep.subr.mxu0 0.0
      %1139 = vmatpush1.msra.mxu0 0.0
      %1140 = vmatprep.subr.mxu0 0.0
      %1141 = vmatpush1.msra.mxu0 0.0
      %1142 = vmatprep.subr.mxu0 0.0
      %1143 = vmatpush1.msra.mxu0 0.0
      %1144 = vmatprep.subr.mxu0 0.0
      %1145 = vmatpush1.msra.mxu0 0.0
      %1146 = vmatprep.subr.mxu0 0.0
      %1147 = vmatpush1.msra.mxu0 0.0
      %1148 = vmatprep.subr.mxu0 0.0
      %1149 = vmatpush1.msra.mxu0 0.0
      %1150 = vmatprep.subr.mxu0 0.0
      %1151 = vmatpush1.msra.mxu0 0.0
      %1152 = vmatprep.subr.mxu0 0.0
      %1153 = vmatpush1.msra.mxu0 0.0
      %1154 = vmatprep.subr.mxu0 0.0
      %1155 = vmatpush1.msra.mxu0 0.0
      %1156 = vmatprep.subr.mxu0 0.0
      %1157 = vmatpush1.msra.mxu0 0.0
      %1158 = vmatprep.subr.mxu0 0.0
      %1159 = vmatpush1.msra.mxu0 0.0
      %1160 = vmatprep.subr.mxu0 0.0
      %1161 = vmatpush1.msra.mxu0 0.0
      %1162 = vmatprep.subr.mxu0 0.0
      %1163 = vmatpush1.msra.mxu0 0.0
      %1164 = vmatprep.subr.mxu0 0.0
      %1165 = vmatpush1.msra.mxu0 0.0
      %1166 = vmatprep.subr.mxu0 0.0
      %1167 = vmatpush1.msra.mxu0 0.0
      %1168 = vmatprep.subr.mxu0 0.0
      %1169 = vmatpush1.msra.mxu0 0.0
      %1170 = vmatprep.subr.mxu0 0.0
      %1171 = vmatpush1.msra.mxu0 0.0
      %1172 = vmatprep.subr.mxu0 0.0
      %1173 = vmatpush1.msra.mxu0 0.0
      %1174 = vmatprep.subr.mxu0 0.0
      %1175 = vmatpush1.msra.mxu0 0.0
      %1176 = vmatprep.subr.mxu0 0.0
      %1177 = vmatpush1.msra.mxu0 0.0
      %1178 = vmatprep.subr.mxu0 0.0
      %1179 = vmatpush1.msra.mxu0 0.0
      %1180 = vmatprep.mubr.f32.mxu0 0.0
      %1181 = vmatmul.mubr.f32.gmra.mrb[0].mxu0 %v1111
      %v1182 = vpop.f32.mrb[0].mxu0
      %v1183 = vadd.f32 %v1102, %v1182
      %v1184 = vpop.f32.mrb[0].mxu0
      %1185 = vmatprep.mubr.f32.mxu0 0.0
      %1186 = vmatmul.mubr.f32.gmra.mrb[0].mxu0 %v1114
      %v1187 = vpop.f32.mrb[0].mxu0
      %v1188 = vadd.f32 %v1107, %v1187
      %v1189 = vpop.f32.mrb[0].mxu0
      %1190 = vdwg.mxu0
      %v1191 = vld [vmem:[%s7] sm:$0x1]
      %v1193 = vlaneseq
      %v1194 = vshrl.u32 %v1193, 7
      %v1195 = vsub.s32 0, %v1194
      %v1196 = vrot.slane %v1191, %v1195
      %v1198 = vadd.f32 %v1183, %v1196
      %v1199 = vadd.f32 %v1188, %v1196
      %v1200 = vadd.f32 %v306, %v1198
      %v1201 = vadd.f32 %v307, %v1199
      %1202 = vst [vmem:[%s305] sm:$0xff] %v1200
      %1203 = vst [vmem:[%s305 + $0x8] sm:$0xff] %v1201
      %p1204 = scmp.lt.s32.totalorder %s19, 7
      %s1205 = scalar_select %p1204, %s19, 7
      %s1206 = smul.addr %s1205, 2
      %s1207 = smul.addr %s1206, 8
      %s1208 = scalar_lea.vmem %s8, %s1207
      // Predicated region
      $region53: #{transformer.4} parent=51 // pred_check
        %p1209 = pneg %p210
      $region54: #{transformer.4} parent=51 // pred_check_branch
        %1211 = sbr.rel (%p1209) target = $region56
      $region55: #{transformer.4} parent=51 // pred_region
        _
      $region56: #{transformer.4} parent=51 // pred_fallthru
        _
    $region52: #{transformer.4} parent=5 // pred_fallthru
      _
    %p1212 = scmp.le.s32.totalorder 2, %s14
    // Predicated region
    $region57: #{transformer.4} parent=5 // pred_check
      %p1213 = pneg %p1212
    $region58: #{transformer.4} parent=5 // pred_check_branch
      %1215 = sbr.rel (%p1213) target = $region60
    $region59: #{transformer.4} parent=5 // pred_region
      %s1216 = ssub.s32 %s14, 2
      // Predicated region
      $region61: #{transformer.4} parent=59 // pred_check
        %p1217 = pneg %p216
      $region62: #{transformer.4} parent=59 // pred_check_branch
        %1219 = sbr.rel (%p1217) target = $region64
      $region63: #{transformer.4} parent=59 // pred_region
        %p1220 = scmp.lt.s32.totalorder %s20, 7
        %s1221 = scalar_select %p1220, %s20, 7
        %s1222 = smul.addr %s1221, 2
        %s1223 = smul.addr %s1222, 8
        %s1224 = scalar_lea.vmem %s8, %s1223
      $region64: #{transformer.4} parent=59 // pred_fallthru
        _
    $region60: #{transformer.4} parent=5 // pred_fallthru
      _
  $region6: #{transformer.4} parent=0 // loop_footer
    %s18 = sadd.s32 1, %s14
  $region7: #{transformer.4} parent=0 // loop_footer_branch
    %13 = sbr.rel target = $region3
  $region8: #{transformer.4} parent=0 // loop_exit
    _

// kernel: transformer.5
$region0: #{transformer.5}
  #allocation0 [shape = 'u32[]', space=smem, size = 0x4, offset = 0x4, fixed_abs, tag = 'smem constant byte address 0x4 - core index']
  #allocation1 [shape = 'u32[144,128]{1,0:T(1,128)}', space=vmem, size = 0x12000, scoped, tag = 'internal scratch']
  %s0 = inlined_call_operand.vmem [shape: f32[128,128], index: 0, kind: input, shape index: {}]
  %s1 = inlined_call_operand.vmem [shape: f32[1,128], index: 1, kind: input, shape index: {}]
  %s2 = inlined_call_operand.vmem [shape: f32[1,128], index: 2, kind: input, shape index: {}]
  %s3 = inlined_call_operand.vmem [shape: f32[128,64], index: 3, kind: input, shape index: {}]
  %s4 = inlined_call_operand.vmem [shape: f32[1,64], index: 4, kind: input, shape index: {}]
  %s5 = inlined_call_operand.vmem [shape: f32[64,128], index: 5, kind: input, shape index: {}]
  %s6 = inlined_call_operand.vmem [shape: f32[1,128], index: 6, kind: input, shape index: {}]
  %s7 = inlined_call_operand.vmem [shape: f32[128,128], index: 7, kind: output, shape index: {}]
  %s8 = sld [smem:[#allocation0]]
  $region38: #{transformer.5} parent=0
    _
  %s10 = ssub.s32 1, %s8
  %s11 = scalar_select 0, %s10, %s8
  // Predicated region
  $region2: #{transformer.5} parent=0 // pred_check
    _
  $region3: #{transformer.5} parent=0 // pred_check_branch
    %13 = sbr.rel (0) target = $region5
  $region4: #{transformer.5} parent=0 // pred_region
    _
  $region5: #{transformer.5} parent=0 // pred_fallthru
    _
  // Predicated region
  $region6: #{transformer.5} parent=0 // pred_check
    _
  $region7: #{transformer.5} parent=0 // pred_check_branch
    %15 = sbr.rel (0) target = $region9
  $region8: #{transformer.5} parent=0 // pred_region
    _
  $region9: #{transformer.5} parent=0 // pred_fallthru
    _
  // Predicated region
  $region10: #{transformer.5} parent=0 // pred_check
    _
  $region11: #{transformer.5} parent=0 // pred_check_branch
    %17 = sbr.rel (0) target = $region13
  $region12: #{transformer.5} parent=0 // pred_region
    _
  $region13: #{transformer.5} parent=0 // pred_fallthru
    _
  // Predicated region
  $region14: #{transformer.5} parent=0 // pred_check
    _
  $region15: #{transformer.5} parent=0 // pred_check_branch
    %19 = sbr.rel (0) target = $region17
  $region16: #{transformer.5} parent=0 // pred_region
    _
  $region17: #{transformer.5} parent=0 // pred_fallthru
    _
  // Predicated region
  $region18: #{transformer.5} parent=0 // pred_check
    _
  $region19: #{transformer.5} parent=0 // pred_check_branch
    %21 = sbr.rel (0) target = $region21
  $region20: #{transformer.5} parent=0 // pred_region
    _
  $region21: #{transformer.5} parent=0 // pred_fallthru
    _
  // Predicated region
  $region22: #{transformer.5} parent=0 // pred_check
    _
  $region23: #{transformer.5} parent=0 // pred_check_branch
    %23 = sbr.rel (0) target = $region25
  $region24: #{transformer.5} parent=0 // pred_region
    _
  $region25: #{transformer.5} parent=0 // pred_fallthru
    _
  // Predicated region
  $region26: #{transformer.5} parent=0 // pred_check
    _
  $region27: #{transformer.5} parent=0 // pred_check_branch
    %25 = sbr.rel (0) target = $region29
  $region28: #{transformer.5} parent=0 // pred_region
    _
  $region29: #{transformer.5} parent=0 // pred_fallthru
    _
  %v26 = vld [vmem:[%s0] sm:$0xff]
  %v27 = vld [vmem:[%s0 + $0x8] sm:$0xff]
  %v28 = vld [vmem:[%s0 + $0x10] sm:$0xff]
  %v29 = vld [vmem:[%s0 + $0x18] sm:$0xff]
  %v30 = vld [vmem:[%s0 + $0x20] sm:$0xff]
  %v31 = vld [vmem:[%s0 + $0x28] sm:$0xff]
  %v32 = vld [vmem:[%s0 + $0x30] sm:$0xff]
  %v33 = vld [vmem:[%s0 + $0x38] sm:$0xff]
  %v34 = vld [vmem:[%s0 + $0x40] sm:$0xff]
  %v35 = vld [vmem:[%s0 + $0x48] sm:$0xff]
  %v36 = vld [vmem:[%s0 + $0x50] sm:$0xff]
  %v37 = vld [vmem:[%s0 + $0x58] sm:$0xff]
  %v38 = vld [vmem:[%s0 + $0x60] sm:$0xff]
  %v39 = vld [vmem:[%s0 + $0x68] sm:$0xff]
  %v40 = vld [vmem:[%s0 + $0x70] sm:$0xff]
  %v41 = vld [vmem:[%s0 + $0x78] sm:$0xff]
  %v42 = vlaneseq
  %v43 = vand.u32 %v42, 127
  %vm44 = vcmp.lt.s32.totalorder %v43, 32
  %v45 = vsel %vm44, %v26, 0.0
  %v46 = vsel %vm44, %v27, 0.0
  %v47 = vsel %vm44, %v28, 0.0
  %v48 = vsel %vm44, %v29, 0.0
  %v49 = vsel %vm44, %v30, 0.0
  %v50 = vsel %vm44, %v31, 0.0
  %v51 = vsel %vm44, %v32, 0.0
  %v52 = vsel %vm44, %v33, 0.0
  %v53 = vsel %vm44, %v34, 0.0
  %v54 = vsel %vm44, %v35, 0.0
  %v55 = vsel %vm44, %v36, 0.0
  %v56 = vsel %vm44, %v37, 0.0
  %v57 = vsel %vm44, %v38, 0.0
  %v58 = vsel %vm44, %v39, 0.0
  %v59 = vsel %vm44, %v40, 0.0
  %v60 = vsel %vm44, %v41, 0.0
  %61 = vadd.xlane.f32.xlu0 %v45
  %v62 = vpop.xlane.xlu0 %61
  %63 = vadd.xlane.f32.xlu0 %v46
  %v64 = vpop.xlane.xlu0 %63
  %65 = vadd.xlane.f32.xlu0 %v47
  %v66 = vpop.xlane.xlu0 %65
  %67 = vadd.xlane.f32.xlu0 %v48
  %v68 = vpop.xlane.xlu0 %67
  %69 = vadd.xlane.f32.xlu0 %v49
  %v70 = vpop.xlane.xlu0 %69
  %71 = vadd.xlane.f32.xlu0 %v50
  %v72 = vpop.xlane.xlu0 %71
  %73 = vadd.xlane.f32.xlu0 %v51
  %v74 = vpop.xlane.xlu0 %73
  %75 = vadd.xlane.f32.xlu0 %v52
  %v76 = vpop.xlane.xlu0 %75
  %77 = vadd.xlane.f32.xlu0 %v53
  %v78 = vpop.xlane.xlu0 %77
  %79 = vadd.xlane.f32.xlu0 %v54
  %v80 = vpop.xlane.xlu0 %79
  %81 = vadd.xlane.f32.xlu0 %v55
  %v82 = vpop.xlane.xlu0 %81
  %83 = vadd.xlane.f32.xlu0 %v56
  %v84 = vpop.xlane.xlu0 %83
  %85 = vadd.xlane.f32.xlu0 %v57
  %v86 = vpop.xlane.xlu0 %85
  %87 = vadd.xlane.f32.xlu0 %v58
  %v88 = vpop.xlane.xlu0 %87
  %89 = vadd.xlane.f32.xlu0 %v59
  %v90 = vpop.xlane.xlu0 %89
  %91 = vadd.xlane.f32.xlu0 %v60
  %v92 = vpop.xlane.xlu0 %91
  %v93 = vmul.f32 %v62, 0.03125
  %v94 = vmul.f32 %v64, 0.03125
  %v95 = vmul.f32 %v66, 0.03125
  %v96 = vmul.f32 %v68, 0.03125
  %v97 = vmul.f32 %v70, 0.03125
  %v98 = vmul.f32 %v72, 0.03125
  %v99 = vmul.f32 %v74, 0.03125
  %v100 = vmul.f32 %v76, 0.03125
  %v101 = vmul.f32 %v78, 0.03125
  %v102 = vmul.f32 %v80, 0.03125
  %v103 = vmul.f32 %v82, 0.03125
  %v104 = vmul.f32 %v84, 0.03125
  %v105 = vmul.f32 %v86, 0.03125
  %v106 = vmul.f32 %v88, 0.03125
  %v107 = vmul.f32 %v90, 0.03125
  %v108 = vmul.f32 %v92, 0.03125
  %v109 = vsub.f32 %v26, %v93
  %v110 = vsub.f32 %v27, %v94
  %v111 = vsub.f32 %v28, %v95
  %v112 = vsub.f32 %v29, %v96
  %v113 = vsub.f32 %v30, %v97
  %v114 = vsub.f32 %v31, %v98
  %v115 = vsub.f32 %v32, %v99
  %v116 = vsub.f32 %v33, %v100
  %v117 = vsub.f32 %v34, %v101
  %v118 = vsub.f32 %v35, %v102
  %v119 = vsub.f32 %v36, %v103
  %v120 = vsub.f32 %v37, %v104
  %v121 = vsub.f32 %v38, %v105
  %v122 = vsub.f32 %v39, %v106
  %v123 = vsub.f32 %v40, %v107
  %v124 = vsub.f32 %v41, %v108
  %v125 = vsel %vm44, %v109, 0.0
  %v126 = vsel %vm44, %v110, 0.0
  %v127 = vsel %vm44, %v111, 0.0
  %v128 = vsel %vm44, %v112, 0.0
  %v129 = vsel %vm44, %v113, 0.0
  %v130 = vsel %vm44, %v114, 0.0
  %v131 = vsel %vm44, %v115, 0.0
  %v132 = vsel %vm44, %v116, 0.0
  %v133 = vsel %vm44, %v117, 0.0
  %v134 = vsel %vm44, %v118, 0.0
  %v135 = vsel %vm44, %v119, 0.0
  %v136 = vsel %vm44, %v120, 0.0
  %v137 = vsel %vm44, %v121, 0.0
  %v138 = vsel %vm44, %v122, 0.0
  %v139 = vsel %vm44, %v123, 0.0
  %v140 = vsel %vm44, %v124, 0.0
  %v141 = vmul.f32 %v125, %v125
  %v142 = vmul.f32 %v126, %v126
  %v143 = vmul.f32 %v127, %v127
  %v144 = vmul.f32 %v128, %v128
  %v145 = vmul.f32 %v129, %v129
  %v146 = vmul.f32 %v130, %v130
  %v147 = vmul.f32 %v131, %v131
  %v148 = vmul.f32 %v132, %v132
  %v149 = vmul.f32 %v133, %v133
  %v150 = vmul.f32 %v134, %v134
  %v151 = vmul.f32 %v135, %v135
  %v152 = vmul.f32 %v136, %v136
  %v153 = vmul.f32 %v137, %v137
  %v154 = vmul.f32 %v138, %v138
  %v155 = vmul.f32 %v139, %v139
  %v156 = vmul.f32 %v140, %v140
  %157 = vadd.xlane.f32.xlu0 %v141
  %v158 = vpop.xlane.xlu0 %157
  %159 = vadd.xlane.f32.xlu0 %v142
  %v160 = vpop.xlane.xlu0 %159
  %161 = vadd.xlane.f32.xlu0 %v143
  %v162 = vpop.xlane.xlu0 %161
  %163 = vadd.xlane.f32.xlu0 %v144
  %v164 = vpop.xlane.xlu0 %163
  %165 = vadd.xlane.f32.xlu0 %v145
  %v166 = vpop.xlane.xlu0 %165
  %167 = vadd.xlane.f32.xlu0 %v146
  %v168 = vpop.xlane.xlu0 %167
  %169 = vadd.xlane.f32.xlu0 %v147
  %v170 = vpop.xlane.xlu0 %169
  %171 = vadd.xlane.f32.xlu0 %v148
  %v172 = vpop.xlane.xlu0 %171
  %173 = vadd.xlane.f32.xlu0 %v149
  %v174 = vpop.xlane.xlu0 %173
  %175 = vadd.xlane.f32.xlu0 %v150
  %v176 = vpop.xlane.xlu0 %175
  %177 = vadd.xlane.f32.xlu0 %v151
  %v178 = vpop.xlane.xlu0 %177
  %179 = vadd.xlane.f32.xlu0 %v152
  %v180 = vpop.xlane.xlu0 %179
  %181 = vadd.xlane.f32.xlu0 %v153
  %v182 = vpop.xlane.xlu0 %181
  %183 = vadd.xlane.f32.xlu0 %v154
  %v184 = vpop.xlane.xlu0 %183
  %185 = vadd.xlane.f32.xlu0 %v155
  %v186 = vpop.xlane.xlu0 %185
  %187 = vadd.xlane.f32.xlu0 %v156
  %v188 = vpop.xlane.xlu0 %187
  %v189 = vmul.f32 %v158, 0.03125
  %v190 = vmul.f32 %v160, 0.03125
  %v191 = vmul.f32 %v162, 0.03125
  %v192 = vmul.f32 %v164, 0.03125
  %v193 = vmul.f32 %v166, 0.03125
  %v194 = vmul.f32 %v168, 0.03125
  %v195 = vmul.f32 %v170, 0.03125
  %v196 = vmul.f32 %v172, 0.03125
  %v197 = vmul.f32 %v174, 0.03125
  %v198 = vmul.f32 %v176, 0.03125
  %v199 = vmul.f32 %v178, 0.03125
  %v200 = vmul.f32 %v180, 0.03125
  %v201 = vmul.f32 %v182, 0.03125
  %v202 = vmul.f32 %v184, 0.03125
  %v203 = vmul.f32 %v186, 0.03125
  %v204 = vmul.f32 %v188, 0.03125
  %v205 = vadd.f32 %v189, 1e-05
  %v206 = vadd.f32 %v190, 1e-05
  %v207 = vadd.f32 %v191, 1e-05
  %v208 = vadd.f32 %v192, 1e-05
  %v209 = vadd.f32 %v193, 1e-05
  %v210 = vadd.f32 %v194, 1e-05
  %v211 = vadd.f32 %v195, 1e-05
  %v212 = vadd.f32 %v196, 1e-05
  %v213 = vadd.f32 %v197, 1e-05
  %v214 = vadd.f32 %v198, 1e-05
  %v215 = vadd.f32 %v199, 1e-05
  %v216 = vadd.f32 %v200, 1e-05
  %v217 = vadd.f32 %v201, 1e-05
  %v218 = vadd.f32 %v202, 1e-05
  %v219 = vadd.f32 %v203, 1e-05
  %v220 = vadd.f32 %v204, 1e-05
  %v221 = vrsqrt.pop %v205
  %v222 = vrsqrt.pop %v206
  %v223 = vrsqrt.pop %v207
  %v224 = vrsqrt.pop %v208
  %v225 = vrsqrt.pop %v209
  %v226 = vrsqrt.pop %v210
  %v227 = vrsqrt.pop %v211
  %v228 = vrsqrt.pop %v212
  %v229 = vrsqrt.pop %v213
  %v230 = vrsqrt.pop %v214
  %v231 = vrsqrt.pop %v215
  %v232 = vrsqrt.pop %v216
  %v233 = vrsqrt.pop %v217
  %v234 = vrsqrt.pop %v218
  %v235 = vrsqrt.pop %v219
  %v236 = vrsqrt.pop %v220
  %v237 = vmul.f32 %v109, %v221
  %v238 = vmul.f32 %v110, %v222
  %v239 = vmul.f32 %v111, %v223
  %v240 = vmul.f32 %v112, %v224
  %v241 = vmul.f32 %v113, %v225
  %v242 = vmul.f32 %v114, %v226
  %v243 = vmul.f32 %v115, %v227
  %v244 = vmul.f32 %v116, %v228
  %v245 = vmul.f32 %v117, %v229
  %v246 = vmul.f32 %v118, %v230
  %v247 = vmul.f32 %v119, %v231
  %v248 = vmul.f32 %v120, %v232
  %v249 = vmul.f32 %v121, %v233
  %v250 = vmul.f32 %v122, %v234
  %v251 = vmul.f32 %v123, %v235
  %v252 = vmul.f32 %v124, %v236
  %v253 = vld [vmem:[%s1] sm:$0x1]
  %v255 = vlaneseq
  %v256 = vshrl.u32 %v255, 7
  %v257 = vsub.s32 0, %v256
  %v258 = vrot.slane %v253, %v257
  %v260 = vmul.f32 %v237, %v258
  %v261 = vmul.f32 %v238, %v258
  %v262 = vmul.f32 %v239, %v258
  %v263 = vmul.f32 %v240, %v258
  %v264 = vmul.f32 %v241, %v258
  %v265 = vmul.f32 %v242, %v258
  %v266 = vmul.f32 %v243, %v258
  %v267 = vmul.f32 %v244, %v258
  %v268 = vmul.f32 %v245, %v258
  %v269 = vmul.f32 %v246, %v258
  %v270 = vmul.f32 %v247, %v258
  %v271 = vmul.f32 %v248, %v258
  %v272 = vmul.f32 %v249, %v258
  %v273 = vmul.f32 %v250, %v258
  %v274 = vmul.f32 %v251, %v258
  %v275 = vmul.f32 %v252, %v258
  %v276 = vld [vmem:[%s2] sm:$0x1]
  %v278 = vlaneseq
  %v279 = vshrl.u32 %v278, 7
  %v280 = vsub.s32 0, %v279
  %v281 = vrot.slane %v276, %v280
  %v283 = vadd.f32 %v260, %v281
  %v284 = vadd.f32 %v261, %v281
  %v285 = vadd.f32 %v262, %v281
  %v286 = vadd.f32 %v263, %v281
  %v287 = vadd.f32 %v264, %v281
  %v288 = vadd.f32 %v265, %v281
  %v289 = vadd.f32 %v266, %v281
  %v290 = vadd.f32 %v267, %v281
  %v291 = vadd.f32 %v268, %v281
  %v292 = vadd.f32 %v269, %v281
  %v293 = vadd.f32 %v270, %v281
  %v294 = vadd.f32 %v271, %v281
  %v295 = vadd.f32 %v272, %v281
  %v296 = vadd.f32 %v273, %v281
  %v297 = vadd.f32 %v274, %v281
  %v298 = vadd.f32 %v275, %v281
  %v299 = vld [vmem:[%s3] sm:$0xff]
  %v300 = vld [vmem:[%s3 + $0x8] sm:$0xff]
  %v301 = vld [vmem:[%s3 + $0x10] sm:$0xff]
  %v302 = vld [vmem:[%s3 + $0x18] sm:$0xff]
  %v303 = vld [vmem:[%s3 + $0x20] sm:$0xff]
  %v304 = vld [vmem:[%s3 + $0x28] sm:$0xff]
  %v305 = vld [vmem:[%s3 + $0x30] sm:$0xff]
  %v306 = vld [vmem:[%s3 + $0x38] sm:$0xff]
  %v307 = vld [vmem:[%s3 + $0x40] sm:$0xff]
  %v308 = vld [vmem:[%s3 + $0x48] sm:$0xff]
  %v309 = vld [vmem:[%s3 + $0x50] sm:$0xff]
  %v310 = vld [vmem:[%s3 + $0x58] sm:$0xff]
  %v311 = vld [vmem:[%s3 + $0x60] sm:$0xff]
  %v312 = vld [vmem:[%s3 + $0x68] sm:$0xff]
  %v313 = vld [vmem:[%s3 + $0x70] sm:$0xff]
  %v314 = vld [vmem:[%s3 + $0x78] sm:$0xff]
  %v315 = vld [vmem:[%s4] sm:$0x1]
  %v317 = vlaneseq
  %v318 = vshrl.u32 %v317, 7
  %v319 = vsub.s32 0, %v318
  %v320 = vrot.slane %v315, %v319
  %322 = vmatprep.subr.mxu0 0.0
  %323 = vmatpush1.msra.mxu0 %v299
  %324 = vmatprep.subr.mxu0 0.0
  %325 = vmatpush1.msra.mxu0 %v300
  %326 = vmatprep.subr.mxu0 0.0
  %327 = vmatpush1.msra.mxu0 %v301
  %328 = vmatprep.subr.mxu0 0.0
  %329 = vmatpush1.msra.mxu0 %v302
  %330 = vmatprep.subr.mxu0 0.0
  %331 = vmatpush1.msra.mxu0 %v303
  %332 = vmatprep.subr.mxu0 0.0
  %333 = vmatpush1.msra.mxu0 %v304
  %334 = vmatprep.subr.mxu0 0.0
  %335 = vmatpush1.msra.mxu0 %v305
  %336 = vmatprep.subr.mxu0 0.0
  %337 = vmatpush1.msra.mxu0 %v306
  %338 = vmatprep.subr.mxu0 0.0
  %339 = vmatpush1.msra.mxu0 %v307
  %340 = vmatprep.subr.mxu0 0.0
  %341 = vmatpush1.msra.mxu0 %v308
  %342 = vmatprep.subr.mxu0 0.0
  %343 = vmatpush1.msra.mxu0 %v309
  %344 = vmatprep.subr.mxu0 0.0
  %345 = vmatpush1.msra.mxu0 %v310
  %346 = vmatprep.subr.mxu0 0.0
  %347 = vmatpush1.msra.mxu0 %v311
  %348 = vmatprep.subr.mxu0 0.0
  %349 = vmatpush1.msra.mxu0 %v312
  %350 = vmatprep.subr.mxu0 0.0
  %351 = vmatpush1.msra.mxu0 %v313
  %352 = vmatprep.subr.mxu0 0.0
  %353 = vmatpush1.msra.mxu0 %v314
  %354 = vmatprep.subr.mxu0 0.0
  %355 = vmatpush1.msra.mxu0 0.0
  %356 = vmatprep.subr.mxu0 0.0
  %357 = vmatpush1.msra.mxu0 0.0
  %358 = vmatprep.subr.mxu0 0.0
  %359 = vmatpush1.msra.mxu0 0.0
  %360 = vmatprep.subr.mxu0 0.0
  %361 = vmatpush1.msra.mxu0 0.0
  %362 = vmatprep.subr.mxu0 0.0
  %363 = vmatpush1.msra.mxu0 0.0
  %364 = vmatprep.subr.mxu0 0.0
  %365 = vmatpush1.msra.mxu0 0.0
  %366 = vmatprep.subr.mxu0 0.0
  %367 = vmatpush1.msra.mxu0 0.0
  %368 = vmatprep.subr.mxu0 0.0
  %369 = vmatpush1.msra.mxu0 0.0
  %370 = vmatprep.subr.mxu0 0.0
  %371 = vmatpush1.msra.mxu0 0.0
  %372 = vmatprep.subr.mxu0 0.0
  %373 = vmatpush1.msra.mxu0 0.0
  %374 = vmatprep.subr.mxu0 0.0
  %375 = vmatpush1.msra.mxu0 0.0
  %376 = vmatprep.subr.mxu0 0.0
  %377 = vmatpush1.msra.mxu0 0.0
  %378 = vmatprep.subr.mxu0 0.0
  %379 = vmatpush1.msra.mxu0 0.0
  %380 = vmatprep.subr.mxu0 0.0
  %381 = vmatpush1.msra.mxu0 0.0
  %382 = vmatprep.subr.mxu0 0.0
  %383 = vmatpush1.msra.mxu0 0.0
  %384 = vmatprep.subr.mxu0 0.0
  %385 = vmatpush1.msra.mxu0 0.0
  %386 = vmatprep.mubr.f32.mxu0 0.0
  %387 = vmatmul.mubr.f32.gmra.mrb[0].mxu0 %v283
  %v388 = vpop.f32.mrb[0].mxu0
  %v389 = vadd.f32 %v320, %v388
  %v390 = vpop.f32.mrb[0].mxu0
  %391 = vmatprep.mubr.f32.mxu0 0.0
  %392 = vmatmul.mubr.f32.gmra.mrb[0].mxu0 %v284
  %v393 = vpop.f32.mrb[0].mxu0
  %v394 = vadd.f32 %v320, %v393
  %v395 = vpop.f32.mrb[0].mxu0
  %396 = vmatprep.mubr.f32.mxu0 0.0
  %397 = vmatmul.mubr.f32.gmra.mrb[0].mxu0 %v285
  %v398 = vpop.f32.mrb[0].mxu0
  %v399 = vadd.f32 %v320, %v398
  %v400 = vpop.f32.mrb[0].mxu0
  %401 = vmatprep.mubr.f32.mxu0 0.0
  %402 = vmatmul.mubr.f32.gmra.mrb[0].mxu0 %v286
  %v403 = vpop.f32.mrb[0].mxu0
  %v404 = vadd.f32 %v320, %v403
  %v405 = vpop.f32.mrb[0].mxu0
  %406 = vmatprep.mubr.f32.mxu0 0.0
  %407 = vmatmul.mubr.f32.gmra.mrb[0].mxu0 %v287
  %v408 = vpop.f32.mrb[0].mxu0
  %v409 = vadd.f32 %v320, %v408
  %v410 = vpop.f32.mrb[0].mxu0
  %411 = vmatprep.mubr.f32.mxu0 0.0
  %412 = vmatmul.mubr.f32.gmra.mrb[0].mxu0 %v288
  %v413 = vpop.f32.mrb[0].mxu0
  %v414 = vadd.f32 %v320, %v413
  %v415 = vpop.f32.mrb[0].mxu0
  %416 = vmatprep.mubr.f32.mxu0 0.0
  %417 = vmatmul.mubr.f32.gmra.mrb[0].mxu0 %v289
  %v418 = vpop.f32.mrb[0].mxu0
  %v419 = vadd.f32 %v320, %v418
  %v420 = vpop.f32.mrb[0].mxu0
  %421 = vmatprep.mubr.f32.mxu0 0.0
  %422 = vmatmul.mubr.f32.gmra.mrb[0].mxu0 %v290
  %v423 = vpop.f32.mrb[0].mxu0
  %v424 = vadd.f32 %v320, %v423
  %v425 = vpop.f32.mrb[0].mxu0
  %426 = vmatprep.mubr.f32.mxu0 0.0
  %427 = vmatmul.mubr.f32.gmra.mrb[0].mxu0 %v291
  %v428 = vpop.f32.mrb[0].mxu0
  %v429 = vadd.f32 %v320, %v428
  %v430 = vpop.f32.mrb[0].mxu0
  %431 = vmatprep.mubr.f32.mxu0 0.0
  %432 = vmatmul.mubr.f32.gmra.mrb[0].mxu0 %v292
  %v433 = vpop.f32.mrb[0].mxu0
  %v434 = vadd.f32 %v320, %v433
  %v435 = vpop.f32.mrb[0].mxu0
  %436 = vmatprep.mubr.f32.mxu0 0.0
  %437 = vmatmul.mubr.f32.gmra.mrb[0].mxu0 %v293
  %v438 = vpop.f32.mrb[0].mxu0
  %v439 = vadd.f32 %v320, %v438
  %v440 = vpop.f32.mrb[0].mxu0
  %441 = vmatprep.mubr.f32.mxu0 0.0
  %442 = vmatmul.mubr.f32.gmra.mrb[0].mxu0 %v294
  %v443 = vpop.f32.mrb[0].mxu0
  %v444 = vadd.f32 %v320, %v443
  %v445 = vpop.f32.mrb[0].mxu0
  %446 = vmatprep.mubr.f32.mxu0 0.0
  %447 = vmatmul.mubr.f32.gmra.mrb[0].mxu0 %v295
  %v448 = vpop.f32.mrb[0].mxu0
  %v449 = vadd.f32 %v320, %v448
  %v450 = vpop.f32.mrb[0].mxu0
  %451 = vmatprep.mubr.f32.mxu0 0.0
  %452 = vmatmul.mubr.f32.gmra.mrb[0].mxu0 %v296
  %v453 = vpop.f32.mrb[0].mxu0
  %v454 = vadd.f32 %v320, %v453
  %v455 = vpop.f32.mrb[0].mxu0
  %456 = vmatprep.mubr.f32.mxu0 0.0
  %457 = vmatmul.mubr.f32.gmra.mrb[0].mxu0 %v297
  %v458 = vpop.f32.mrb[0].mxu0
  %v459 = vadd.f32 %v320, %v458
  %v460 = vpop.f32.mrb[0].mxu0
  %461 = vmatprep.mubr.f32.mxu0 0.0
  %462 = vmatmul.mubr.f32.gmra.mrb[0].mxu0 %v298
  %v463 = vpop.f32.mrb[0].mxu0
  %v464 = vadd.f32 %v320, %v463
  %v465 = vpop.f32.mrb[0].mxu0
  %466 = vdwg.mxu0
  %v467 = vsub.f32 0.0, %v389
  %v468 = vsub.f32 0.0, %v394
  %v469 = vsub.f32 0.0, %v399
  %v470 = vsub.f32 0.0, %v404
  %v471 = vsub.f32 0.0, %v409
  %v472 = vsub.f32 0.0, %v414
  %v473 = vsub.f32 0.0, %v419
  %v474 = vsub.f32 0.0, %v424
  %v475 = vsub.f32 0.0, %v429
  %v476 = vsub.f32 0.0, %v434
  %v477 = vsub.f32 0.0, %v439
  %v478 = vsub.f32 0.0, %v444
  %v479 = vsub.f32 0.0, %v449
  %v480 = vsub.f32 0.0, %v454
  %v481 = vsub.f32 0.0, %v459
  %v482 = vsub.f32 0.0, %v464
  %v483 = vmul.f32 %v467, 1.442695
  %v484 = vpow.pop %v483
  %v485 = vmul.f32 %v468, 1.442695
  %v486 = vpow.pop %v485
  %v487 = vmul.f32 %v469, 1.442695
  %v488 = vpow.pop %v487
  %v489 = vmul.f32 %v470, 1.442695
  %v490 = vpow.pop %v489
  %v491 = vmul.f32 %v471, 1.442695
  %v492 = vpow.pop %v491
  %v493 = vmul.f32 %v472, 1.442695
  %v494 = vpow.pop %v493
  %v495 = vmul.f32 %v473, 1.442695
  %v496 = vpow.pop %v495
  %v497 = vmul.f32 %v474, 1.442695
  %v498 = vpow.pop %v497
  %v499 = vmul.f32 %v475, 1.442695
  %v500 = vpow.pop %v499
  %v501 = vmul.f32 %v476, 1.442695
  %v502 = vpow.pop %v501
  %v503 = vmul.f32 %v477, 1.442695
  %v504 = vpow.pop %v503
  %v505 = vmul.f32 %v478, 1.442695
  %v506 = vpow.pop %v505
  %v507 = vmul.f32 %v479, 1.442695
  %v508 = vpow.pop %v507
  %v509 = vmul.f32 %v480, 1.442695
  %v510 = vpow.pop %v509
  %v511 = vmul.f32 %v481, 1.442695
  %v512 = vpow.pop %v511
  %v513 = vmul.f32 %v482, 1.442695
  %v514 = vpow.pop %v513
  %v515 = vadd.f32 %v484, 1.0
  %v516 = vadd.f32 %v486, 1.0
  %v517 = vadd.f32 %v488, 1.0
  %v518 = vadd.f32 %v490, 1.0
  %v519 = vadd.f32 %v492, 1.0
  %v520 = vadd.f32 %v494, 1.0
  %v521 = vadd.f32 %v496, 1.0
  %v522 = vadd.f32 %v498, 1.0
  %v523 = vadd.f32 %v500, 1.0
  %v524 = vadd.f32 %v502, 1.0
  %v525 = vadd.f32 %v504, 1.0
  %v526 = vadd.f32 %v506, 1.0
  %v527 = vadd.f32 %v508, 1.0
  %v528 = vadd.f32 %v510, 1.0
  %v529 = vadd.f32 %v512, 1.0
  %v530 = vadd.f32 %v514, 1.0
  %v531 = vrcp.pop %v515
  %v532 = vmul.f32 1.0, %v531
  %v533 = vrcp.pop %v516
  %v534 = vmul.f32 1.0, %v533
  %v535 = vrcp.pop %v517
  %v536 = vmul.f32 1.0, %v535
  %v537 = vrcp.pop %v518
  %v538 = vmul.f32 1.0, %v537
  %v539 = vrcp.pop %v519
  %v540 = vmul.f32 1.0, %v539
  %v541 = vrcp.pop %v520
  %v542 = vmul.f32 1.0, %v541
  %v543 = vrcp.pop %v521
  %v544 = vmul.f32 1.0, %v543
  %v545 = vrcp.pop %v522
  %v546 = vmul.f32 1.0, %v545
  %v547 = vrcp.pop %v523
  %v548 = vmul.f32 1.0, %v547
  %v549 = vrcp.pop %v524
  %v550 = vmul.f32 1.0, %v549
  %v551 = vrcp.pop %v525
  %v552 = vmul.f32 1.0, %v551
  %v553 = vrcp.pop %v526
  %v554 = vmul.f32 1.0, %v553
  %v555 = vrcp.pop %v527
  %v556 = vmul.f32 1.0, %v555
  %v557 = vrcp.pop %v528
  %v558 = vmul.f32 1.0, %v557
  %v559 = vrcp.pop %v529
  %v560 = vmul.f32 1.0, %v559
  %v561 = vrcp.pop %v530
  %v562 = vmul.f32 1.0, %v561
  %v563 = vmul.f32 %v389, %v532
  %v564 = vmul.f32 %v394, %v534
  %v565 = vmul.f32 %v399, %v536
  %v566 = vmul.f32 %v404, %v538
  %v567 = vmul.f32 %v409, %v540
  %v568 = vmul.f32 %v414, %v542
  %v569 = vmul.f32 %v419, %v544
  %v570 = vmul.f32 %v424, %v546
  %v571 = vmul.f32 %v429, %v548
  %v572 = vmul.f32 %v434, %v550
  %v573 = vmul.f32 %v439, %v552
  %v574 = vmul.f32 %v444, %v554
  %v575 = vmul.f32 %v449, %v556
  %v576 = vmul.f32 %v454, %v558
  %v577 = vmul.f32 %v459, %v560
  %v578 = vmul.f32 %v464, %v562
  %v579 = vld [vmem:[%s5] sm:$0xff]
  %v580 = vld [vmem:[%s5 + $0x8] sm:$0xff]
  %v581 = vld [vmem:[%s5 + $0x10] sm:$0xff]
  %v582 = vld [vmem:[%s5 + $0x18] sm:$0xff]
  %v583 = vld [vmem:[%s5 + $0x20] sm:$0xff]
  %v584 = vld [vmem:[%s5 + $0x28] sm:$0xff]
  %v585 = vld [vmem:[%s5 + $0x30] sm:$0xff]
  %v586 = vld [vmem:[%s5 + $0x38] sm:$0xff]
  %v587 = vld [vmem:[%s6] sm:$0x1]
  %v589 = vlaneseq
  %v590 = vshrl.u32 %v589, 7
  %v591 = vsub.s32 0, %v590
  %v592 = vrot.slane %v587, %v591
  %vm594 = vcmask 523264
  %v596 = vsel %vm594, %v563, 0
  %v599 = vsel %vm594, %v564, 0
  %v602 = vsel %vm594, %v565, 0
  %v605 = vsel %vm594, %v566, 0
  %v608 = vsel %vm594, %v567, 0
  %v611 = vsel %vm594, %v568, 0
  %v614 = vsel %vm594, %v569, 0
  %v617 = vsel %vm594, %v570, 0
  %v620 = vsel %vm594, %v571, 0
  %v623 = vsel %vm594, %v572, 0
  %v626 = vsel %vm594, %v573, 0
  %v629 = vsel %vm594, %v574, 0
  %v632 = vsel %vm594, %v575, 0
  %v635 = vsel %vm594, %v576, 0
  %v638 = vsel %vm594, %v577, 0
  %v641 = vsel %vm594, %v578, 0
  %643 = vmatprep.subr.mxu0 0.0
  %644 = vmatpush1.msra.mxu0 %v579
  %645 = vmatprep.subr.mxu0 0.0
  %646 = vmatpush1.msra.mxu0 %v580
  %647 = vmatprep.subr.mxu0 0.0
  %648 = vmatpush1.msra.mxu0 %v581
  %649 = vmatprep.subr.mxu0 0.0
  %650 = vmatpush1.msra.mxu0 %v582
  %651 = vmatprep.subr.mxu0 0.0
  %652 = vmatpush1.msra.mxu0 %v583
  %653 = vmatprep.subr.mxu0 0.0
  %654 = vmatpush1.msra.mxu0 %v584
  %655 = vmatprep.subr.mxu0 0.0
  %656 = vmatpush1.msra.mxu0 %v585
  %657 = vmatprep.subr.mxu0 0.0
  %658 = vmatpush1.msra.mxu0 %v586
  %659 = vmatprep.subr.mxu0 0.0
  %660 = vmatpush1.msra.mxu0 0.0
  %661 = vmatprep.subr.mxu0 0.0
  %662 = vmatpush1.msra.mxu0 0.0
  %663 = vmatprep.subr.mxu0 0.0
  %664 = vmatpush1.msra.mxu0 0.0
  %665 = vmatprep.subr.mxu0 0.0
  %666 = vmatpush1.msra.mxu0 0.0
  %667 = vmatprep.subr.mxu0 0.0
  %668 = vmatpush1.msra.mxu0 0.0
  %669 = vmatprep.subr.mxu0 0.0
  %670 = vmatpush1.msra.mxu0 0.0
  %671 = vmatprep.subr.mxu0 0.0
  %672 = vmatpush1.msra.mxu0 0.0
  %673 = vmatprep.subr.mxu0 0.0
  %674 = vmatpush1.msra.mxu0 0.0
  %675 = vmatprep.subr.mxu0 0.0
  %676 = vmatpush1.msra.mxu0 0.0
  %677 = vmatprep.subr.mxu0 0.0
  %678 = vmatpush1.msra.mxu0 0.0
  %679 = vmatprep.subr.mxu0 0.0
  %680 = vmatpush1.msra.mxu0 0.0
  %681 = vmatprep.subr.mxu0 0.0
  %682 = vmatpush1.msra.mxu0 0.0
  %683 = vmatprep.subr.mxu0 0.0
  %684 = vmatpush1.msra.mxu0 0.0
  %685 = vmatprep.subr.mxu0 0.0
  %686 = vmatpush1.msra.mxu0 0.0
  %687 = vmatprep.subr.mxu0 0.0
  %688 = vmatpush1.msra.mxu0 0.0
  %689 = vmatprep.subr.mxu0 0.0
  %690 = vmatpush1.msra.mxu0 0.0
  %691 = vmatprep.subr.mxu0 0.0
  %692 = vmatpush1.msra.mxu0 0.0
  %693 = vmatprep.subr.mxu0 0.0
  %694 = vmatpush1.msra.mxu0 0.0
  %695 = vmatprep.subr.mxu0 0.0
  %696 = vmatpush1.msra.mxu0 0.0
  %697 = vmatprep.subr.mxu0 0.0
  %698 = vmatpush1.msra.mxu0 0.0
  %699 = vmatprep.subr.mxu0 0.0
  %700 = vmatpush1.msra.mxu0 0.0
  %701 = vmatprep.subr.mxu0 0.0
  %702 = vmatpush1.msra.mxu0 0.0
  %703 = vmatprep.subr.mxu0 0.0
  %704 = vmatpush1.msra.mxu0 0.0
  %705 = vmatprep.subr.mxu0 0.0
  %706 = vmatpush1.msra.mxu0 0.0
  %707 = vmatprep.mubr.f32.mxu0 0.0
  %708 = vmatmul.mubr.f32.gmra.mrb[0].mxu0 %v596
  %v709 = vpop.f32.mrb[0].mxu0
  %v710 = vadd.f32 %v592, %v709
  %v711 = vpop.f32.mrb[0].mxu0
  %712 = vmatprep.mubr.f32.mxu0 0.0
  %713 = vmatmul.mubr.f32.gmra.mrb[0].mxu0 %v599
  %v714 = vpop.f32.mrb[0].mxu0
  %v715 = vadd.f32 %v592, %v714
  %v716 = vpop.f32.mrb[0].mxu0
  %717 = vmatprep.mubr.f32.mxu0 0.0
  %718 = vmatmul.mubr.f32.gmra.mrb[0].mxu0 %v602
  %v719 = vpop.f32.mrb[0].mxu0
  %v720 = vadd.f32 %v592, %v719
  %v721 = vpop.f32.mrb[0].mxu0
  %722 = vmatprep.mubr.f32.mxu0 0.0
  %723 = vmatmul.mubr.f32.gmra.mrb[0].mxu0 %v605
  %v724 = vpop.f32.mrb[0].mxu0
  %v725 = vadd.f32 %v592, %v724
  %v726 = vpop.f32.mrb[0].mxu0
  %727 = vmatprep.mubr.f32.mxu0 0.0
  %728 = vmatmul.mubr.f32.gmra.mrb[0].mxu0 %v608
  %v729 = vpop.f32.mrb[0].mxu0
  %v730 = vadd.f32 %v592, %v729
  %v731 = vpop.f32.mrb[0].mxu0
  %732 = vmatprep.mubr.f32.mxu0 0.0
  %733 = vmatmul.mubr.f32.gmra.mrb[0].mxu0 %v611
  %v734 = vpop.f32.mrb[0].mxu0
  %v735 = vadd.f32 %v592, %v734
  %v736 = vpop.f32.mrb[0].mxu0
  %737 = vmatprep.mubr.f32.mxu0 0.0
  %738 = vmatmul.mubr.f32.gmra.mrb[0].mxu0 %v614
  %v739 = vpop.f32.mrb[0].mxu0
  %v740 = vadd.f32 %v592, %v739
  %v741 = vpop.f32.mrb[0].mxu0
  %742 = vmatprep.mubr.f32.mxu0 0.0
  %743 = vmatmul.mubr.f32.gmra.mrb[0].mxu0 %v617
  %v744 = vpop.f32.mrb[0].mxu0
  %v745 = vadd.f32 %v592, %v744
  %v746 = vpop.f32.mrb[0].mxu0
  %747 = vmatprep.mubr.f32.mxu0 0.0
  %748 = vmatmul.mubr.f32.gmra.mrb[0].mxu0 %v620
  %v749 = vpop.f32.mrb[0].mxu0
  %v750 = vadd.f32 %v592, %v749
  %v751 = vpop.f32.mrb[0].mxu0
  %752 = vmatprep.mubr.f32.mxu0 0.0
  %753 = vmatmul.mubr.f32.gmra.mrb[0].mxu0 %v623
  %v754 = vpop.f32.mrb[0].mxu0
  %v755 = vadd.f32 %v592, %v754
  %v756 = vpop.f32.mrb[0].mxu0
  %757 = vmatprep.mubr.f32.mxu0 0.0
  %758 = vmatmul.mubr.f32.gmra.mrb[0].mxu0 %v626
  %v759 = vpop.f32.mrb[0].mxu0
  %v760 = vadd.f32 %v592, %v759
  %v761 = vpop.f32.mrb[0].mxu0
  %762 = vmatprep.mubr.f32.mxu0 0.0
  %763 = vmatmul.mubr.f32.gmra.mrb[0].mxu0 %v629
  %v764 = vpop.f32.mrb[0].mxu0
  %v765 = vadd.f32 %v592, %v764
  %v766 = vpop.f32.mrb[0].mxu0
  %767 = vmatprep.mubr.f32.mxu0 0.0
  %768 = vmatmul.mubr.f32.gmra.mrb[0].mxu0 %v632
  %v769 = vpop.f32.mrb[0].mxu0
  %v770 = vadd.f32 %v592, %v769
  %v771 = vpop.f32.mrb[0].mxu0
  %772 = vmatprep.mubr.f32.mxu0 0.0
  %773 = vmatmul.mubr.f32.gmra.mrb[0].mxu0 %v635
  %v774 = vpop.f32.mrb[0].mxu0
  %v775 = vadd.f32 %v592, %v774
  %v776 = vpop.f32.mrb[0].mxu0
  %777 = vmatprep.mubr.f32.mxu0 0.0
  %778 = vmatmul.mubr.f32.gmra.mrb[0].mxu0 %v638
  %v779 = vpop.f32.mrb[0].mxu0
  %v780 = vadd.f32 %v592, %v779
  %v781 = vpop.f32.mrb[0].mxu0
  %782 = vmatprep.mubr.f32.mxu0 0.0
  %783 = vmatmul.mubr.f32.gmra.mrb[0].mxu0 %v641
  %v784 = vpop.f32.mrb[0].mxu0
  %v785 = vadd.f32 %v592, %v784
  %v786 = vpop.f32.mrb[0].mxu0
  %787 = vdwg.mxu0
  %v788 = vadd.f32 %v26, %v710
  %v789 = vadd.f32 %v27, %v715
  %v790 = vadd.f32 %v28, %v720
  %v791 = vadd.f32 %v29, %v725
  %v792 = vadd.f32 %v30, %v730
  %v793 = vadd.f32 %v31, %v735
  %v794 = vadd.f32 %v32, %v740
  %v795 = vadd.f32 %v33, %v745
  %v796 = vadd.f32 %v34, %v750
  %v797 = vadd.f32 %v35, %v755
  %v798 = vadd.f32 %v36, %v760
  %v799 = vadd.f32 %v37, %v765
  %v800 = vadd.f32 %v38, %v770
  %v801 = vadd.f32 %v39, %v775
  %v802 = vadd.f32 %v40, %v780
  %v803 = vadd.f32 %v41, %v785
  %804 = vst [vmem:[%s7] sm:$0xff] %v788
  %805 = vst [vmem:[%s7 + $0x8] sm:$0xff] %v789
  %806 = vst [vmem:[%s7 + $0x10] sm:$0xff] %v790
  %807 = vst [vmem:[%s7 + $0x18] sm:$0xff] %v791
  %808 = vst [vmem:[%s7 + $0x20] sm:$0xff] %v792
  %809 = vst [vmem:[%s7 + $0x28] sm:$0xff] %v793
  %810 = vst [vmem:[%s7 + $0x30] sm:$0xff] %v794
  %811 = vst [vmem:[%s7 + $0x38] sm:$0xff] %v795
  %812 = vst [vmem:[%s7 + $0x40] sm:$0xff] %v796
  %813 = vst [vmem:[%s7 + $0x48] sm:$0xff] %v797
  %814 = vst [vmem:[%s7 + $0x50] sm:$0xff] %v798
  %815 = vst [vmem:[%s7 + $0x58] sm:$0xff] %v799
  %816 = vst [vmem:[%s7 + $0x60] sm:$0xff] %v800
  %817 = vst [vmem:[%s7 + $0x68] sm:$0xff] %v801
  %818 = vst [vmem:[%s7 + $0x70] sm:$0xff] %v802
  %819 = vst [vmem:[%s7 + $0x78] sm:$0xff] %v803
  // Predicated region
  $region30: #{transformer.5} parent=0 // pred_check
    _
  $region31: #{transformer.5} parent=0 // pred_check_branch
    %821 = sbr.rel (0) target = $region33
  $region32: #{transformer.5} parent=0 // pred_region
    _
  $region33: #{transformer.5} parent=0 // pred_fallthru
    _
  // Predicated region
  $region34: #{transformer.5} parent=0 // pred_check
    _
  $region35: #{transformer.5} parent=0 // pred_check_branch
    %823 = sbr.rel (0) target = $region37
  $region36: #{transformer.5} parent=0 // pred_region
    _
  $region37: #{transformer.5} parent=0 // pred_fallthru
    _

</llo_original>
